<compile_context>
chip_gen: v7x
topology: tpu7x:2x2x1
jax: 0.10.0
libtpu: 0.0.40
codegen_flags: <defaults>
</compile_context>

<pallas_src>
import functools
import math

import numpy as np
import jax
import jax.numpy as jnp
from jax.experimental import pallas as pl
from jax.experimental.pallas import tpu as pltpu

# ----------------------------- model config ---------------------------------
VOCAB = 64
MAX_POS = 32
HIDDEN = 32
NUM_HEADS = 2
HEAD_DIM = HIDDEN // NUM_HEADS
INTERMEDIATE = 64
NUM_LAYERS = 2
LN_EPS = 1e-12

PAD_ID, CLS_ID, SEP_ID = 0, 1, 2
SEGMENT_SEP = " "
NUM_PLACEHOLDER = "n"


# ----------------------------- in-kernel helpers ----------------------------
def _layernorm(x, g, b, eps=LN_EPS):
    mu = jnp.mean(x, axis=-1, keepdims=True)
    var = jnp.mean((x - mu) ** 2, axis=-1, keepdims=True)
    return (x - mu) * jax.lax.rsqrt(var + eps) * g + b


def _gelu(x):
    # TODO(synk): HF BERT uses exact erf-GELU; tanh approximation used here.
    c = math.sqrt(2.0 / math.pi)
    return 0.5 * x * (1.0 + jnp.tanh(c * (x + 0.044715 * x * x * x)))


def _bf16(x):
    return x.astype(jnp.bfloat16)


# ----------------------------- fused Pallas kernel ---------------------------
def fused_bert_kernel(x_ref, mask_ref, pool_ref,
                      emb_g_ref, emb_b_ref,
                      wq_ref, bq_ref, wk_ref, bk_ref, wv_ref, bv_ref,
                      wo_ref, bo_ref, g1_ref, b1_ref,
                      wi_ref, bi_ref, wf_ref, bf_ref, g2_ref, b2_ref,
                      o_ref, *, batch, seq, num_heads, head_dim, num_layers):
    # x_ref   : (B*S, H) f32  summed word/pos/type embeddings (batch folded)
    # mask_ref: (B, S)   f32  additive attention mask (0 keep / -1e9 pad)
    # pool_ref: (B, L, S) f32 normalized word<-token assignment matrices
    # weights : stacked over layers; biases/LN params as (L, 1, H)/(L, 1, I)
    # o_ref   : (B, L, H) f32 pooled word embeddings
    x = _layernorm(x_ref[...], emb_g_ref[...], emb_b_ref[...])     # (B*S, H)
    mask = mask_ref[...]                                           # (B, S)

    for l in range(num_layers):                                    # static
        xb = _bf16(x)
        q = jnp.dot(xb, wq_ref[l], preferred_element_type=jnp.float32) + bq_ref[l]
        k = jnp.dot(xb, wk_ref[l], preferred_element_type=jnp.float32) + bk_ref[l]
        v = jnp.dot(xb, wv_ref[l], preferred_element_type=jnp.float32) + bv_ref[l]

        # attention: static unroll over batch and heads, plain 2-D dots only
        ctx_rows = []
        for b in range(batch):
            r0, r1 = b * seq, (b + 1) * seq
            mrow = mask[b:b + 1, :]                 # (1, S) key mask
            heads = []
            for h in range(num_heads):
                c0, c1 = h * head_dim, (h + 1) * head_dim
                qh = _bf16(q[r0:r1, c0:c1])         # (S, D)
                kh = _bf16(k[r0:r1, c0:c1])
                vh = _bf16(v[r0:r1, c0:c1])
                # 1/sqrt(head_dim) is folded into wq/bq host-side.
                sc = jax.lax.dot_general(
                    qh, kh, (((1,), (1,)), ((), ())),
                    preferred_element_type=jnp.float32)            # (S, S)
                sc = sc + mrow
                sc = sc - jnp.max(sc, axis=-1, keepdims=True)
                p = jnp.exp(sc)
                inv = pl.reciprocal(jnp.sum(p, axis=-1, keepdims=True),
                                    approx=True)
                attn = p * inv
                heads.append(jnp.dot(_bf16(attn), vh,
                                     preferred_element_type=jnp.float32))
            ctx_rows.append(jnp.concatenate(heads, axis=-1))        # (S, H)
        ctx = jnp.concatenate(ctx_rows, axis=0)                     # (B*S, H)

        attn_out = jnp.dot(_bf16(ctx), wo_ref[l],
                           preferred_element_type=jnp.float32) + bo_ref[l]
        h1 = _layernorm(x + attn_out, g1_ref[l], b1_ref[l])

        ff = _gelu(jnp.dot(_bf16(h1), wi_ref[l],
                           preferred_element_type=jnp.float32) + bi_ref[l])
        ff = jnp.dot(_bf16(ff), wf_ref[l],
                     preferred_element_type=jnp.float32) + bf_ref[l]
        x = _layernorm(h1 + ff, g2_ref[l], b2_ref[l])

    # word-mean pooling: out[b] = pool[b] @ x[b]   (f32, empty groups -> 0)
    for b in range(batch):
        xb = x[b * seq:(b + 1) * seq, :]
        o_ref[b] = jnp.dot(pool_ref[b], xb, preferred_element_type=jnp.float32)


# ----------------------------- pallas_call wrapper ---------------------------
def run_fused_bert(x_flat, add_mask, pool_mat, kp, *, batch, seq):
    B, L, _ = pool_mat.shape
    H = x_flat.shape[-1]
    kern = functools.partial(
        fused_bert_kernel, batch=batch, seq=seq,
        num_heads=NUM_HEADS, head_dim=HEAD_DIM, num_layers=NUM_LAYERS)
    operands = (x_flat, add_mask, pool_mat,
                kp["emb_ln_g"], kp["emb_ln_b"],
                kp["wq"], kp["bq"], kp["wk"], kp["bk"], kp["wv"], kp["bv"],
                kp["wo"], kp["bo"], kp["ln1_g"], kp["ln1_b"],
                kp["wi"], kp["bi"], kp["wf"], kp["bf"],
                kp["ln2_g"], kp["ln2_b"])
    vmem = lambda: pl.BlockSpec(memory_space=pltpu.MemorySpace.VMEM)
    return pl.pallas_call(
        kern,
        out_shape=jax.ShapeDtypeStruct((B, L, H), jnp.float32),
        in_specs=[vmem() for _ in operands],
        out_specs=vmem(),
    )(*operands)


# ----------------------------- deterministic params --------------------------
def init_params(key):
    keys = iter(jax.random.split(key, 32))

    def nrm(shape):
        return jax.random.normal(next(keys), shape, jnp.float32) * 0.02

    def ones(shape):
        return jnp.ones(shape, jnp.float32)

    def zeros(shape):
        return jnp.zeros(shape, jnp.float32)

    L = NUM_LAYERS
    return {
        "word_emb": nrm((VOCAB, HIDDEN)),
        "pos_emb": nrm((MAX_POS, HIDDEN)),
        "type_emb": nrm((2, HIDDEN)),
        "emb_ln_g": ones((1, HIDDEN)),
        "emb_ln_b": zeros((1, HIDDEN)),
        # per-layer weights stacked on a leading layer axis
        "wq": nrm((L, HIDDEN, HIDDEN)), "bq": zeros((L, 1, HIDDEN)),
        "wk": nrm((L, HIDDEN, HIDDEN)), "bk": zeros((L, 1, HIDDEN)),
        "wv": nrm((L, HIDDEN, HIDDEN)), "bv": zeros((L, 1, HIDDEN)),
        "wo": nrm((L, HIDDEN, HIDDEN)), "bo": zeros((L, 1, HIDDEN)),
        "ln1_g": ones((L, 1, HIDDEN)), "ln1_b": zeros((L, 1, HIDDEN)),
        "wi": nrm((L, HIDDEN, INTERMEDIATE)), "bi": zeros((L, 1, INTERMEDIATE)),
        "wf": nrm((L, INTERMEDIATE, HIDDEN)), "bf": zeros((L, 1, HIDDEN)),
        "ln2_g": ones((L, 1, HIDDEN)), "ln2_b": zeros((L, 1, HIDDEN)),
    }


def prepare_kernel_params(params):
    """Fold the attention scale into wq/bq and pre-cast matmul weights to bf16."""
    kp = dict(params)
    scale = 1.0 / math.sqrt(HEAD_DIM)
    kp["wq"] = params["wq"] * scale
    kp["bq"] = params["bq"] * scale
    for name in ("wq", "wk", "wv", "wo", "wi", "wf"):
        kp[name] = kp[name].astype(jnp.bfloat16)
    return kp


# ----------------------------- host-side tokenizer glue ----------------------
# TODO(synk): transformers.BertTokenizerFast has no Pallas/JAX equivalent
# (string processing); a deterministic toy subword tokenizer is used instead.
def _tok_id(s):
    h = 0
    for ch in s:
        h = (h * 131 + ord(ch)) % 1000003
    return 3 + (h % (VOCAB - 3))


def _toy_tokenize(text, max_piece=3):
    pieces, offsets, pos = [], [], 0
    for word in text.split(SEGMENT_SEP):
        i = 0
        while i < len(word):
            piece = word[i:i + max_piece]
            pieces.append(piece)
            offsets.append((pos + i, pos + i + len(piece)))
            i += len(piece)
        pos += len(word) + len(SEGMENT_SEP)
    return pieces, offsets


def _toy_batch_tokenize(texts):
    per = [_toy_tokenize(t) for t in texts]
    max_toks = max(len(p) for p, _ in per) + 2  # [CLS] ... [SEP]
    input_ids, attn, offset_mappings = [], [], []
    for pieces, offsets in per:
        ids = [CLS_ID] + [_tok_id(p) for p in pieces] + [SEP_ID]
        offs = [(0, 0)] + list(offsets) + [(0, 0)]
        mask = [1.0] * len(ids)
        while len(ids) < max_toks:
            ids.append(PAD_ID)
            offs.append((0, 0))
            mask.append(0.0)
        input_ids.append(ids)
        attn.append(mask)
        offset_mappings.append(offs)
    return (np.asarray(input_ids, np.int32),
            np.asarray(attn, np.float32),
            offset_mappings)


def align_word_tokens(word_list, offset_mapping):
    # Port of BERTEmbed.align_word_tokens (pure Python glue).
    word_end_list = []
    acc_word_start = 0
    for word in word_list:
        word_end_list.append(acc_word_start + len(word))
        acc_word_start += len(word) + len(SEGMENT_SEP)
    word_token_map, temp_word_token = [], []
    word_idx = 0
    word_end = word_end_list[word_idx]
    for token_idx, (token_start, token_end) in enumerate(offset_mapping):
        if token_end > 0:
            while word_idx < len(word_end_list) and token_start >= word_end:
                word_token_map.append(temp_word_token)
                temp_word_token = []
                word_idx += 1
                if word_idx < len(word_end_list):
                    word_end = word_end_list[word_idx]
            if word_idx < len(word_end_list):
                temp_word_token.append(token_idx)
            else:
                break
    if len(temp_word_token) > 0:
        word_token_map.append(temp_word_token)
    if len(word_token_map) > len(word_end_list):
        word_token_map = word_token_map[:len(word_end_list)]
    elif len(word_token_map) < len(word_end_list):
        word_token_map += [[]] * (len(word_end_list) - len(word_token_map))
    return word_token_map


def _build_pool_matrix(word_token_maps, max_length, seq_len):
    B = len(word_token_maps)
    M = np.zeros((B, max_length, seq_len), np.float32)
    for b, wtm in enumerate(word_token_maps):
        for w, group in enumerate(wtm[:max_length]):
            if len(group) > 0:
                for t in group:
                    M[b, w, t] = 1.0 / len(group)
    # Empty word groups / rows past len(words) stay all-zero -> pad_embed (zeros).
    return M


# ----------------------------- full forward ---------------------------------
def bert_embed_forward(batch_seq_id, batch_words, params):
    max_length = int(batch_seq_id.shape[-1])
    batch_words = [[NUM_PLACEHOLDER if w == "NUM_token" else w for w in words]
                   for words in batch_words]
    texts = [SEGMENT_SEP.join(words).lower() for words in batch_words]

    input_ids, attn_mask, offset_mappings = _toy_batch_tokenize(texts)
    word_token_maps = [align_word_tokens(words, om)
                       for words, om in zip(batch_words, offset_mappings)]

    B, S = input_ids.shape
    # Pad token length to a multiple of 8 (sublane alignment); padded tokens
    # are masked from attention and excluded from pooling.
    S_pad = max(8, -(-S // 8) * 8)
    assert S_pad <= MAX_POS
    if S_pad > S:
        pad = S_pad - S
        input_ids = np.pad(input_ids, ((0, 0), (0, pad)))
        attn_mask = np.pad(attn_mask, ((0, 0), (0, pad)))
    S = S_pad

    ids = jnp.asarray(input_ids)
    # Embedding lookups (gather) stay in XLA; the rest runs in one Pallas call.
    # TODO(synk): only type_emb[0] is used (single-segment inputs, as in the
    # original call pattern).
    x = (params["word_emb"][ids]
         + params["pos_emb"][:S][None, :, :]
         + params["type_emb"][0][None, None, :])
    x_flat = x.reshape(B * S, HIDDEN)

    add_mask = (jnp.asarray(attn_mask) - 1.0) * 1e9       # (B, S)
    pool_mat = jnp.asarray(_build_pool_matrix(word_token_maps, max_length, S))

    kp = prepare_kernel_params(params)
    return run_fused_bert(x_flat, add_mask, pool_mat, kp, batch=B, seq=S)


# ----------------------------- main ------------------------------------------
if __name__ == "__main__":
    key = jax.random.PRNGKey(0)
    pkey, idkey = jax.random.split(key)
    params = init_params(pkey)

    batch_words = [
        ["hello", "world", "NUM_token", "test"],
        ["pallas", "tpu", "kernel"],
    ]
    max_length = 8
    batch_seq_id = jax.random.randint(
        idkey, (len(batch_words), max_length), 0, VOCAB, dtype=jnp.int32)

    out = bert_embed_forward(batch_seq_id, batch_words, params)
    out = jax.block_until_ready(out)
    assert out.shape == (len(batch_words), max_length, HIDDEN)
    assert out.dtype == jnp.float32
    assert bool(jnp.all(jnp.isfinite(out)))
    print("KERNEL_OK")
</pallas_src>

<mosaic_0001>
module attributes {stable_mosaic.version = 11 : i64} {
  func.func @fused_bert_kernel(%arg0: memref<32x32xf32, #tpu.memory_space<vmem>>, %arg1: memref<2x16xf32, #tpu.memory_space<vmem>>, %arg2: memref<2x8x16xf32, #tpu.memory_space<vmem>>, %arg3: memref<1x32xf32, #tpu.memory_space<vmem>>, %arg4: memref<1x32xf32, #tpu.memory_space<vmem>>, %arg5: memref<2x32x32xbf16, #tpu.memory_space<vmem>>, %arg6: memref<2x1x32xf32, #tpu.memory_space<vmem>>, %arg7: memref<2x32x32xbf16, #tpu.memory_space<vmem>>, %arg8: memref<2x1x32xf32, #tpu.memory_space<vmem>>, %arg9: memref<2x32x32xbf16, #tpu.memory_space<vmem>>, %arg10: memref<2x1x32xf32, #tpu.memory_space<vmem>>, %arg11: memref<2x32x32xbf16, #tpu.memory_space<vmem>>, %arg12: memref<2x1x32xf32, #tpu.memory_space<vmem>>, %arg13: memref<2x1x32xf32, #tpu.memory_space<vmem>>, %arg14: memref<2x1x32xf32, #tpu.memory_space<vmem>>, %arg15: memref<2x32x64xbf16, #tpu.memory_space<vmem>>, %arg16: memref<2x1x64xf32, #tpu.memory_space<vmem>>, %arg17: memref<2x64x32xbf16, #tpu.memory_space<vmem>>, %arg18: memref<2x1x32xf32, #tpu.memory_space<vmem>>, %arg19: memref<2x1x32xf32, #tpu.memory_space<vmem>>, %arg20: memref<2x1x32xf32, #tpu.memory_space<vmem>>, %arg21: memref<2x8x32xf32, #tpu.memory_space<vmem>>) attributes {dimension_semantics = [], scalar_prefetch = 0 : i64, scratch_operands = 0 : i64, tpu.core_type = #tpu.core_type<tc>} {
    %c0 = arith.constant 0 : index
    %c0_0 = arith.constant 0 : index
    %0 = vector.load %arg0[%c0, %c0_0] : memref<32x32xf32, #tpu.memory_space<vmem>>, vector<32x32xf32>
    %c0_1 = arith.constant 0 : index
    %c0_2 = arith.constant 0 : index
    %1 = vector.load %arg3[%c0_1, %c0_2] : memref<1x32xf32, #tpu.memory_space<vmem>>, vector<1x32xf32>
    %c0_3 = arith.constant 0 : index
    %c0_4 = arith.constant 0 : index
    %2 = vector.load %arg4[%c0_3, %c0_4] : memref<1x32xf32, #tpu.memory_space<vmem>>, vector<1x32xf32>
    %cst = arith.constant dense<0.000000e+00> : vector<32xf32>
    %3 = vector.multi_reduction <add>, %0, %cst [1] : vector<32x32xf32> to vector<32xf32>
    %4 = vector.shape_cast %3 : vector<32xf32> to vector<32x1xf32>
    %cst_5 = arith.constant 3.200000e+01 : f32
    %5 = vector.broadcast %cst_5 : f32 to vector<32x1xf32>
    %6 = arith.divf %4, %5 : vector<32x1xf32>
    %7 = vector.broadcast %6 : vector<32x1xf32> to vector<32x32xf32>
    %8 = arith.subf %0, %7 : vector<32x32xf32>
    %9 = arith.mulf %8, %8 : vector<32x32xf32>
    %cst_6 = arith.constant dense<0.000000e+00> : vector<32xf32>
    %10 = vector.multi_reduction <add>, %9, %cst_6 [1] : vector<32x32xf32> to vector<32xf32>
    %11 = vector.shape_cast %10 : vector<32xf32> to vector<32x1xf32>
    %cst_7 = arith.constant 3.200000e+01 : f32
    %12 = vector.broadcast %cst_7 : f32 to vector<32x1xf32>
    %13 = arith.divf %11, %12 : vector<32x1xf32>
    %14 = vector.broadcast %6 : vector<32x1xf32> to vector<32x32xf32>
    %15 = arith.subf %0, %14 : vector<32x32xf32>
    %cst_8 = arith.constant 9.99999996E-13 : f32
    %16 = vector.broadcast %cst_8 : f32 to vector<32x1xf32>
    %17 = arith.addf %13, %16 : vector<32x1xf32>
    %18 = math.rsqrt %17 : vector<32x1xf32>
    %19 = vector.broadcast %18 : vector<32x1xf32> to vector<32x32xf32>
    %20 = arith.mulf %15, %19 : vector<32x32xf32>
    %21 = vector.broadcast %1 : vector<1x32xf32> to vector<32x32xf32>
    %22 = arith.mulf %20, %21 : vector<32x32xf32>
    %23 = vector.broadcast %2 : vector<1x32xf32> to vector<32x32xf32>
    %24 = arith.addf %22, %23 : vector<32x32xf32>
    %c0_9 = arith.constant 0 : index
    %c0_10 = arith.constant 0 : index
    %25 = vector.load %arg1[%c0_9, %c0_10] : memref<2x16xf32, #tpu.memory_space<vmem>>, vector<2x16xf32>
    %26 = arith.truncf %24 : vector<32x32xf32> to vector<32x32xbf16>
    %c0_11 = arith.constant 0 : index
    %c0_12 = arith.constant 0 : index
    %c0_13 = arith.constant 0 : index
    %27 = vector.load %arg5[%c0_11, %c0_12, %c0_13] : memref<2x32x32xbf16, #tpu.memory_space<vmem>>, vector<1x32x32xbf16>
    %28 = vector.shape_cast %27 : vector<1x32x32xbf16> to vector<32x32xbf16>
    %cst_14 = arith.constant dense<0.000000e+00> : vector<32x32xf32>
    %29 = tpu.matmul %26, %28, %cst_14 {dimension_numbers = #tpu.dot_dimension_numbers<[1], [0], [0], [1], [0, 0, 1, 1], [], []>} : vector<32x32xbf16>, vector<32x32xbf16>, vector<32x32xf32> -> vector<32x32xf32>
    %c0_15 = arith.constant 0 : index
    %c0_16 = arith.constant 0 : index
    %c0_17 = arith.constant 0 : index
    %30 = vector.load %arg6[%c0_15, %c0_16, %c0_17] : memref<2x1x32xf32, #tpu.memory_space<vmem>>, vector<1x1x32xf32>
    %31 = vector.shape_cast %30 : vector<1x1x32xf32> to vector<1x32xf32>
    %32 = vector.broadcast %31 : vector<1x32xf32> to vector<32x32xf32>
    %33 = arith.addf %29, %32 : vector<32x32xf32>
    %c0_18 = arith.constant 0 : index
    %c0_19 = arith.constant 0 : index
    %c0_20 = arith.constant 0 : index
    %34 = vector.load %arg7[%c0_18, %c0_19, %c0_20] : memref<2x32x32xbf16, #tpu.memory_space<vmem>>, vector<1x32x32xbf16>
    %35 = vector.shape_cast %34 : vector<1x32x32xbf16> to vector<32x32xbf16>
    %cst_21 = arith.constant dense<0.000000e+00> : vector<32x32xf32>
    %36 = tpu.matmul %26, %35, %cst_21 {dimension_numbers = #tpu.dot_dimension_numbers<[1], [0], [0], [1], [0, 0, 1, 1], [], []>} : vector<32x32xbf16>, vector<32x32xbf16>, vector<32x32xf32> -> vector<32x32xf32>
    %c0_22 = arith.constant 0 : index
    %c0_23 = arith.constant 0 : index
    %c0_24 = arith.constant 0 : index
    %37 = vector.load %arg8[%c0_22, %c0_23, %c0_24] : memref<2x1x32xf32, #tpu.memory_space<vmem>>, vector<1x1x32xf32>
    %38 = vector.shape_cast %37 : vector<1x1x32xf32> to vector<1x32xf32>
    %39 = vector.broadcast %38 : vector<1x32xf32> to vector<32x32xf32>
    %40 = arith.addf %36, %39 : vector<32x32xf32>
    %c0_25 = arith.constant 0 : index
    %c0_26 = arith.constant 0 : index
    %c0_27 = arith.constant 0 : index
    %41 = vector.load %arg9[%c0_25, %c0_26, %c0_27] : memref<2x32x32xbf16, #tpu.memory_space<vmem>>, vector<1x32x32xbf16>
    %42 = vector.shape_cast %41 : vector<1x32x32xbf16> to vector<32x32xbf16>
    %cst_28 = arith.constant dense<0.000000e+00> : vector<32x32xf32>
    %43 = tpu.matmul %26, %42, %cst_28 {dimension_numbers = #tpu.dot_dimension_numbers<[1], [0], [0], [1], [0, 0, 1, 1], [], []>} : vector<32x32xbf16>, vector<32x32xbf16>, vector<32x32xf32> -> vector<32x32xf32>
    %c0_29 = arith.constant 0 : index
    %c0_30 = arith.constant 0 : index
    %c0_31 = arith.constant 0 : index
    %44 = vector.load %arg10[%c0_29, %c0_30, %c0_31] : memref<2x1x32xf32, #tpu.memory_space<vmem>>, vector<1x1x32xf32>
    %45 = vector.shape_cast %44 : vector<1x1x32xf32> to vector<1x32xf32>
    %46 = vector.broadcast %45 : vector<1x32xf32> to vector<32x32xf32>
    %47 = arith.addf %43, %46 : vector<32x32xf32>
    %48 = vector.extract_strided_slice %25 {offsets = [0, 0], sizes = [1, 16], strides = [1, 1]} : vector<2x16xf32> to vector<1x16xf32>
    %49 = vector.extract_strided_slice %33 {offsets = [0, 0], sizes = [16, 16], strides = [1, 1]} : vector<32x32xf32> to vector<16x16xf32>
    %50 = arith.truncf %49 : vector<16x16xf32> to vector<16x16xbf16>
    %51 = vector.extract_strided_slice %40 {offsets = [0, 0], sizes = [16, 16], strides = [1, 1]} : vector<32x32xf32> to vector<16x16xf32>
    %52 = arith.truncf %51 : vector<16x16xf32> to vector<16x16xbf16>
    %53 = vector.extract_strided_slice %47 {offsets = [0, 0], sizes = [16, 16], strides = [1, 1]} : vector<32x32xf32> to vector<16x16xf32>
    %54 = arith.truncf %53 : vector<16x16xf32> to vector<16x16xbf16>
    %cst_32 = arith.constant dense<0.000000e+00> : vector<16x16xf32>
    %55 = tpu.matmul %50, %52, %cst_32 {dimension_numbers = #tpu.dot_dimension_numbers<[1], [1], [0], [0], [0, 0, 1, 0], [], []>} : vector<16x16xbf16>, vector<16x16xbf16>, vector<16x16xf32> -> vector<16x16xf32>
    %56 = vector.broadcast %48 : vector<1x16xf32> to vector<16x16xf32>
    %57 = arith.addf %55, %56 : vector<16x16xf32>
    %cst_33 = arith.constant dense<0xFF800000> : vector<16xf32>
    %58 = vector.multi_reduction <maximumf>, %57, %cst_33 [1] : vector<16x16xf32> to vector<16xf32>
    %59 = vector.shape_cast %58 : vector<16xf32> to vector<16x1xf32>
    %60 = vector.broadcast %59 : vector<16x1xf32> to vector<16x16xf32>
    %61 = arith.subf %57, %60 : vector<16x16xf32>
    %62 = math.exp %61 : vector<16x16xf32>
    %cst_34 = arith.constant dense<0.000000e+00> : vector<16xf32>
    %63 = vector.multi_reduction <add>, %62, %cst_34 [1] : vector<16x16xf32> to vector<16xf32>
    %64 = vector.shape_cast %63 : vector<16xf32> to vector<16x1xf32>
    %65 = tpu.reciprocal %64 {approx = true} : vector<16x1xf32> -> vector<16x1xf32>
    %66 = vector.broadcast %65 : vector<16x1xf32> to vector<16x16xf32>
    %67 = arith.mulf %62, %66 : vector<16x16xf32>
    %68 = arith.truncf %67 : vector<16x16xf32> to vector<16x16xbf16>
    %cst_35 = arith.constant dense<0.000000e+00> : vector<16x16xf32>
    %69 = tpu.matmul %68, %54, %cst_35 {dimension_numbers = #tpu.dot_dimension_numbers<[1], [0], [0], [1], [0, 0, 1, 1], [], []>} : vector<16x16xbf16>, vector<16x16xbf16>, vector<16x16xf32> -> vector<16x16xf32>
    %70 = vector.extract_strided_slice %33 {offsets = [0, 16], sizes = [16, 16], strides = [1, 1]} : vector<32x32xf32> to vector<16x16xf32>
    %71 = arith.truncf %70 : vector<16x16xf32> to vector<16x16xbf16>
    %72 = vector.extract_strided_slice %40 {offsets = [0, 16], sizes = [16, 16], strides = [1, 1]} : vector<32x32xf32> to vector<16x16xf32>
    %73 = arith.truncf %72 : vector<16x16xf32> to vector<16x16xbf16>
    %74 = vector.extract_strided_slice %47 {offsets = [0, 16], sizes = [16, 16], strides = [1, 1]} : vector<32x32xf32> to vector<16x16xf32>
    %75 = arith.truncf %74 : vector<16x16xf32> to vector<16x16xbf16>
    %cst_36 = arith.constant dense<0.000000e+00> : vector<16x16xf32>
    %76 = tpu.matmul %71, %73, %cst_36 {dimension_numbers = #tpu.dot_dimension_numbers<[1], [1], [0], [0], [0, 0, 1, 0], [], []>} : vector<16x16xbf16>, vector<16x16xbf16>, vector<16x16xf32> -> vector<16x16xf32>
    %77 = vector.broadcast %48 : vector<1x16xf32> to vector<16x16xf32>
    %78 = arith.addf %76, %77 : vector<16x16xf32>
    %cst_37 = arith.constant dense<0xFF800000> : vector<16xf32>
    %79 = vector.multi_reduction <maximumf>, %78, %cst_37 [1] : vector<16x16xf32> to vector<16xf32>
    %80 = vector.shape_cast %79 : vector<16xf32> to vector<16x1xf32>
    %81 = vector.broadcast %80 : vector<16x1xf32> to vector<16x16xf32>
    %82 = arith.subf %78, %81 : vector<16x16xf32>
    %83 = math.exp %82 : vector<16x16xf32>
    %cst_38 = arith.constant dense<0.000000e+00> : vector<16xf32>
    %84 = vector.multi_reduction <add>, %83, %cst_38 [1] : vector<16x16xf32> to vector<16xf32>
    %85 = vector.shape_cast %84 : vector<16xf32> to vector<16x1xf32>
    %86 = tpu.reciprocal %85 {approx = true} : vector<16x1xf32> -> vector<16x1xf32>
    %87 = vector.broadcast %86 : vector<16x1xf32> to vector<16x16xf32>
    %88 = arith.mulf %83, %87 : vector<16x16xf32>
    %89 = arith.truncf %88 : vector<16x16xf32> to vector<16x16xbf16>
    %cst_39 = arith.constant dense<0.000000e+00> : vector<16x16xf32>
    %90 = tpu.matmul %89, %75, %cst_39 {dimension_numbers = #tpu.dot_dimension_numbers<[1], [0], [0], [1], [0, 0, 1, 1], [], []>} : vector<16x16xbf16>, vector<16x16xbf16>, vector<16x16xf32> -> vector<16x16xf32>
    %91 = tpu.concatenate %69, %90 in 1 : vector<16x16xf32>, vector<16x16xf32> -> vector<16x32xf32>
    %92 = vector.extract_strided_slice %25 {offsets = [1, 0], sizes = [1, 16], strides = [1, 1]} : vector<2x16xf32> to vector<1x16xf32>
    %93 = vector.extract_strided_slice %33 {offsets = [16, 0], sizes = [16, 16], strides = [1, 1]} : vector<32x32xf32> to vector<16x16xf32>
    %94 = arith.truncf %93 : vector<16x16xf32> to vector<16x16xbf16>
    %95 = vector.extract_strided_slice %40 {offsets = [16, 0], sizes = [16, 16], strides = [1, 1]} : vector<32x32xf32> to vector<16x16xf32>
    %96 = arith.truncf %95 : vector<16x16xf32> to vector<16x16xbf16>
    %97 = vector.extract_strided_slice %47 {offsets = [16, 0], sizes = [16, 16], strides = [1, 1]} : vector<32x32xf32> to vector<16x16xf32>
    %98 = arith.truncf %97 : vector<16x16xf32> to vector<16x16xbf16>
    %cst_40 = arith.constant dense<0.000000e+00> : vector<16x16xf32>
    %99 = tpu.matmul %94, %96, %cst_40 {dimension_numbers = #tpu.dot_dimension_numbers<[1], [1], [0], [0], [0, 0, 1, 0], [], []>} : vector<16x16xbf16>, vector<16x16xbf16>, vector<16x16xf32> -> vector<16x16xf32>
    %100 = vector.broadcast %92 : vector<1x16xf32> to vector<16x16xf32>
    %101 = arith.addf %99, %100 : vector<16x16xf32>
    %cst_41 = arith.constant dense<0xFF800000> : vector<16xf32>
    %102 = vector.multi_reduction <maximumf>, %101, %cst_41 [1] : vector<16x16xf32> to vector<16xf32>
    %103 = vector.shape_cast %102 : vector<16xf32> to vector<16x1xf32>
    %104 = vector.broadcast %103 : vector<16x1xf32> to vector<16x16xf32>
    %105 = arith.subf %101, %104 : vector<16x16xf32>
    %106 = math.exp %105 : vector<16x16xf32>
    %cst_42 = arith.constant dense<0.000000e+00> : vector<16xf32>
    %107 = vector.multi_reduction <add>, %106, %cst_42 [1] : vector<16x16xf32> to vector<16xf32>
    %108 = vector.shape_cast %107 : vector<16xf32> to vector<16x1xf32>
    %109 = tpu.reciprocal %108 {approx = true} : vector<16x1xf32> -> vector<16x1xf32>
    %110 = vector.broadcast %109 : vector<16x1xf32> to vector<16x16xf32>
    %111 = arith.mulf %106, %110 : vector<16x16xf32>
    %112 = arith.truncf %111 : vector<16x16xf32> to vector<16x16xbf16>
    %cst_43 = arith.constant dense<0.000000e+00> : vector<16x16xf32>
    %113 = tpu.matmul %112, %98, %cst_43 {dimension_numbers = #tpu.dot_dimension_numbers<[1], [0], [0], [1], [0, 0, 1, 1], [], []>} : vector<16x16xbf16>, vector<16x16xbf16>, vector<16x16xf32> -> vector<16x16xf32>
    %114 = vector.extract_strided_slice %33 {offsets = [16, 16], sizes = [16, 16], strides = [1, 1]} : vector<32x32xf32> to vector<16x16xf32>
    %115 = arith.truncf %114 : vector<16x16xf32> to vector<16x16xbf16>
    %116 = vector.extract_strided_slice %40 {offsets = [16, 16], sizes = [16, 16], strides = [1, 1]} : vector<32x32xf32> to vector<16x16xf32>
    %117 = arith.truncf %116 : vector<16x16xf32> to vector<16x16xbf16>
    %118 = vector.extract_strided_slice %47 {offsets = [16, 16], sizes = [16, 16], strides = [1, 1]} : vector<32x32xf32> to vector<16x16xf32>
    %119 = arith.truncf %118 : vector<16x16xf32> to vector<16x16xbf16>
    %cst_44 = arith.constant dense<0.000000e+00> : vector<16x16xf32>
    %120 = tpu.matmul %115, %117, %cst_44 {dimension_numbers = #tpu.dot_dimension_numbers<[1], [1], [0], [0], [0, 0, 1, 0], [], []>} : vector<16x16xbf16>, vector<16x16xbf16>, vector<16x16xf32> -> vector<16x16xf32>
    %121 = vector.broadcast %92 : vector<1x16xf32> to vector<16x16xf32>
    %122 = arith.addf %120, %121 : vector<16x16xf32>
    %cst_45 = arith.constant dense<0xFF800000> : vector<16xf32>
    %123 = vector.multi_reduction <maximumf>, %122, %cst_45 [1] : vector<16x16xf32> to vector<16xf32>
    %124 = vector.shape_cast %123 : vector<16xf32> to vector<16x1xf32>
    %125 = vector.broadcast %124 : vector<16x1xf32> to vector<16x16xf32>
    %126 = arith.subf %122, %125 : vector<16x16xf32>
    %127 = math.exp %126 : vector<16x16xf32>
    %cst_46 = arith.constant dense<0.000000e+00> : vector<16xf32>
    %128 = vector.multi_reduction <add>, %127, %cst_46 [1] : vector<16x16xf32> to vector<16xf32>
    %129 = vector.shape_cast %128 : vector<16xf32> to vector<16x1xf32>
    %130 = tpu.reciprocal %129 {approx = true} : vector<16x1xf32> -> vector<16x1xf32>
    %131 = vector.broadcast %130 : vector<16x1xf32> to vector<16x16xf32>
    %132 = arith.mulf %127, %131 : vector<16x16xf32>
    %133 = arith.truncf %132 : vector<16x16xf32> to vector<16x16xbf16>
    %cst_47 = arith.constant dense<0.000000e+00> : vector<16x16xf32>
    %134 = tpu.matmul %133, %119, %cst_47 {dimension_numbers = #tpu.dot_dimension_numbers<[1], [0], [0], [1], [0, 0, 1, 1], [], []>} : vector<16x16xbf16>, vector<16x16xbf16>, vector<16x16xf32> -> vector<16x16xf32>
    %135 = tpu.concatenate %113, %134 in 1 : vector<16x16xf32>, vector<16x16xf32> -> vector<16x32xf32>
    %136 = tpu.concatenate %91, %135 in 0 : vector<16x32xf32>, vector<16x32xf32> -> vector<32x32xf32>
    %137 = arith.truncf %136 : vector<32x32xf32> to vector<32x32xbf16>
    %c0_48 = arith.constant 0 : index
    %c0_49 = arith.constant 0 : index
    %c0_50 = arith.constant 0 : index
    %138 = vector.load %arg11[%c0_48, %c0_49, %c0_50] : memref<2x32x32xbf16, #tpu.memory_space<vmem>>, vector<1x32x32xbf16>
    %139 = vector.shape_cast %138 : vector<1x32x32xbf16> to vector<32x32xbf16>
    %cst_51 = arith.constant dense<0.000000e+00> : vector<32x32xf32>
    %140 = tpu.matmul %137, %139, %cst_51 {dimension_numbers = #tpu.dot_dimension_numbers<[1], [0], [0], [1], [0, 0, 1, 1], [], []>} : vector<32x32xbf16>, vector<32x32xbf16>, vector<32x32xf32> -> vector<32x32xf32>
    %c0_52 = arith.constant 0 : index
    %c0_53 = arith.constant 0 : index
    %c0_54 = arith.constant 0 : index
    %141 = vector.load %arg12[%c0_52, %c0_53, %c0_54] : memref<2x1x32xf32, #tpu.memory_space<vmem>>, vector<1x1x32xf32>
    %142 = vector.shape_cast %141 : vector<1x1x32xf32> to vector<1x32xf32>
    %143 = vector.broadcast %142 : vector<1x32xf32> to vector<32x32xf32>
    %144 = arith.addf %140, %143 : vector<32x32xf32>
    %145 = arith.addf %24, %144 : vector<32x32xf32>
    %c0_55 = arith.constant 0 : index
    %c0_56 = arith.constant 0 : index
    %c0_57 = arith.constant 0 : index
    %146 = vector.load %arg13[%c0_55, %c0_56, %c0_57] : memref<2x1x32xf32, #tpu.memory_space<vmem>>, vector<1x1x32xf32>
    %147 = vector.shape_cast %146 : vector<1x1x32xf32> to vector<1x32xf32>
    %c0_58 = arith.constant 0 : index
    %c0_59 = arith.constant 0 : index
    %c0_60 = arith.constant 0 : index
    %148 = vector.load %arg14[%c0_58, %c0_59, %c0_60] : memref<2x1x32xf32, #tpu.memory_space<vmem>>, vector<1x1x32xf32>
    %149 = vector.shape_cast %148 : vector<1x1x32xf32> to vector<1x32xf32>
    %cst_61 = arith.constant dense<0.000000e+00> : vector<32xf32>
    %150 = vector.multi_reduction <add>, %145, %cst_61 [1] : vector<32x32xf32> to vector<32xf32>
    %151 = vector.shape_cast %150 : vector<32xf32> to vector<32x1xf32>
    %cst_62 = arith.constant 3.200000e+01 : f32
    %152 = vector.broadcast %cst_62 : f32 to vector<32x1xf32>
    %153 = arith.divf %151, %152 : vector<32x1xf32>
    %154 = vector.broadcast %153 : vector<32x1xf32> to vector<32x32xf32>
    %155 = arith.subf %145, %154 : vector<32x32xf32>
    %156 = arith.mulf %155, %155 : vector<32x32xf32>
    %cst_63 = arith.constant dense<0.000000e+00> : vector<32xf32>
    %157 = vector.multi_reduction <add>, %156, %cst_63 [1] : vector<32x32xf32> to vector<32xf32>
    %158 = vector.shape_cast %157 : vector<32xf32> to vector<32x1xf32>
    %cst_64 = arith.constant 3.200000e+01 : f32
    %159 = vector.broadcast %cst_64 : f32 to vector<32x1xf32>
    %160 = arith.divf %158, %159 : vector<32x1xf32>
    %161 = vector.broadcast %153 : vector<32x1xf32> to vector<32x32xf32>
    %162 = arith.subf %145, %161 : vector<32x32xf32>
    %cst_65 = arith.constant 9.99999996E-13 : f32
    %163 = vector.broadcast %cst_65 : f32 to vector<32x1xf32>
    %164 = arith.addf %160, %163 : vector<32x1xf32>
    %165 = math.rsqrt %164 : vector<32x1xf32>
    %166 = vector.broadcast %165 : vector<32x1xf32> to vector<32x32xf32>
    %167 = arith.mulf %162, %166 : vector<32x32xf32>
    %168 = vector.broadcast %147 : vector<1x32xf32> to vector<32x32xf32>
    %169 = arith.mulf %167, %168 : vector<32x32xf32>
    %170 = vector.broadcast %149 : vector<1x32xf32> to vector<32x32xf32>
    %171 = arith.addf %169, %170 : vector<32x32xf32>
    %172 = arith.truncf %171 : vector<32x32xf32> to vector<32x32xbf16>
    %c0_66 = arith.constant 0 : index
    %c0_67 = arith.constant 0 : index
    %c0_68 = arith.constant 0 : index
    %173 = vector.load %arg15[%c0_66, %c0_67, %c0_68] : memref<2x32x64xbf16, #tpu.memory_space<vmem>>, vector<1x32x64xbf16>
    %174 = vector.shape_cast %173 : vector<1x32x64xbf16> to vector<32x64xbf16>
    %cst_69 = arith.constant dense<0.000000e+00> : vector<32x64xf32>
    %175 = tpu.matmul %172, %174, %cst_69 {dimension_numbers = #tpu.dot_dimension_numbers<[1], [0], [0], [1], [0, 0, 1, 1], [], []>} : vector<32x32xbf16>, vector<32x64xbf16>, vector<32x64xf32> -> vector<32x64xf32>
    %c0_70 = arith.constant 0 : index
    %c0_71 = arith.constant 0 : index
    %c0_72 = arith.constant 0 : index
    %176 = vector.load %arg16[%c0_70, %c0_71, %c0_72] : memref<2x1x64xf32, #tpu.memory_space<vmem>>, vector<1x1x64xf32>
    %177 = vector.shape_cast %176 : vector<1x1x64xf32> to vector<1x64xf32>
    %178 = vector.broadcast %177 : vector<1x64xf32> to vector<32x64xf32>
    %179 = arith.addf %175, %178 : vector<32x64xf32>
    %cst_73 = arith.constant 5.000000e-01 : f32
    %180 = vector.broadcast %cst_73 : f32 to vector<32x64xf32>
    %181 = arith.mulf %180, %179 : vector<32x64xf32>
    %cst_74 = arith.constant 4.471500e-02 : f32
    %182 = vector.broadcast %cst_74 : f32 to vector<32x64xf32>
    %183 = arith.mulf %182, %179 : vector<32x64xf32>
    %184 = arith.mulf %183, %179 : vector<32x64xf32>
    %185 = arith.mulf %184, %179 : vector<32x64xf32>
    %186 = arith.addf %179, %185 : vector<32x64xf32>
    %cst_75 = arith.constant 0.797884583 : f32
    %187 = vector.broadcast %cst_75 : f32 to vector<32x64xf32>
    %188 = arith.mulf %187, %186 : vector<32x64xf32>
    %189 = math.tanh %188 : vector<32x64xf32>
    %cst_76 = arith.constant 1.000000e+00 : f32
    %190 = vector.broadcast %cst_76 : f32 to vector<32x64xf32>
    %191 = arith.addf %190, %189 : vector<32x64xf32>
    %192 = arith.mulf %181, %191 : vector<32x64xf32>
    %193 = arith.truncf %192 : vector<32x64xf32> to vector<32x64xbf16>
    %c0_77 = arith.constant 0 : index
    %c0_78 = arith.constant 0 : index
    %c0_79 = arith.constant 0 : index
    %194 = vector.load %arg17[%c0_77, %c0_78, %c0_79] : memref<2x64x32xbf16, #tpu.memory_space<vmem>>, vector<1x64x32xbf16>
    %195 = vector.shape_cast %194 : vector<1x64x32xbf16> to vector<64x32xbf16>
    %cst_80 = arith.constant dense<0.000000e+00> : vector<32x32xf32>
    %196 = tpu.matmul %193, %195, %cst_80 {dimension_numbers = #tpu.dot_dimension_numbers<[1], [0], [0], [1], [0, 0, 1, 1], [], []>} : vector<32x64xbf16>, vector<64x32xbf16>, vector<32x32xf32> -> vector<32x32xf32>
    %c0_81 = arith.constant 0 : index
    %c0_82 = arith.constant 0 : index
    %c0_83 = arith.constant 0 : index
    %197 = vector.load %arg18[%c0_81, %c0_82, %c0_83] : memref<2x1x32xf32, #tpu.memory_space<vmem>>, vector<1x1x32xf32>
    %198 = vector.shape_cast %197 : vector<1x1x32xf32> to vector<1x32xf32>
    %199 = vector.broadcast %198 : vector<1x32xf32> to vector<32x32xf32>
    %200 = arith.addf %196, %199 : vector<32x32xf32>
    %201 = arith.addf %171, %200 : vector<32x32xf32>
    %c0_84 = arith.constant 0 : index
    %c0_85 = arith.constant 0 : index
    %c0_86 = arith.constant 0 : index
    %202 = vector.load %arg19[%c0_84, %c0_85, %c0_86] : memref<2x1x32xf32, #tpu.memory_space<vmem>>, vector<1x1x32xf32>
    %203 = vector.shape_cast %202 : vector<1x1x32xf32> to vector<1x32xf32>
    %c0_87 = arith.constant 0 : index
    %c0_88 = arith.constant 0 : index
    %c0_89 = arith.constant 0 : index
    %204 = vector.load %arg20[%c0_87, %c0_88, %c0_89] : memref<2x1x32xf32, #tpu.memory_space<vmem>>, vector<1x1x32xf32>
    %205 = vector.shape_cast %204 : vector<1x1x32xf32> to vector<1x32xf32>
    %cst_90 = arith.constant dense<0.000000e+00> : vector<32xf32>
    %206 = vector.multi_reduction <add>, %201, %cst_90 [1] : vector<32x32xf32> to vector<32xf32>
    %207 = vector.shape_cast %206 : vector<32xf32> to vector<32x1xf32>
    %cst_91 = arith.constant 3.200000e+01 : f32
    %208 = vector.broadcast %cst_91 : f32 to vector<32x1xf32>
    %209 = arith.divf %207, %208 : vector<32x1xf32>
    %210 = vector.broadcast %209 : vector<32x1xf32> to vector<32x32xf32>
    %211 = arith.subf %201, %210 : vector<32x32xf32>
    %212 = arith.mulf %211, %211 : vector<32x32xf32>
    %cst_92 = arith.constant dense<0.000000e+00> : vector<32xf32>
    %213 = vector.multi_reduction <add>, %212, %cst_92 [1] : vector<32x32xf32> to vector<32xf32>
    %214 = vector.shape_cast %213 : vector<32xf32> to vector<32x1xf32>
    %cst_93 = arith.constant 3.200000e+01 : f32
    %215 = vector.broadcast %cst_93 : f32 to vector<32x1xf32>
    %216 = arith.divf %214, %215 : vector<32x1xf32>
    %217 = vector.broadcast %209 : vector<32x1xf32> to vector<32x32xf32>
    %218 = arith.subf %201, %217 : vector<32x32xf32>
    %cst_94 = arith.constant 9.99999996E-13 : f32
    %219 = vector.broadcast %cst_94 : f32 to vector<32x1xf32>
    %220 = arith.addf %216, %219 : vector<32x1xf32>
    %221 = math.rsqrt %220 : vector<32x1xf32>
    %222 = vector.broadcast %221 : vector<32x1xf32> to vector<32x32xf32>
    %223 = arith.mulf %218, %222 : vector<32x32xf32>
    %224 = vector.broadcast %203 : vector<1x32xf32> to vector<32x32xf32>
    %225 = arith.mulf %223, %224 : vector<32x32xf32>
    %226 = vector.broadcast %205 : vector<1x32xf32> to vector<32x32xf32>
    %227 = arith.addf %225, %226 : vector<32x32xf32>
    %228 = arith.truncf %227 : vector<32x32xf32> to vector<32x32xbf16>
    %c1 = arith.constant 1 : index
    %c0_95 = arith.constant 0 : index
    %c0_96 = arith.constant 0 : index
    %229 = vector.load %arg5[%c1, %c0_95, %c0_96] : memref<2x32x32xbf16, #tpu.memory_space<vmem>>, vector<1x32x32xbf16>
    %230 = vector.shape_cast %229 : vector<1x32x32xbf16> to vector<32x32xbf16>
    %cst_97 = arith.constant dense<0.000000e+00> : vector<32x32xf32>
    %231 = tpu.matmul %228, %230, %cst_97 {dimension_numbers = #tpu.dot_dimension_numbers<[1], [0], [0], [1], [0, 0, 1, 1], [], []>} : vector<32x32xbf16>, vector<32x32xbf16>, vector<32x32xf32> -> vector<32x32xf32>
    %c1_98 = arith.constant 1 : index
    %c0_99 = arith.constant 0 : index
    %c0_100 = arith.constant 0 : index
    %232 = vector.load %arg6[%c1_98, %c0_99, %c0_100] : memref<2x1x32xf32, #tpu.memory_space<vmem>>, vector<1x1x32xf32>
    %233 = vector.shape_cast %232 : vector<1x1x32xf32> to vector<1x32xf32>
    %234 = vector.broadcast %233 : vector<1x32xf32> to vector<32x32xf32>
    %235 = arith.addf %231, %234 : vector<32x32xf32>
    %c1_101 = arith.constant 1 : index
    %c0_102 = arith.constant 0 : index
    %c0_103 = arith.constant 0 : index
    %236 = vector.load %arg7[%c1_101, %c0_102, %c0_103] : memref<2x32x32xbf16, #tpu.memory_space<vmem>>, vector<1x32x32xbf16>
    %237 = vector.shape_cast %236 : vector<1x32x32xbf16> to vector<32x32xbf16>
    %cst_104 = arith.constant dense<0.000000e+00> : vector<32x32xf32>
    %238 = tpu.matmul %228, %237, %cst_104 {dimension_numbers = #tpu.dot_dimension_numbers<[1], [0], [0], [1], [0, 0, 1, 1], [], []>} : vector<32x32xbf16>, vector<32x32xbf16>, vector<32x32xf32> -> vector<32x32xf32>
    %c1_105 = arith.constant 1 : index
    %c0_106 = arith.constant 0 : index
    %c0_107 = arith.constant 0 : index
    %239 = vector.load %arg8[%c1_105, %c0_106, %c0_107] : memref<2x1x32xf32, #tpu.memory_space<vmem>>, vector<1x1x32xf32>
    %240 = vector.shape_cast %239 : vector<1x1x32xf32> to vector<1x32xf32>
    %241 = vector.broadcast %240 : vector<1x32xf32> to vector<32x32xf32>
    %242 = arith.addf %238, %241 : vector<32x32xf32>
    %c1_108 = arith.constant 1 : index
    %c0_109 = arith.constant 0 : index
    %c0_110 = arith.constant 0 : index
    %243 = vector.load %arg9[%c1_108, %c0_109, %c0_110] : memref<2x32x32xbf16, #tpu.memory_space<vmem>>, vector<1x32x32xbf16>
    %244 = vector.shape_cast %243 : vector<1x32x32xbf16> to vector<32x32xbf16>
    %cst_111 = arith.constant dense<0.000000e+00> : vector<32x32xf32>
    %245 = tpu.matmul %228, %244, %cst_111 {dimension_numbers = #tpu.dot_dimension_numbers<[1], [0], [0], [1], [0, 0, 1, 1], [], []>} : vector<32x32xbf16>, vector<32x32xbf16>, vector<32x32xf32> -> vector<32x32xf32>
    %c1_112 = arith.constant 1 : index
    %c0_113 = arith.constant 0 : index
    %c0_114 = arith.constant 0 : index
    %246 = vector.load %arg10[%c1_112, %c0_113, %c0_114] : memref<2x1x32xf32, #tpu.memory_space<vmem>>, vector<1x1x32xf32>
    %247 = vector.shape_cast %246 : vector<1x1x32xf32> to vector<1x32xf32>
    %248 = vector.broadcast %247 : vector<1x32xf32> to vector<32x32xf32>
    %249 = arith.addf %245, %248 : vector<32x32xf32>
    %250 = vector.extract_strided_slice %25 {offsets = [0, 0], sizes = [1, 16], strides = [1, 1]} : vector<2x16xf32> to vector<1x16xf32>
    %251 = vector.extract_strided_slice %235 {offsets = [0, 0], sizes = [16, 16], strides = [1, 1]} : vector<32x32xf32> to vector<16x16xf32>
    %252 = arith.truncf %251 : vector<16x16xf32> to vector<16x16xbf16>
    %253 = vector.extract_strided_slice %242 {offsets = [0, 0], sizes = [16, 16], strides = [1, 1]} : vector<32x32xf32> to vector<16x16xf32>
    %254 = arith.truncf %253 : vector<16x16xf32> to vector<16x16xbf16>
    %255 = vector.extract_strided_slice %249 {offsets = [0, 0], sizes = [16, 16], strides = [1, 1]} : vector<32x32xf32> to vector<16x16xf32>
    %256 = arith.truncf %255 : vector<16x16xf32> to vector<16x16xbf16>
    %cst_115 = arith.constant dense<0.000000e+00> : vector<16x16xf32>
    %257 = tpu.matmul %252, %254, %cst_115 {dimension_numbers = #tpu.dot_dimension_numbers<[1], [1], [0], [0], [0, 0, 1, 0], [], []>} : vector<16x16xbf16>, vector<16x16xbf16>, vector<16x16xf32> -> vector<16x16xf32>
    %258 = vector.broadcast %250 : vector<1x16xf32> to vector<16x16xf32>
    %259 = arith.addf %257, %258 : vector<16x16xf32>
    %cst_116 = arith.constant dense<0xFF800000> : vector<16xf32>
    %260 = vector.multi_reduction <maximumf>, %259, %cst_116 [1] : vector<16x16xf32> to vector<16xf32>
    %261 = vector.shape_cast %260 : vector<16xf32> to vector<16x1xf32>
    %262 = vector.broadcast %261 : vector<16x1xf32> to vector<16x16xf32>
    %263 = arith.subf %259, %262 : vector<16x16xf32>
    %264 = math.exp %263 : vector<16x16xf32>
    %cst_117 = arith.constant dense<0.000000e+00> : vector<16xf32>
    %265 = vector.multi_reduction <add>, %264, %cst_117 [1] : vector<16x16xf32> to vector<16xf32>
    %266 = vector.shape_cast %265 : vector<16xf32> to vector<16x1xf32>
    %267 = tpu.reciprocal %266 {approx = true} : vector<16x1xf32> -> vector<16x1xf32>
    %268 = vector.broadcast %267 : vector<16x1xf32> to vector<16x16xf32>
    %269 = arith.mulf %264, %268 : vector<16x16xf32>
    %270 = arith.truncf %269 : vector<16x16xf32> to vector<16x16xbf16>
    %cst_118 = arith.constant dense<0.000000e+00> : vector<16x16xf32>
    %271 = tpu.matmul %270, %256, %cst_118 {dimension_numbers = #tpu.dot_dimension_numbers<[1], [0], [0], [1], [0, 0, 1, 1], [], []>} : vector<16x16xbf16>, vector<16x16xbf16>, vector<16x16xf32> -> vector<16x16xf32>
    %272 = vector.extract_strided_slice %235 {offsets = [0, 16], sizes = [16, 16], strides = [1, 1]} : vector<32x32xf32> to vector<16x16xf32>
    %273 = arith.truncf %272 : vector<16x16xf32> to vector<16x16xbf16>
    %274 = vector.extract_strided_slice %242 {offsets = [0, 16], sizes = [16, 16], strides = [1, 1]} : vector<32x32xf32> to vector<16x16xf32>
    %275 = arith.truncf %274 : vector<16x16xf32> to vector<16x16xbf16>
    %276 = vector.extract_strided_slice %249 {offsets = [0, 16], sizes = [16, 16], strides = [1, 1]} : vector<32x32xf32> to vector<16x16xf32>
    %277 = arith.truncf %276 : vector<16x16xf32> to vector<16x16xbf16>
    %cst_119 = arith.constant dense<0.000000e+00> : vector<16x16xf32>
    %278 = tpu.matmul %273, %275, %cst_119 {dimension_numbers = #tpu.dot_dimension_numbers<[1], [1], [0], [0], [0, 0, 1, 0], [], []>} : vector<16x16xbf16>, vector<16x16xbf16>, vector<16x16xf32> -> vector<16x16xf32>
    %279 = vector.broadcast %250 : vector<1x16xf32> to vector<16x16xf32>
    %280 = arith.addf %278, %279 : vector<16x16xf32>
    %cst_120 = arith.constant dense<0xFF800000> : vector<16xf32>
    %281 = vector.multi_reduction <maximumf>, %280, %cst_120 [1] : vector<16x16xf32> to vector<16xf32>
    %282 = vector.shape_cast %281 : vector<16xf32> to vector<16x1xf32>
    %283 = vector.broadcast %282 : vector<16x1xf32> to vector<16x16xf32>
    %284 = arith.subf %280, %283 : vector<16x16xf32>
    %285 = math.exp %284 : vector<16x16xf32>
    %cst_121 = arith.constant dense<0.000000e+00> : vector<16xf32>
    %286 = vector.multi_reduction <add>, %285, %cst_121 [1] : vector<16x16xf32> to vector<16xf32>
    %287 = vector.shape_cast %286 : vector<16xf32> to vector<16x1xf32>
    %288 = tpu.reciprocal %287 {approx = true} : vector<16x1xf32> -> vector<16x1xf32>
    %289 = vector.broadcast %288 : vector<16x1xf32> to vector<16x16xf32>
    %290 = arith.mulf %285, %289 : vector<16x16xf32>
    %291 = arith.truncf %290 : vector<16x16xf32> to vector<16x16xbf16>
    %cst_122 = arith.constant dense<0.000000e+00> : vector<16x16xf32>
    %292 = tpu.matmul %291, %277, %cst_122 {dimension_numbers = #tpu.dot_dimension_numbers<[1], [0], [0], [1], [0, 0, 1, 1], [], []>} : vector<16x16xbf16>, vector<16x16xbf16>, vector<16x16xf32> -> vector<16x16xf32>
    %293 = tpu.concatenate %271, %292 in 1 : vector<16x16xf32>, vector<16x16xf32> -> vector<16x32xf32>
    %294 = vector.extract_strided_slice %25 {offsets = [1, 0], sizes = [1, 16], strides = [1, 1]} : vector<2x16xf32> to vector<1x16xf32>
    %295 = vector.extract_strided_slice %235 {offsets = [16, 0], sizes = [16, 16], strides = [1, 1]} : vector<32x32xf32> to vector<16x16xf32>
    %296 = arith.truncf %295 : vector<16x16xf32> to vector<16x16xbf16>
    %297 = vector.extract_strided_slice %242 {offsets = [16, 0], sizes = [16, 16], strides = [1, 1]} : vector<32x32xf32> to vector<16x16xf32>
    %298 = arith.truncf %297 : vector<16x16xf32> to vector<16x16xbf16>
    %299 = vector.extract_strided_slice %249 {offsets = [16, 0], sizes = [16, 16], strides = [1, 1]} : vector<32x32xf32> to vector<16x16xf32>
    %300 = arith.truncf %299 : vector<16x16xf32> to vector<16x16xbf16>
    %cst_123 = arith.constant dense<0.000000e+00> : vector<16x16xf32>
    %301 = tpu.matmul %296, %298, %cst_123 {dimension_numbers = #tpu.dot_dimension_numbers<[1], [1], [0], [0], [0, 0, 1, 0], [], []>} : vector<16x16xbf16>, vector<16x16xbf16>, vector<16x16xf32> -> vector<16x16xf32>
    %302 = vector.broadcast %294 : vector<1x16xf32> to vector<16x16xf32>
    %303 = arith.addf %301, %302 : vector<16x16xf32>
    %cst_124 = arith.constant dense<0xFF800000> : vector<16xf32>
    %304 = vector.multi_reduction <maximumf>, %303, %cst_124 [1] : vector<16x16xf32> to vector<16xf32>
    %305 = vector.shape_cast %304 : vector<16xf32> to vector<16x1xf32>
    %306 = vector.broadcast %305 : vector<16x1xf32> to vector<16x16xf32>
    %307 = arith.subf %303, %306 : vector<16x16xf32>
    %308 = math.exp %307 : vector<16x16xf32>
    %cst_125 = arith.constant dense<0.000000e+00> : vector<16xf32>
    %309 = vector.multi_reduction <add>, %308, %cst_125 [1] : vector<16x16xf32> to vector<16xf32>
    %310 = vector.shape_cast %309 : vector<16xf32> to vector<16x1xf32>
    %311 = tpu.reciprocal %310 {approx = true} : vector<16x1xf32> -> vector<16x1xf32>
    %312 = vector.broadcast %311 : vector<16x1xf32> to vector<16x16xf32>
    %313 = arith.mulf %308, %312 : vector<16x16xf32>
    %314 = arith.truncf %313 : vector<16x16xf32> to vector<16x16xbf16>
    %cst_126 = arith.constant dense<0.000000e+00> : vector<16x16xf32>
    %315 = tpu.matmul %314, %300, %cst_126 {dimension_numbers = #tpu.dot_dimension_numbers<[1], [0], [0], [1], [0, 0, 1, 1], [], []>} : vector<16x16xbf16>, vector<16x16xbf16>, vector<16x16xf32> -> vector<16x16xf32>
    %316 = vector.extract_strided_slice %235 {offsets = [16, 16], sizes = [16, 16], strides = [1, 1]} : vector<32x32xf32> to vector<16x16xf32>
    %317 = arith.truncf %316 : vector<16x16xf32> to vector<16x16xbf16>
    %318 = vector.extract_strided_slice %242 {offsets = [16, 16], sizes = [16, 16], strides = [1, 1]} : vector<32x32xf32> to vector<16x16xf32>
    %319 = arith.truncf %318 : vector<16x16xf32> to vector<16x16xbf16>
    %320 = vector.extract_strided_slice %249 {offsets = [16, 16], sizes = [16, 16], strides = [1, 1]} : vector<32x32xf32> to vector<16x16xf32>
    %321 = arith.truncf %320 : vector<16x16xf32> to vector<16x16xbf16>
    %cst_127 = arith.constant dense<0.000000e+00> : vector<16x16xf32>
    %322 = tpu.matmul %317, %319, %cst_127 {dimension_numbers = #tpu.dot_dimension_numbers<[1], [1], [0], [0], [0, 0, 1, 0], [], []>} : vector<16x16xbf16>, vector<16x16xbf16>, vector<16x16xf32> -> vector<16x16xf32>
    %323 = vector.broadcast %294 : vector<1x16xf32> to vector<16x16xf32>
    %324 = arith.addf %322, %323 : vector<16x16xf32>
    %cst_128 = arith.constant dense<0xFF800000> : vector<16xf32>
    %325 = vector.multi_reduction <maximumf>, %324, %cst_128 [1] : vector<16x16xf32> to vector<16xf32>
    %326 = vector.shape_cast %325 : vector<16xf32> to vector<16x1xf32>
    %327 = vector.broadcast %326 : vector<16x1xf32> to vector<16x16xf32>
    %328 = arith.subf %324, %327 : vector<16x16xf32>
    %329 = math.exp %328 : vector<16x16xf32>
    %cst_129 = arith.constant dense<0.000000e+00> : vector<16xf32>
    %330 = vector.multi_reduction <add>, %329, %cst_129 [1] : vector<16x16xf32> to vector<16xf32>
    %331 = vector.shape_cast %330 : vector<16xf32> to vector<16x1xf32>
    %332 = tpu.reciprocal %331 {approx = true} : vector<16x1xf32> -> vector<16x1xf32>
    %333 = vector.broadcast %332 : vector<16x1xf32> to vector<16x16xf32>
    %334 = arith.mulf %329, %333 : vector<16x16xf32>
    %335 = arith.truncf %334 : vector<16x16xf32> to vector<16x16xbf16>
    %cst_130 = arith.constant dense<0.000000e+00> : vector<16x16xf32>
    %336 = tpu.matmul %335, %321, %cst_130 {dimension_numbers = #tpu.dot_dimension_numbers<[1], [0], [0], [1], [0, 0, 1, 1], [], []>} : vector<16x16xbf16>, vector<16x16xbf16>, vector<16x16xf32> -> vector<16x16xf32>
    %337 = tpu.concatenate %315, %336 in 1 : vector<16x16xf32>, vector<16x16xf32> -> vector<16x32xf32>
    %338 = tpu.concatenate %293, %337 in 0 : vector<16x32xf32>, vector<16x32xf32> -> vector<32x32xf32>
    %339 = arith.truncf %338 : vector<32x32xf32> to vector<32x32xbf16>
    %c1_131 = arith.constant 1 : index
    %c0_132 = arith.constant 0 : index
    %c0_133 = arith.constant 0 : index
    %340 = vector.load %arg11[%c1_131, %c0_132, %c0_133] : memref<2x32x32xbf16, #tpu.memory_space<vmem>>, vector<1x32x32xbf16>
    %341 = vector.shape_cast %340 : vector<1x32x32xbf16> to vector<32x32xbf16>
    %cst_134 = arith.constant dense<0.000000e+00> : vector<32x32xf32>
    %342 = tpu.matmul %339, %341, %cst_134 {dimension_numbers = #tpu.dot_dimension_numbers<[1], [0], [0], [1], [0, 0, 1, 1], [], []>} : vector<32x32xbf16>, vector<32x32xbf16>, vector<32x32xf32> -> vector<32x32xf32>
    %c1_135 = arith.constant 1 : index
    %c0_136 = arith.constant 0 : index
    %c0_137 = arith.constant 0 : index
    %343 = vector.load %arg12[%c1_135, %c0_136, %c0_137] : memref<2x1x32xf32, #tpu.memory_space<vmem>>, vector<1x1x32xf32>
    %344 = vector.shape_cast %343 : vector<1x1x32xf32> to vector<1x32xf32>
    %345 = vector.broadcast %344 : vector<1x32xf32> to vector<32x32xf32>
    %346 = arith.addf %342, %345 : vector<32x32xf32>
    %347 = arith.addf %227, %346 : vector<32x32xf32>
    %c1_138 = arith.constant 1 : index
    %c0_139 = arith.constant 0 : index
    %c0_140 = arith.constant 0 : index
    %348 = vector.load %arg13[%c1_138, %c0_139, %c0_140] : memref<2x1x32xf32, #tpu.memory_space<vmem>>, vector<1x1x32xf32>
    %349 = vector.shape_cast %348 : vector<1x1x32xf32> to vector<1x32xf32>
    %c1_141 = arith.constant 1 : index
    %c0_142 = arith.constant 0 : index
    %c0_143 = arith.constant 0 : index
    %350 = vector.load %arg14[%c1_141, %c0_142, %c0_143] : memref<2x1x32xf32, #tpu.memory_space<vmem>>, vector<1x1x32xf32>
    %351 = vector.shape_cast %350 : vector<1x1x32xf32> to vector<1x32xf32>
    %cst_144 = arith.constant dense<0.000000e+00> : vector<32xf32>
    %352 = vector.multi_reduction <add>, %347, %cst_144 [1] : vector<32x32xf32> to vector<32xf32>
    %353 = vector.shape_cast %352 : vector<32xf32> to vector<32x1xf32>
    %cst_145 = arith.constant 3.200000e+01 : f32
    %354 = vector.broadcast %cst_145 : f32 to vector<32x1xf32>
    %355 = arith.divf %353, %354 : vector<32x1xf32>
    %356 = vector.broadcast %355 : vector<32x1xf32> to vector<32x32xf32>
    %357 = arith.subf %347, %356 : vector<32x32xf32>
    %358 = arith.mulf %357, %357 : vector<32x32xf32>
    %cst_146 = arith.constant dense<0.000000e+00> : vector<32xf32>
    %359 = vector.multi_reduction <add>, %358, %cst_146 [1] : vector<32x32xf32> to vector<32xf32>
    %360 = vector.shape_cast %359 : vector<32xf32> to vector<32x1xf32>
    %cst_147 = arith.constant 3.200000e+01 : f32
    %361 = vector.broadcast %cst_147 : f32 to vector<32x1xf32>
    %362 = arith.divf %360, %361 : vector<32x1xf32>
    %363 = vector.broadcast %355 : vector<32x1xf32> to vector<32x32xf32>
    %364 = arith.subf %347, %363 : vector<32x32xf32>
    %cst_148 = arith.constant 9.99999996E-13 : f32
    %365 = vector.broadcast %cst_148 : f32 to vector<32x1xf32>
    %366 = arith.addf %362, %365 : vector<32x1xf32>
    %367 = math.rsqrt %366 : vector<32x1xf32>
    %368 = vector.broadcast %367 : vector<32x1xf32> to vector<32x32xf32>
    %369 = arith.mulf %364, %368 : vector<32x32xf32>
    %370 = vector.broadcast %349 : vector<1x32xf32> to vector<32x32xf32>
    %371 = arith.mulf %369, %370 : vector<32x32xf32>
    %372 = vector.broadcast %351 : vector<1x32xf32> to vector<32x32xf32>
    %373 = arith.addf %371, %372 : vector<32x32xf32>
    %374 = arith.truncf %373 : vector<32x32xf32> to vector<32x32xbf16>
    %c1_149 = arith.constant 1 : index
    %c0_150 = arith.constant 0 : index
    %c0_151 = arith.constant 0 : index
    %375 = vector.load %arg15[%c1_149, %c0_150, %c0_151] : memref<2x32x64xbf16, #tpu.memory_space<vmem>>, vector<1x32x64xbf16>
    %376 = vector.shape_cast %375 : vector<1x32x64xbf16> to vector<32x64xbf16>
    %cst_152 = arith.constant dense<0.000000e+00> : vector<32x64xf32>
    %377 = tpu.matmul %374, %376, %cst_152 {dimension_numbers = #tpu.dot_dimension_numbers<[1], [0], [0], [1], [0, 0, 1, 1], [], []>} : vector<32x32xbf16>, vector<32x64xbf16>, vector<32x64xf32> -> vector<32x64xf32>
    %c1_153 = arith.constant 1 : index
    %c0_154 = arith.constant 0 : index
    %c0_155 = arith.constant 0 : index
    %378 = vector.load %arg16[%c1_153, %c0_154, %c0_155] : memref<2x1x64xf32, #tpu.memory_space<vmem>>, vector<1x1x64xf32>
    %379 = vector.shape_cast %378 : vector<1x1x64xf32> to vector<1x64xf32>
    %380 = vector.broadcast %379 : vector<1x64xf32> to vector<32x64xf32>
    %381 = arith.addf %377, %380 : vector<32x64xf32>
    %cst_156 = arith.constant 5.000000e-01 : f32
    %382 = vector.broadcast %cst_156 : f32 to vector<32x64xf32>
    %383 = arith.mulf %382, %381 : vector<32x64xf32>
    %cst_157 = arith.constant 4.471500e-02 : f32
    %384 = vector.broadcast %cst_157 : f32 to vector<32x64xf32>
    %385 = arith.mulf %384, %381 : vector<32x64xf32>
    %386 = arith.mulf %385, %381 : vector<32x64xf32>
    %387 = arith.mulf %386, %381 : vector<32x64xf32>
    %388 = arith.addf %381, %387 : vector<32x64xf32>
    %cst_158 = arith.constant 0.797884583 : f32
    %389 = vector.broadcast %cst_158 : f32 to vector<32x64xf32>
    %390 = arith.mulf %389, %388 : vector<32x64xf32>
    %391 = math.tanh %390 : vector<32x64xf32>
    %cst_159 = arith.constant 1.000000e+00 : f32
    %392 = vector.broadcast %cst_159 : f32 to vector<32x64xf32>
    %393 = arith.addf %392, %391 : vector<32x64xf32>
    %394 = arith.mulf %383, %393 : vector<32x64xf32>
    %395 = arith.truncf %394 : vector<32x64xf32> to vector<32x64xbf16>
    %c1_160 = arith.constant 1 : index
    %c0_161 = arith.constant 0 : index
    %c0_162 = arith.constant 0 : index
    %396 = vector.load %arg17[%c1_160, %c0_161, %c0_162] : memref<2x64x32xbf16, #tpu.memory_space<vmem>>, vector<1x64x32xbf16>
    %397 = vector.shape_cast %396 : vector<1x64x32xbf16> to vector<64x32xbf16>
    %cst_163 = arith.constant dense<0.000000e+00> : vector<32x32xf32>
    %398 = tpu.matmul %395, %397, %cst_163 {dimension_numbers = #tpu.dot_dimension_numbers<[1], [0], [0], [1], [0, 0, 1, 1], [], []>} : vector<32x64xbf16>, vector<64x32xbf16>, vector<32x32xf32> -> vector<32x32xf32>
    %c1_164 = arith.constant 1 : index
    %c0_165 = arith.constant 0 : index
    %c0_166 = arith.constant 0 : index
    %399 = vector.load %arg18[%c1_164, %c0_165, %c0_166] : memref<2x1x32xf32, #tpu.memory_space<vmem>>, vector<1x1x32xf32>
    %400 = vector.shape_cast %399 : vector<1x1x32xf32> to vector<1x32xf32>
    %401 = vector.broadcast %400 : vector<1x32xf32> to vector<32x32xf32>
    %402 = arith.addf %398, %401 : vector<32x32xf32>
    %403 = arith.addf %373, %402 : vector<32x32xf32>
    %c1_167 = arith.constant 1 : index
    %c0_168 = arith.constant 0 : index
    %c0_169 = arith.constant 0 : index
    %404 = vector.load %arg19[%c1_167, %c0_168, %c0_169] : memref<2x1x32xf32, #tpu.memory_space<vmem>>, vector<1x1x32xf32>
    %405 = vector.shape_cast %404 : vector<1x1x32xf32> to vector<1x32xf32>
    %c1_170 = arith.constant 1 : index
    %c0_171 = arith.constant 0 : index
    %c0_172 = arith.constant 0 : index
    %406 = vector.load %arg20[%c1_170, %c0_171, %c0_172] : memref<2x1x32xf32, #tpu.memory_space<vmem>>, vector<1x1x32xf32>
    %407 = vector.shape_cast %406 : vector<1x1x32xf32> to vector<1x32xf32>
    %cst_173 = arith.constant dense<0.000000e+00> : vector<32xf32>
    %408 = vector.multi_reduction <add>, %403, %cst_173 [1] : vector<32x32xf32> to vector<32xf32>
    %409 = vector.shape_cast %408 : vector<32xf32> to vector<32x1xf32>
    %cst_174 = arith.constant 3.200000e+01 : f32
    %410 = vector.broadcast %cst_174 : f32 to vector<32x1xf32>
    %411 = arith.divf %409, %410 : vector<32x1xf32>
    %412 = vector.broadcast %411 : vector<32x1xf32> to vector<32x32xf32>
    %413 = arith.subf %403, %412 : vector<32x32xf32>
    %414 = arith.mulf %413, %413 : vector<32x32xf32>
    %cst_175 = arith.constant dense<0.000000e+00> : vector<32xf32>
    %415 = vector.multi_reduction <add>, %414, %cst_175 [1] : vector<32x32xf32> to vector<32xf32>
    %416 = vector.shape_cast %415 : vector<32xf32> to vector<32x1xf32>
    %cst_176 = arith.constant 3.200000e+01 : f32
    %417 = vector.broadcast %cst_176 : f32 to vector<32x1xf32>
    %418 = arith.divf %416, %417 : vector<32x1xf32>
    %419 = vector.broadcast %411 : vector<32x1xf32> to vector<32x32xf32>
    %420 = arith.subf %403, %419 : vector<32x32xf32>
    %cst_177 = arith.constant 9.99999996E-13 : f32
    %421 = vector.broadcast %cst_177 : f32 to vector<32x1xf32>
    %422 = arith.addf %418, %421 : vector<32x1xf32>
    %423 = math.rsqrt %422 : vector<32x1xf32>
    %424 = vector.broadcast %423 : vector<32x1xf32> to vector<32x32xf32>
    %425 = arith.mulf %420, %424 : vector<32x32xf32>
    %426 = vector.broadcast %405 : vector<1x32xf32> to vector<32x32xf32>
    %427 = arith.mulf %425, %426 : vector<32x32xf32>
    %428 = vector.broadcast %407 : vector<1x32xf32> to vector<32x32xf32>
    %429 = arith.addf %427, %428 : vector<32x32xf32>
    %430 = vector.extract_strided_slice %429 {offsets = [0, 0], sizes = [16, 32], strides = [1, 1]} : vector<32x32xf32> to vector<16x32xf32>
    %c0_178 = arith.constant 0 : index
    %c0_179 = arith.constant 0 : index
    %c0_180 = arith.constant 0 : index
    %431 = vector.load %arg2[%c0_178, %c0_179, %c0_180] : memref<2x8x16xf32, #tpu.memory_space<vmem>>, vector<1x8x16xf32>
    %432 = vector.shape_cast %431 : vector<1x8x16xf32> to vector<8x16xf32>
    %cst_181 = arith.constant dense<0.000000e+00> : vector<8x32xf32>
    %433 = tpu.matmul %432, %430, %cst_181 {dimension_numbers = #tpu.dot_dimension_numbers<[1], [0], [0], [1], [0, 0, 1, 1], [], []>} : vector<8x16xf32>, vector<16x32xf32>, vector<8x32xf32> -> vector<8x32xf32>
    %c0_182 = arith.constant 0 : index
    %c0_183 = arith.constant 0 : index
    %c0_184 = arith.constant 0 : index
    %434 = vector.load %arg21[%c0_182, %c0_183, %c0_184] : memref<2x8x32xf32, #tpu.memory_space<vmem>>, vector<1x8x32xf32>
    %435 = vector.shape_cast %434 : vector<1x8x32xf32> to vector<8x32xf32>
    %436 = vector.shape_cast %433 : vector<8x32xf32> to vector<1x8x32xf32>
    tpu.vector_store %arg21[%c0_182, %c0_183, %c0_184], %436 {strides = array<i32>} : memref<2x8x32xf32, #tpu.memory_space<vmem>>, vector<1x8x32xf32>,
    %437 = vector.extract_strided_slice %429 {offsets = [16, 0], sizes = [16, 32], strides = [1, 1]} : vector<32x32xf32> to vector<16x32xf32>
    %c1_185 = arith.constant 1 : index
    %c0_186 = arith.constant 0 : index
    %c0_187 = arith.constant 0 : index
    %438 = vector.load %arg2[%c1_185, %c0_186, %c0_187] : memref<2x8x16xf32, #tpu.memory_space<vmem>>, vector<1x8x16xf32>
    %439 = vector.shape_cast %438 : vector<1x8x16xf32> to vector<8x16xf32>
    %cst_188 = arith.constant dense<0.000000e+00> : vector<8x32xf32>
    %440 = tpu.matmul %439, %437, %cst_188 {dimension_numbers = #tpu.dot_dimension_numbers<[1], [0], [0], [1], [0, 0, 1, 1], [], []>} : vector<8x16xf32>, vector<16x32xf32>, vector<8x32xf32> -> vector<8x32xf32>
    %c1_189 = arith.constant 1 : index
    %c0_190 = arith.constant 0 : index
    %c0_191 = arith.constant 0 : index
    %441 = vector.load %arg21[%c1_189, %c0_190, %c0_191] : memref<2x8x32xf32, #tpu.memory_space<vmem>>, vector<1x8x32xf32>
    %442 = vector.shape_cast %441 : vector<1x8x32xf32> to vector<8x32xf32>
    %443 = vector.shape_cast %440 : vector<8x32xf32> to vector<1x8x32xf32>
    tpu.vector_store %arg21[%c1_189, %c0_190, %c0_191], %443 {strides = array<i32>} : memref<2x8x32xf32, #tpu.memory_space<vmem>>, vector<1x8x32xf32>,
    return
  }
}

</mosaic_0001>

<llo_original>
// kernel: tpu_custom_call.1
$region0: #{tpu_custom_call.1}
  #allocation0 [shape = 'u32[]', space=smem, size = 0x4, offset = 0x4, fixed_abs, tag = 'smem constant byte address 0x4 - core index']
  #allocation1 [shape = 'u32[144,128]{1,0:T(1,128)}', space=vmem, size = 0x12000, scoped, tag = 'internal scratch']
  %s0 = inlined_call_operand.vmem [shape: f32[32,32], index: 0, kind: input, shape index: {}]
  %s1 = inlined_call_operand.hbm [shape: f32[2,16], index: 1, kind: input, shape index: {}]
  %s2 = inlined_call_operand.hbm [shape: f32[2,8,16], index: 2, kind: input, shape index: {}]
  %s3 = inlined_call_operand.hbm [shape: f32[1,32], index: 3, kind: input, shape index: {}]
  %s4 = inlined_call_operand.hbm [shape: f32[1,32], index: 4, kind: input, shape index: {}]
  %s5 = inlined_call_operand.vmem [shape: bf16[2,32,32], index: 5, kind: input, shape index: {}]
  %s6 = inlined_call_operand.hbm [shape: f32[2,1,32], index: 6, kind: input, shape index: {}]
  %s7 = inlined_call_operand.vmem [shape: bf16[2,32,32], index: 7, kind: input, shape index: {}]
  %s8 = inlined_call_operand.hbm [shape: f32[2,1,32], index: 8, kind: input, shape index: {}]
  %s9 = inlined_call_operand.vmem [shape: bf16[2,32,32], index: 9, kind: input, shape index: {}]
  %s10 = inlined_call_operand.hbm [shape: f32[2,1,32], index: 10, kind: input, shape index: {}]
  %s11 = inlined_call_operand.hbm [shape: bf16[2,32,32], index: 11, kind: input, shape index: {}]
  %s12 = inlined_call_operand.hbm [shape: f32[2,1,32], index: 12, kind: input, shape index: {}]
  %s13 = inlined_call_operand.hbm [shape: f32[2,1,32], index: 13, kind: input, shape index: {}]
  %s14 = inlined_call_operand.hbm [shape: f32[2,1,32], index: 14, kind: input, shape index: {}]
  %s15 = inlined_call_operand.hbm [shape: bf16[2,32,64], index: 15, kind: input, shape index: {}]
  %s16 = inlined_call_operand.hbm [shape: f32[2,1,64], index: 16, kind: input, shape index: {}]
  %s17 = inlined_call_operand.vmem [shape: bf16[2,64,32], index: 17, kind: input, shape index: {}]
  %s18 = inlined_call_operand.vmem [shape: f32[2,1,32], index: 18, kind: input, shape index: {}]
  %s19 = inlined_call_operand.vmem [shape: f32[2,1,32], index: 19, kind: input, shape index: {}]
  %s20 = inlined_call_operand.vmem [shape: f32[2,1,32], index: 20, kind: input, shape index: {}]
  %s21 = inlined_call_operand.hbm [shape: f32[2,8,32], index: 21, kind: output, shape index: {}]
  %s22 = sld [smem:[#allocation0]]
  $region146: #{tpu_custom_call.1} parent=0
    _
  %s24 = ssub.s32 1, %s22
  %s25 = scalar_select 0, %s24, %s22
  $region1: #{tpu_custom_call.1} parent=0
    #allocation2 [shape = 'u8[1024]{0}', space=vmem, size = 0x400, scoped, tag = 'input window, operand 1, single buffered']
    #allocation3 [shape = 's32[1]{0}', space=sflag, size = 0x4, scoped, tag = 'scoped memory for tpu_custom_call.1']
    #allocation4 [shape = 's32[1]{0}', space=sflag, size = 0x4, scoped, tag = 'scoped memory for tpu_custom_call.1']
    #allocation5 [shape = 'u8[8192]{0}', space=vmem, size = 0x2000, scoped, tag = 'input window, operand 2, single buffered']
    #allocation6 [shape = 's32[1]{0}', space=sflag, size = 0x4, scoped, tag = 'scoped memory for tpu_custom_call.1']
    #allocation7 [shape = 'u8[512]{0}', space=vmem, size = 0x400, scoped, tag = 'input window, operand 3, single buffered']
    #allocation8 [shape = 'u8[512]{0}', space=vmem, size = 0x400, scoped, tag = 'input window, operand 4, single buffered']
    #allocation9 [shape = 's32[1]{0}', space=sflag, size = 0x4, scoped, tag = 'scoped memory for tpu_custom_call.1']
    #allocation10 [shape = 'u8[1024]{0}', space=vmem, size = 0x400, scoped, tag = 'input window, operand 6, single buffered']
    #allocation11 [shape = 'u8[1024]{0}', space=vmem, size = 0x400, scoped, tag = 'input window, operand 8, single buffered']
    #allocation12 [shape = 's32[1]{0}', space=sflag, size = 0x4, scoped, tag = 'scoped memory for tpu_custom_call.1']
    #allocation13 [shape = 'u8[1024]{0}', space=vmem, size = 0x400, scoped, tag = 'input window, operand 10, single buffered']
    #allocation14 [shape = 'u8[16384]{0}', space=vmem, size = 0x4000, scoped, tag = 'input window, operand 11, single buffered']
    #allocation15 [shape = 's32[1]{0}', space=sflag, size = 0x4, scoped, tag = 'scoped memory for tpu_custom_call.1']
    #allocation16 [shape = 'u8[1024]{0}', space=vmem, size = 0x400, scoped, tag = 'input window, operand 12, single buffered']
    #allocation17 [shape = 'u8[1024]{0}', space=vmem, size = 0x400, scoped, tag = 'input window, operand 13, single buffered']
    #allocation18 [shape = 's32[1]{0}', space=sflag, size = 0x4, scoped, tag = 'scoped memory for tpu_custom_call.1']
    #allocation19 [shape = 'u8[1024]{0}', space=vmem, size = 0x400, scoped, tag = 'input window, operand 14, single buffered']
    #allocation20 [shape = 'u8[16384]{0}', space=vmem, size = 0x4000, scoped, tag = 'input window, operand 15, single buffered']
    #allocation21 [shape = 's32[1]{0}', space=sflag, size = 0x4, scoped, tag = 'scoped memory for tpu_custom_call.1']
    #allocation22 [shape = 'u8[1024]{0}', space=vmem, size = 0x400, scoped, tag = 'input window, operand 16, single buffered']
    #allocation23 [shape = 'u8[8192]{0}', space=vmem, size = 0x2000, scoped, tag = 'output window, operand 0, single buffered']
    %26 = vsyncpa [#allocation3], 0
    %27 = vsyncpa [#allocation6], 0
    %28 = vsyncpa [#allocation9], 0
    %29 = vsyncpa [#allocation12], 0
    %30 = vsyncpa [#allocation15], 0
    %31 = vsyncpa [#allocation18], 0
    %32 = vsyncpa [#allocation21], 0
    %33 = vsyncpa [#allocation4], 0
    // Predicated region
    $region2: #{tpu_custom_call.1} parent=1 // pred_check
      _
    $region3: #{tpu_custom_call.1} parent=1 // pred_check_branch
      %35 = sbr.rel (0) target = $region5
    $region4: #{tpu_custom_call.1} parent=1 // pred_region
      _
    $region5: #{tpu_custom_call.1} parent=1 // pred_fallthru
      _
    // Predicated region
    $region6: #{tpu_custom_call.1} parent=1 // pred_check
      _
    $region7: #{tpu_custom_call.1} parent=1 // pred_check_branch
      %37 = sbr.rel (0) target = $region9
    $region8: #{tpu_custom_call.1} parent=1 // pred_region
      %s39 = ssub.s32 32, 32
      %40 = vsyncadd [#allocation3], %s39
      %s42 = sshll.u32 [#allocation2], 4
      %s43 = int_to_ptr.vmem [resolvable:$true] %s42
      %45 = dma.hbm_to_vmem [thread:$0]  %s1, 32, %s43, [#allocation3]
    $region9: #{tpu_custom_call.1} parent=1 // pred_fallthru
      _
    // Predicated region
    $region10: #{tpu_custom_call.1} parent=1 // pred_check
      _
    $region11: #{tpu_custom_call.1} parent=1 // pred_check_branch
      %47 = sbr.rel (0) target = $region13
    $region12: #{tpu_custom_call.1} parent=1 // pred_region
      %s49 = ssub.s32 256, 256
      %50 = vsyncadd [#allocation6], %s49
      %s51 = sshll.u32 [#allocation5], 4
      %s52 = int_to_ptr.vmem [resolvable:$true] %s51
      %57 = dma.hbm_to_vmem [thread:$0]  %s2, 256, %s52, [#allocation6], 128, 128, 8
    $region13: #{tpu_custom_call.1} parent=1 // pred_fallthru
      _
    // Predicated region
    $region14: #{tpu_custom_call.1} parent=1 // pred_check
      _
    $region15: #{tpu_custom_call.1} parent=1 // pred_check_branch
      %59 = sbr.rel (0) target = $region17
    $region16: #{tpu_custom_call.1} parent=1 // pred_region
      %s61 = ssub.s32 16, 16
      %62 = vsyncadd [#allocation6], %s61
      %s64 = sshll.u32 [#allocation7], 4
      %s65 = int_to_ptr.vmem [resolvable:$true] %s64
      %67 = dma.hbm_to_vmem [thread:$0]  %s3, 16, %s65, [#allocation6]
    $region17: #{tpu_custom_call.1} parent=1 // pred_fallthru
      _
    // Predicated region
    $region18: #{tpu_custom_call.1} parent=1 // pred_check
      _
    $region19: #{tpu_custom_call.1} parent=1 // pred_check_branch
      %69 = sbr.rel (0) target = $region21
    $region20: #{tpu_custom_call.1} parent=1 // pred_region
      %s71 = ssub.s32 16, 16
      %72 = vsyncadd [#allocation9], %s71
      %s74 = sshll.u32 [#allocation8], 4
      %s75 = int_to_ptr.vmem [resolvable:$true] %s74
      %77 = dma.hbm_to_vmem [thread:$0]  %s4, 16, %s75, [#allocation9]
    $region21: #{tpu_custom_call.1} parent=1 // pred_fallthru
      _
    // Predicated region
    $region22: #{tpu_custom_call.1} parent=1 // pred_check
      _
    $region23: #{tpu_custom_call.1} parent=1 // pred_check_branch
      %79 = sbr.rel (0) target = $region25
    $region24: #{tpu_custom_call.1} parent=1 // pred_region
      _
    $region25: #{tpu_custom_call.1} parent=1 // pred_fallthru
      _
    // Predicated region
    $region26: #{tpu_custom_call.1} parent=1 // pred_check
      _
    $region27: #{tpu_custom_call.1} parent=1 // pred_check_branch
      %81 = sbr.rel (0) target = $region29
    $region28: #{tpu_custom_call.1} parent=1 // pred_region
      %s83 = ssub.s32 32, 32
      %84 = vsyncadd [#allocation9], %s83
      %s85 = sshll.u32 [#allocation10], 4
      %s86 = int_to_ptr.vmem [resolvable:$true] %s85
      %91 = dma.hbm_to_vmem [thread:$0]  %s6, 32, %s86, [#allocation9], 16, 16, 1
    $region29: #{tpu_custom_call.1} parent=1 // pred_fallthru
      _
    // Predicated region
    $region30: #{tpu_custom_call.1} parent=1 // pred_check
      _
    $region31: #{tpu_custom_call.1} parent=1 // pred_check_branch
      %93 = sbr.rel (0) target = $region33
    $region32: #{tpu_custom_call.1} parent=1 // pred_region
      _
    $region33: #{tpu_custom_call.1} parent=1 // pred_fallthru
      _
    // Predicated region
    $region34: #{tpu_custom_call.1} parent=1 // pred_check
      _
    $region35: #{tpu_custom_call.1} parent=1 // pred_check_branch
      %95 = sbr.rel (0) target = $region37
    $region36: #{tpu_custom_call.1} parent=1 // pred_region
      %s97 = ssub.s32 32, 32
      %98 = vsyncadd [#allocation12], %s97
      %s99 = sshll.u32 [#allocation11], 4
      %s100 = int_to_ptr.vmem [resolvable:$true] %s99
      %105 = dma.hbm_to_vmem [thread:$0]  %s8, 32, %s100, [#allocation12], 16, 16, 1
    $region37: #{tpu_custom_call.1} parent=1 // pred_fallthru
      _
    // Predicated region
    $region38: #{tpu_custom_call.1} parent=1 // pred_check
      _
    $region39: #{tpu_custom_call.1} parent=1 // pred_check_branch
      %107 = sbr.rel (0) target = $region41
    $region40: #{tpu_custom_call.1} parent=1 // pred_region
      _
    $region41: #{tpu_custom_call.1} parent=1 // pred_fallthru
      _
    // Predicated region
    $region42: #{tpu_custom_call.1} parent=1 // pred_check
      _
    $region43: #{tpu_custom_call.1} parent=1 // pred_check_branch
      %109 = sbr.rel (0) target = $region45
    $region44: #{tpu_custom_call.1} parent=1 // pred_region
      %s111 = ssub.s32 32, 32
      %112 = vsyncadd [#allocation12], %s111
      %s113 = sshll.u32 [#allocation13], 4
      %s114 = int_to_ptr.vmem [resolvable:$true] %s113
      %119 = dma.hbm_to_vmem [thread:$0]  %s10, 32, %s114, [#allocation12], 16, 16, 1
    $region45: #{tpu_custom_call.1} parent=1 // pred_fallthru
      _
    // Predicated region
    $region46: #{tpu_custom_call.1} parent=1 // pred_check
      _
    $region47: #{tpu_custom_call.1} parent=1 // pred_check_branch
      %121 = sbr.rel (0) target = $region49
    $region48: #{tpu_custom_call.1} parent=1 // pred_region
      %s123 = ssub.s32 512, 512
      %124 = vsyncadd [#allocation15], %s123
      %s125 = sshll.u32 [#allocation14], 4
      %s126 = int_to_ptr.vmem [resolvable:$true] %s125
      %131 = dma.hbm_to_vmem [thread:$0]  %s11, 512, %s126, [#allocation15], 64, 64, 4
    $region49: #{tpu_custom_call.1} parent=1 // pred_fallthru
      _
    // Predicated region
    $region50: #{tpu_custom_call.1} parent=1 // pred_check
      _
    $region51: #{tpu_custom_call.1} parent=1 // pred_check_branch
      %133 = sbr.rel (0) target = $region53
    $region52: #{tpu_custom_call.1} parent=1 // pred_region
      %s135 = ssub.s32 32, 32
      %136 = vsyncadd [#allocation15], %s135
      %s137 = sshll.u32 [#allocation16], 4
      %s138 = int_to_ptr.vmem [resolvable:$true] %s137
      %143 = dma.hbm_to_vmem [thread:$0]  %s12, 32, %s138, [#allocation15], 16, 16, 1
    $region53: #{tpu_custom_call.1} parent=1 // pred_fallthru
      _
    // Predicated region
    $region54: #{tpu_custom_call.1} parent=1 // pred_check
      _
    $region55: #{tpu_custom_call.1} parent=1 // pred_check_branch
      %145 = sbr.rel (0) target = $region57
    $region56: #{tpu_custom_call.1} parent=1 // pred_region
      %s147 = ssub.s32 32, 32
      %148 = vsyncadd [#allocation18], %s147
      %s149 = sshll.u32 [#allocation17], 4
      %s150 = int_to_ptr.vmem [resolvable:$true] %s149
      %155 = dma.hbm_to_vmem [thread:$0]  %s13, 32, %s150, [#allocation18], 16, 16, 1
    $region57: #{tpu_custom_call.1} parent=1 // pred_fallthru
      _
    // Predicated region
    $region58: #{tpu_custom_call.1} parent=1 // pred_check
      _
    $region59: #{tpu_custom_call.1} parent=1 // pred_check_branch
      %157 = sbr.rel (0) target = $region61
    $region60: #{tpu_custom_call.1} parent=1 // pred_region
      %s159 = ssub.s32 32, 32
      %160 = vsyncadd [#allocation18], %s159
      %s161 = sshll.u32 [#allocation19], 4
      %s162 = int_to_ptr.vmem [resolvable:$true] %s161
      %167 = dma.hbm_to_vmem [thread:$0]  %s14, 32, %s162, [#allocation18], 16, 16, 1
    $region61: #{tpu_custom_call.1} parent=1 // pred_fallthru
      _
    // Predicated region
    $region62: #{tpu_custom_call.1} parent=1 // pred_check
      _
    $region63: #{tpu_custom_call.1} parent=1 // pred_check_branch
      %169 = sbr.rel (0) target = $region65
    $region64: #{tpu_custom_call.1} parent=1 // pred_region
      %s171 = ssub.s32 512, 512
      %172 = vsyncadd [#allocation21], %s171
      %s173 = sshll.u32 [#allocation20], 4
      %s174 = int_to_ptr.vmem [resolvable:$true] %s173
      %179 = dma.hbm_to_vmem [thread:$0]  %s15, 512, %s174, [#allocation21], 64, 64, 4
    $region65: #{tpu_custom_call.1} parent=1 // pred_fallthru
      _
    // Predicated region
    $region66: #{tpu_custom_call.1} parent=1 // pred_check
      _
    $region67: #{tpu_custom_call.1} parent=1 // pred_check_branch
      %181 = sbr.rel (0) target = $region69
    $region68: #{tpu_custom_call.1} parent=1 // pred_region
      %s183 = ssub.s32 32, 32
      %184 = vsyncadd [#allocation21], %s183
      %s185 = sshll.u32 [#allocation22], 4
      %s186 = int_to_ptr.vmem [resolvable:$true] %s185
      %191 = dma.hbm_to_vmem [thread:$0]  %s16, 32, %s186, [#allocation21], 16, 16, 1
    $region69: #{tpu_custom_call.1} parent=1 // pred_fallthru
      _
    // Predicated region
    $region70: #{tpu_custom_call.1} parent=1 // pred_check
      _
    $region71: #{tpu_custom_call.1} parent=1 // pred_check_branch
      %193 = sbr.rel (0) target = $region73
    $region72: #{tpu_custom_call.1} parent=1 // pred_region
      _
    $region73: #{tpu_custom_call.1} parent=1 // pred_fallthru
      _
    // Predicated region
    $region74: #{tpu_custom_call.1} parent=1 // pred_check
      _
    $region75: #{tpu_custom_call.1} parent=1 // pred_check_branch
      %195 = sbr.rel (0) target = $region77
    $region76: #{tpu_custom_call.1} parent=1 // pred_region
      _
    $region77: #{tpu_custom_call.1} parent=1 // pred_fallthru
      _
    // Predicated region
    $region78: #{tpu_custom_call.1} parent=1 // pred_check
      _
    $region79: #{tpu_custom_call.1} parent=1 // pred_check_branch
      %197 = sbr.rel (0) target = $region81
    $region80: #{tpu_custom_call.1} parent=1 // pred_region
      _
    $region81: #{tpu_custom_call.1} parent=1 // pred_fallthru
      _
    // Predicated region
    $region82: #{tpu_custom_call.1} parent=1 // pred_check
      _
    $region83: #{tpu_custom_call.1} parent=1 // pred_check_branch
      %199 = sbr.rel (0) target = $region85
    $region84: #{tpu_custom_call.1} parent=1 // pred_region
      _
    $region85: #{tpu_custom_call.1} parent=1 // pred_fallthru
      _
    // Predicated region
    $region86: #{tpu_custom_call.1} parent=1 // pred_check
      _
    $region87: #{tpu_custom_call.1} parent=1 // pred_check_branch
      %201 = sbr.rel (0) target = $region89
    $region88: #{tpu_custom_call.1} parent=1 // pred_region
      %202 = dma.done [#allocation3], 32
    $region89: #{tpu_custom_call.1} parent=1 // pred_fallthru
      _
    // Predicated region
    $region90: #{tpu_custom_call.1} parent=1 // pred_check
      _
    $region91: #{tpu_custom_call.1} parent=1 // pred_check_branch
      %204 = sbr.rel (0) target = $region93
    $region92: #{tpu_custom_call.1} parent=1 // pred_region
      %205 = dma.done [#allocation6], 256
    $region93: #{tpu_custom_call.1} parent=1 // pred_fallthru
      _
    // Predicated region
    $region94: #{tpu_custom_call.1} parent=1 // pred_check
      _
    $region95: #{tpu_custom_call.1} parent=1 // pred_check_branch
      %207 = sbr.rel (0) target = $region97
    $region96: #{tpu_custom_call.1} parent=1 // pred_region
      %208 = dma.done [#allocation6], 16
    $region97: #{tpu_custom_call.1} parent=1 // pred_fallthru
      _
    // Predicated region
    $region98: #{tpu_custom_call.1} parent=1 // pred_check
      _
    $region99: #{tpu_custom_call.1} parent=1 // pred_check_branch
      %210 = sbr.rel (0) target = $region101
    $region100: #{tpu_custom_call.1} parent=1 // pred_region
      %211 = dma.done [#allocation9], 16
    $region101: #{tpu_custom_call.1} parent=1 // pred_fallthru
      _
    // Predicated region
    $region102: #{tpu_custom_call.1} parent=1 // pred_check
      _
    $region103: #{tpu_custom_call.1} parent=1 // pred_check_branch
      %213 = sbr.rel (0) target = $region105
    $region104: #{tpu_custom_call.1} parent=1 // pred_region
      %214 = dma.done [#allocation9], 32
    $region105: #{tpu_custom_call.1} parent=1 // pred_fallthru
      _
    // Predicated region
    $region106: #{tpu_custom_call.1} parent=1 // pred_check
      _
    $region107: #{tpu_custom_call.1} parent=1 // pred_check_branch
      %216 = sbr.rel (0) target = $region109
    $region108: #{tpu_custom_call.1} parent=1 // pred_region
      %217 = dma.done [#allocation12], 32
    $region109: #{tpu_custom_call.1} parent=1 // pred_fallthru
      _
    // Predicated region
    $region110: #{tpu_custom_call.1} parent=1 // pred_check
      _
    $region111: #{tpu_custom_call.1} parent=1 // pred_check_branch
      %219 = sbr.rel (0) target = $region113
    $region112: #{tpu_custom_call.1} parent=1 // pred_region
      %220 = dma.done [#allocation12], 32
    $region113: #{tpu_custom_call.1} parent=1 // pred_fallthru
      _
    // Predicated region
    $region114: #{tpu_custom_call.1} parent=1 // pred_check
      _
    $region115: #{tpu_custom_call.1} parent=1 // pred_check_branch
      %222 = sbr.rel (0) target = $region117
    $region116: #{tpu_custom_call.1} parent=1 // pred_region
      %223 = dma.done [#allocation15], 512
    $region117: #{tpu_custom_call.1} parent=1 // pred_fallthru
      _
    // Predicated region
    $region118: #{tpu_custom_call.1} parent=1 // pred_check
      _
    $region119: #{tpu_custom_call.1} parent=1 // pred_check_branch
      %225 = sbr.rel (0) target = $region121
    $region120: #{tpu_custom_call.1} parent=1 // pred_region
      %226 = dma.done [#allocation15], 32
    $region121: #{tpu_custom_call.1} parent=1 // pred_fallthru
      _
    // Predicated region
    $region122: #{tpu_custom_call.1} parent=1 // pred_check
      _
    $region123: #{tpu_custom_call.1} parent=1 // pred_check_branch
      %228 = sbr.rel (0) target = $region125
    $region124: #{tpu_custom_call.1} parent=1 // pred_region
      %229 = dma.done [#allocation18], 32
    $region125: #{tpu_custom_call.1} parent=1 // pred_fallthru
      _
    // Predicated region
    $region126: #{tpu_custom_call.1} parent=1 // pred_check
      _
    $region127: #{tpu_custom_call.1} parent=1 // pred_check_branch
      %231 = sbr.rel (0) target = $region129
    $region128: #{tpu_custom_call.1} parent=1 // pred_region
      %232 = dma.done [#allocation18], 32
    $region129: #{tpu_custom_call.1} parent=1 // pred_fallthru
      _
    // Predicated region
    $region130: #{tpu_custom_call.1} parent=1 // pred_check
      _
    $region131: #{tpu_custom_call.1} parent=1 // pred_check_branch
      %234 = sbr.rel (0) target = $region133
    $region132: #{tpu_custom_call.1} parent=1 // pred_region
      %235 = dma.done [#allocation21], 512
    $region133: #{tpu_custom_call.1} parent=1 // pred_fallthru
      _
    // Predicated region
    $region134: #{tpu_custom_call.1} parent=1 // pred_check
      _
    $region135: #{tpu_custom_call.1} parent=1 // pred_check_branch
      %237 = sbr.rel (0) target = $region137
    $region136: #{tpu_custom_call.1} parent=1 // pred_region
      %238 = dma.done [#allocation21], 32
    $region137: #{tpu_custom_call.1} parent=1 // pred_fallthru
      _
    %v240 = vld [vmem:[%s0] sm:$0xff]
    %v241 = vld [vmem:[%s0 + $0x8] sm:$0xff]
    %v242 = vld [vmem:[%s0 + $0x10] sm:$0xff]
    %v243 = vld [vmem:[%s0 + $0x18] sm:$0xff]
    %v244 = vld [vmem:[#allocation7] sm:$0x1]
    %v245 = vld [vmem:[#allocation8] sm:$0x1]
    %vm246 = vcmask 261120
    %v247 = vsel %vm246, %v240, 0.0
    %248 = vadd.xlane.f32.xlu0 %v247
    %v249 = vpop.xlane.xlu0 %248
    %v250 = vsel %vm246, %v241, 0.0
    %251 = vadd.xlane.f32.xlu0 %v250
    %v252 = vpop.xlane.xlu0 %251
    %v253 = vsel %vm246, %v242, 0.0
    %254 = vadd.xlane.f32.xlu0 %v253
    %v255 = vpop.xlane.xlu0 %254
    %v256 = vsel %vm246, %v243, 0.0
    %257 = vadd.xlane.f32.xlu0 %v256
    %v258 = vpop.xlane.xlu0 %257
    %v259 = vrcp.pop 32.0
    %v260 = vmul.f32 %v249, %v259
    %v261 = vmul.f32 %v252, %v259
    %v262 = vmul.f32 %v255, %v259
    %v263 = vmul.f32 %v258, %v259
    %v264 = vsub.f32 %v240, %v260
    %v265 = vsub.f32 %v241, %v261
    %v266 = vsub.f32 %v242, %v262
    %v267 = vsub.f32 %v243, %v263
    %v268 = vmul.f32 %v264, %v264
    %v269 = vmul.f32 %v265, %v265
    %v270 = vmul.f32 %v266, %v266
    %v271 = vmul.f32 %v267, %v267
    %v272 = vsel %vm246, %v268, 0.0
    %273 = vadd.xlane.f32.xlu0 %v272
    %v274 = vpop.xlane.xlu0 %273
    %v275 = vsel %vm246, %v269, 0.0
    %276 = vadd.xlane.f32.xlu0 %v275
    %v277 = vpop.xlane.xlu0 %276
    %v278 = vsel %vm246, %v270, 0.0
    %279 = vadd.xlane.f32.xlu0 %v278
    %v280 = vpop.xlane.xlu0 %279
    %v281 = vsel %vm246, %v271, 0.0
    %282 = vadd.xlane.f32.xlu0 %v281
    %v283 = vpop.xlane.xlu0 %282
    %v284 = vmul.f32 %v274, %v259
    %v285 = vmul.f32 %v277, %v259
    %v286 = vmul.f32 %v280, %v259
    %v287 = vmul.f32 %v283, %v259
    %v288 = vadd.f32 %v284, 1e-12
    %v289 = vadd.f32 %v285, 1e-12
    %v290 = vadd.f32 %v286, 1e-12
    %v291 = vadd.f32 %v287, 1e-12
    %v292 = vrsqrt.pop %v288
    %v293 = vrsqrt.pop %v289
    %v294 = vrsqrt.pop %v290
    %v295 = vrsqrt.pop %v291
    %v296 = vmul.f32 %v264, %v292
    %v297 = vmul.f32 %v265, %v293
    %v298 = vmul.f32 %v266, %v294
    %v299 = vmul.f32 %v267, %v295
    %v301 = vlaneseq
    %v302 = vshrl.u32 %v301, 7
    %v303 = vsub.s32 0, %v302
    %v304 = vrot.slane %v244, %v303
    %v306 = vmul.f32 %v296, %v304
    %v307 = vmul.f32 %v297, %v304
    %v308 = vmul.f32 %v298, %v304
    %v309 = vmul.f32 %v299, %v304
    %v311 = vlaneseq
    %v312 = vshrl.u32 %v311, 7
    %v313 = vsub.s32 0, %v312
    %v314 = vrot.slane %v245, %v313
    %v316 = vadd.f32 %v306, %v314
    %v317 = vadd.f32 %v307, %v314
    %v318 = vadd.f32 %v308, %v314
    %v319 = vadd.f32 %v309, %v314
    %v320 = vld [vmem:[#allocation2] sm:$0x3]
    %v321 = vpack.c.bf16 %v317, %v316
    %v322 = vpack.c.bf16 %v319, %v318
    %v323 = vld [vmem:[%s5] sm:$0xf]
    %v324 = vld [vmem:[%s5 + $0x4] sm:$0xf]
    %v325 = vld [vmem:[%s5 + $0x8] sm:$0xf]
    %v326 = vld [vmem:[%s5 + $0xc] sm:$0xf]
    %v327 = vld [vmem:[#allocation10] sm:$0x1]
    %v329 = vlaneseq
    %v330 = vshrl.u32 %v329, 7
    %v331 = vsub.s32 0, %v330
    %v332 = vrot.slane %v327, %v331
    %v338 = vunpack.c.l.b16 %v323
    %v339 = vunpack.c.l.b16 %v324
    %v340 = vunpack.c.l.b16 %v325
    %v341 = vunpack.c.l.b16 %v326
    %v342 = vpack.c.b16 %v339, %v338
    %v343 = vpack.c.b16 %v341, %v340
    %v347 = vsel %vm246, %v321, 0
    %v350 = vsel %vm246, %v322, 0
    %352 = vmatprep.subr.bf16.mxu0 0
    %353 = vmatpush1.bf16.msra.mxu0 %v342
    %354 = vmatprep.subr.bf16.mxu0 0
    %355 = vmatpush1.bf16.msra.mxu0 %v343
    %356 = vmatprep.subr.bf16.mxu0 0
    %357 = vmatpush1.bf16.msra.mxu0 0
    %358 = vmatprep.subr.bf16.mxu0 0
    %359 = vmatpush1.bf16.msra.mxu0 0
    %360 = vmatprep.subr.bf16.mxu0 0
    %361 = vmatpush1.bf16.msra.mxu0 0
    %362 = vmatprep.subr.bf16.mxu0 0
    %363 = vmatpush1.bf16.msra.mxu0 0
    %364 = vmatprep.subr.bf16.mxu0 0
    %365 = vmatpush1.bf16.msra.mxu0 0
    %366 = vmatprep.subr.bf16.mxu0 0
    %367 = vmatpush1.bf16.msra.mxu0 0
    %368 = vmatprep.subr.bf16.mxu0 0
    %369 = vmatpush1.bf16.msra.mxu0 0
    %370 = vmatprep.subr.bf16.mxu0 0
    %371 = vmatpush1.bf16.msra.mxu0 0
    %372 = vmatprep.subr.bf16.mxu0 0
    %373 = vmatpush1.bf16.msra.mxu0 0
    %374 = vmatprep.subr.bf16.mxu0 0
    %375 = vmatpush1.bf16.msra.mxu0 0
    %376 = vmatprep.subr.bf16.mxu0 0
    %377 = vmatpush1.bf16.msra.mxu0 0
    %378 = vmatprep.subr.bf16.mxu0 0
    %379 = vmatpush1.bf16.msra.mxu0 0
    %380 = vmatprep.subr.bf16.mxu0 0
    %381 = vmatpush1.bf16.msra.mxu0 0
    %382 = vmatprep.subr.bf16.mxu0 0
    %383 = vmatpush1.bf16.msra.mxu0 0
    %384 = vmatprep.mubr.bf16.mxu0 0
    %385 = vmatmul.mubr.bf16.gmra.mrb[0].mxu0 %v347
    %v386 = vpop.f32.mrb[0].mxu0
    %v387 = vadd.f32 %v332, %v386
    %v388 = vpop.f32.mrb[0].mxu0
    %v389 = vpop.f32.mrb[0].mxu0
    %v390 = vadd.f32 %v332, %v389
    %v391 = vpop.f32.mrb[0].mxu0
    %392 = vmatprep.mubr.bf16.mxu0 0
    %393 = vmatmul.mubr.bf16.gmra.mrb[0].mxu0 %v350
    %v394 = vpop.f32.mrb[0].mxu0
    %v395 = vadd.f32 %v332, %v394
    %v396 = vpop.f32.mrb[0].mxu0
    %v397 = vpop.f32.mrb[0].mxu0
    %v398 = vadd.f32 %v332, %v397
    %v399 = vpop.f32.mrb[0].mxu0
    %400 = vdwg.mxu0
    %v401 = vld [vmem:[%s7] sm:$0xf]
    %v402 = vld [vmem:[%s7 + $0x4] sm:$0xf]
    %v403 = vld [vmem:[%s7 + $0x8] sm:$0xf]
    %v404 = vld [vmem:[%s7 + $0xc] sm:$0xf]
    %v405 = vld [vmem:[#allocation11] sm:$0x1]
    %v407 = vlaneseq
    %v408 = vshrl.u32 %v407, 7
    %v409 = vsub.s32 0, %v408
    %v410 = vrot.slane %v405, %v409
    %v416 = vunpack.c.l.b16 %v401
    %v417 = vunpack.c.l.b16 %v402
    %v418 = vunpack.c.l.b16 %v403
    %v419 = vunpack.c.l.b16 %v404
    %v420 = vpack.c.b16 %v417, %v416
    %v421 = vpack.c.b16 %v419, %v418
    %424 = vmatprep.subr.bf16.mxu0 0
    %425 = vmatpush1.bf16.msra.mxu0 %v420
    %426 = vmatprep.subr.bf16.mxu0 0
    %427 = vmatpush1.bf16.msra.mxu0 %v421
    %428 = vmatprep.subr.bf16.mxu0 0
    %429 = vmatpush1.bf16.msra.mxu0 0
    %430 = vmatprep.subr.bf16.mxu0 0
    %431 = vmatpush1.bf16.msra.mxu0 0
    %432 = vmatprep.subr.bf16.mxu0 0
    %433 = vmatpush1.bf16.msra.mxu0 0
    %434 = vmatprep.subr.bf16.mxu0 0
    %435 = vmatpush1.bf16.msra.mxu0 0
    %436 = vmatprep.subr.bf16.mxu0 0
    %437 = vmatpush1.bf16.msra.mxu0 0
    %438 = vmatprep.subr.bf16.mxu0 0
    %439 = vmatpush1.bf16.msra.mxu0 0
    %440 = vmatprep.subr.bf16.mxu0 0
    %441 = vmatpush1.bf16.msra.mxu0 0
    %442 = vmatprep.subr.bf16.mxu0 0
    %443 = vmatpush1.bf16.msra.mxu0 0
    %444 = vmatprep.subr.bf16.mxu0 0
    %445 = vmatpush1.bf16.msra.mxu0 0
    %446 = vmatprep.subr.bf16.mxu0 0
    %447 = vmatpush1.bf16.msra.mxu0 0
    %448 = vmatprep.subr.bf16.mxu0 0
    %449 = vmatpush1.bf16.msra.mxu0 0
    %450 = vmatprep.subr.bf16.mxu0 0
    %451 = vmatpush1.bf16.msra.mxu0 0
    %452 = vmatprep.subr.bf16.mxu0 0
    %453 = vmatpush1.bf16.msra.mxu0 0
    %454 = vmatprep.subr.bf16.mxu0 0
    %455 = vmatpush1.bf16.msra.mxu0 0
    %456 = vmatprep.mubr.bf16.mxu0 0
    %457 = vmatmul.mubr.bf16.gmra.mrb[0].mxu0 %v347
    %v458 = vpop.f32.mrb[0].mxu0
    %v459 = vadd.f32 %v410, %v458
    %v460 = vpop.f32.mrb[0].mxu0
    %v461 = vpop.f32.mrb[0].mxu0
    %v462 = vadd.f32 %v410, %v461
    %v463 = vpop.f32.mrb[0].mxu0
    %464 = vmatprep.mubr.bf16.mxu0 0
    %465 = vmatmul.mubr.bf16.gmra.mrb[0].mxu0 %v350
    %v466 = vpop.f32.mrb[0].mxu0
    %v467 = vadd.f32 %v410, %v466
    %v468 = vpop.f32.mrb[0].mxu0
    %v469 = vpop.f32.mrb[0].mxu0
    %v470 = vadd.f32 %v410, %v469
    %v471 = vpop.f32.mrb[0].mxu0
    %472 = vdwg.mxu0
    %v473 = vld [vmem:[%s9] sm:$0xf]
    %v474 = vld [vmem:[%s9 + $0x4] sm:$0xf]
    %v475 = vld [vmem:[%s9 + $0x8] sm:$0xf]
    %v476 = vld [vmem:[%s9 + $0xc] sm:$0xf]
    %v477 = vld [vmem:[#allocation13] sm:$0x1]
    %v479 = vlaneseq
    %v480 = vshrl.u32 %v479, 7
    %v481 = vsub.s32 0, %v480
    %v482 = vrot.slane %v477, %v481
    %v488 = vunpack.c.l.b16 %v473
    %v489 = vunpack.c.l.b16 %v474
    %v490 = vunpack.c.l.b16 %v475
    %v491 = vunpack.c.l.b16 %v476
    %v492 = vpack.c.b16 %v489, %v488
    %v493 = vpack.c.b16 %v491, %v490
    %496 = vmatprep.subr.bf16.mxu0 0
    %497 = vmatpush1.bf16.msra.mxu0 %v492
    %498 = vmatprep.subr.bf16.mxu0 0
    %499 = vmatpush1.bf16.msra.mxu0 %v493
    %500 = vmatprep.subr.bf16.mxu0 0
    %501 = vmatpush1.bf16.msra.mxu0 0
    %502 = vmatprep.subr.bf16.mxu0 0
    %503 = vmatpush1.bf16.msra.mxu0 0
    %504 = vmatprep.subr.bf16.mxu0 0
    %505 = vmatpush1.bf16.msra.mxu0 0
    %506 = vmatprep.subr.bf16.mxu0 0
    %507 = vmatpush1.bf16.msra.mxu0 0
    %508 = vmatprep.subr.bf16.mxu0 0
    %509 = vmatpush1.bf16.msra.mxu0 0
    %510 = vmatprep.subr.bf16.mxu0 0
    %511 = vmatpush1.bf16.msra.mxu0 0
    %512 = vmatprep.subr.bf16.mxu0 0
    %513 = vmatpush1.bf16.msra.mxu0 0
    %514 = vmatprep.subr.bf16.mxu0 0
    %515 = vmatpush1.bf16.msra.mxu0 0
    %516 = vmatprep.subr.bf16.mxu0 0
    %517 = vmatpush1.bf16.msra.mxu0 0
    %518 = vmatprep.subr.bf16.mxu0 0
    %519 = vmatpush1.bf16.msra.mxu0 0
    %520 = vmatprep.subr.bf16.mxu0 0
    %521 = vmatpush1.bf16.msra.mxu0 0
    %522 = vmatprep.subr.bf16.mxu0 0
    %523 = vmatpush1.bf16.msra.mxu0 0
    %524 = vmatprep.subr.bf16.mxu0 0
    %525 = vmatpush1.bf16.msra.mxu0 0
    %526 = vmatprep.subr.bf16.mxu0 0
    %527 = vmatpush1.bf16.msra.mxu0 0
    %528 = vmatprep.mubr.bf16.mxu0 0
    %529 = vmatmul.mubr.bf16.gmra.mrb[0].mxu0 %v347
    %v530 = vpop.f32.mrb[0].mxu0
    %v531 = vadd.f32 %v482, %v530
    %v532 = vpop.f32.mrb[0].mxu0
    %v533 = vpop.f32.mrb[0].mxu0
    %v534 = vadd.f32 %v482, %v533
    %v535 = vpop.f32.mrb[0].mxu0
    %536 = vmatprep.mubr.bf16.mxu0 0
    %537 = vmatmul.mubr.bf16.gmra.mrb[0].mxu0 %v350
    %v538 = vpop.f32.mrb[0].mxu0
    %v539 = vadd.f32 %v482, %v538
    %v540 = vpop.f32.mrb[0].mxu0
    %v541 = vpop.f32.mrb[0].mxu0
    %v542 = vadd.f32 %v482, %v541
    %v543 = vpop.f32.mrb[0].mxu0
    %544 = vdwg.mxu0
    %v545 = vpack.c.bf16 %v390, %v387
    %v546 = vpack.c.bf16 %v462, %v459
    %v547 = vpack.c.bf16 %v534, %v531
    %v548 = vlaneseq
    %v549 = vshrl.u32 %v548, 7
    %v550 = vsub.s32 0, %v549
    %v551 = vrot.slane %v320, %v550
    %vm552 = vcmask 130048
    %v554 = vsel %vm552, %v545, 0
    %v557 = vsel %vm552, %v546, 0
    %559 = vmatprep.subr.bf16.mxu0 0
    %560 = vmatpush1.bf16.xpose.msra.mxu0 %v557
    %561 = vmatprep.subr.bf16.mxu0 0
    %562 = vmatpush1.bf16.xpose.msra.mxu0 0
    %563 = vmatprep.subr.bf16.mxu0 0
    %564 = vmatpush1.bf16.xpose.msra.mxu0 0
    %565 = vmatprep.subr.bf16.mxu0 0
    %566 = vmatpush1.bf16.xpose.msra.mxu0 0
    %567 = vmatprep.subr.bf16.mxu0 0
    %568 = vmatpush1.bf16.xpose.msra.mxu0 0
    %569 = vmatprep.subr.bf16.mxu0 0
    %570 = vmatpush1.bf16.xpose.msra.mxu0 0
    %571 = vmatprep.subr.bf16.mxu0 0
    %572 = vmatpush1.bf16.xpose.msra.mxu0 0
    %573 = vmatprep.subr.bf16.mxu0 0
    %574 = vmatpush1.bf16.xpose.msra.mxu0 0
    %575 = vmatprep.subr.bf16.mxu0 0
    %576 = vmatpush1.bf16.xpose.msra.mxu0 0
    %577 = vmatprep.subr.bf16.mxu0 0
    %578 = vmatpush1.bf16.xpose.msra.mxu0 0
    %579 = vmatprep.subr.bf16.mxu0 0
    %580 = vmatpush1.bf16.xpose.msra.mxu0 0
    %581 = vmatprep.subr.bf16.mxu0 0
    %582 = vmatpush1.bf16.xpose.msra.mxu0 0
    %583 = vmatprep.subr.bf16.mxu0 0
    %584 = vmatpush1.bf16.xpose.msra.mxu0 0
    %585 = vmatprep.subr.bf16.mxu0 0
    %586 = vmatpush1.bf16.xpose.msra.mxu0 0
    %587 = vmatprep.subr.bf16.mxu0 0
    %588 = vmatpush1.bf16.xpose.msra.mxu0 0
    %589 = vmatprep.subr.bf16.mxu0 0
    %590 = vmatpush1.bf16.xpose.msra.mxu0 0
    %591 = vmatprep.mubr.bf16.mxu0 0
    %592 = vmatmul.mubr.bf16.gmra.mrb[0].mxu0 %v554
    %v593 = vpop.f32.mrb[0].mxu0
    %v594 = vadd.f32 %v551, %v593
    %v595 = vpop.f32.mrb[0].mxu0
    %v596 = vpop.f32.mrb[0].mxu0
    %v597 = vadd.f32 %v551, %v596
    %v598 = vpop.f32.mrb[0].mxu0
    %599 = vdwg.mxu0
    %v600 = vsel %vm552, %v594, -inf
    %601 = vmax.xlane.f32.xlu0 %v600
    %v602 = vpop.xlane.xlu0 %601
    %v603 = vsel %vm552, %v597, -inf
    %604 = vmax.xlane.f32.xlu0 %v603
    %v605 = vpop.xlane.xlu0 %604
    %v606 = vsub.f32 %v594, %v602
    %v607 = vsub.f32 %v597, %v605
    %v608 = vmul.f32 %v606, 1.442695
    %v609 = vpow.pop %v608
    %v610 = vmul.f32 %v607, 1.442695
    %v611 = vpow.pop %v610
    %v612 = vsel %vm552, %v609, 0.0
    %613 = vadd.xlane.f32.xlu0 %v612
    %v614 = vpop.xlane.xlu0 %613
    %v615 = vsel %vm552, %v611, 0.0
    %616 = vadd.xlane.f32.xlu0 %v615
    %v617 = vpop.xlane.xlu0 %616
    %v618 = vrcp.pop %v614
    %v619 = vrcp.pop %v617
    %v620 = vmul.f32 %v609, %v618
    %v621 = vmul.f32 %v611, %v619
    %v622 = vpack.c.bf16 %v621, %v620
    %v624 = vsel %vm552, %v622, 0
    %626 = vmatprep.subr.bf16.mxu0 0
    %627 = vmatpush1.bf16.msra.mxu0 %v547
    %628 = vmatprep.subr.bf16.mxu0 0
    %629 = vmatpush1.bf16.msra.mxu0 0
    %630 = vmatprep.subr.bf16.mxu0 0
    %631 = vmatpush1.bf16.msra.mxu0 0
    %632 = vmatprep.subr.bf16.mxu0 0
    %633 = vmatpush1.bf16.msra.mxu0 0
    %634 = vmatprep.subr.bf16.mxu0 0
    %635 = vmatpush1.bf16.msra.mxu0 0
    %636 = vmatprep.subr.bf16.mxu0 0
    %637 = vmatpush1.bf16.msra.mxu0 0
    %638 = vmatprep.subr.bf16.mxu0 0
    %639 = vmatpush1.bf16.msra.mxu0 0
    %640 = vmatprep.subr.bf16.mxu0 0
    %641 = vmatpush1.bf16.msra.mxu0 0
    %642 = vmatprep.subr.bf16.mxu0 0
    %643 = vmatpush1.bf16.msra.mxu0 0
    %644 = vmatprep.subr.bf16.mxu0 0
    %645 = vmatpush1.bf16.msra.mxu0 0
    %646 = vmatprep.subr.bf16.mxu0 0
    %647 = vmatpush1.bf16.msra.mxu0 0
    %648 = vmatprep.subr.bf16.mxu0 0
    %649 = vmatpush1.bf16.msra.mxu0 0
    %650 = vmatprep.subr.bf16.mxu0 0
    %651 = vmatpush1.bf16.msra.mxu0 0
    %652 = vmatprep.subr.bf16.mxu0 0
    %653 = vmatpush1.bf16.msra.mxu0 0
    %654 = vmatprep.subr.bf16.mxu0 0
    %655 = vmatpush1.bf16.msra.mxu0 0
    %656 = vmatprep.subr.bf16.mxu0 0
    %657 = vmatpush1.bf16.msra.mxu0 0
    %658 = vmatprep.mubr.bf16.mxu0 0
    %659 = vmatmul.mubr.bf16.gmra.mrb[0].mxu0 %v624
    %v660 = vpop.f32.mrb[0].mxu0
    %v661 = vadd.f32 0.0, %v660
    %v662 = vpop.f32.mrb[0].mxu0
    %v663 = vpop.f32.mrb[0].mxu0
    %v664 = vadd.f32 0.0, %v663
    %v665 = vpop.f32.mrb[0].mxu0
    %666 = vdwg.mxu0
    %668 = vrot.lane.b32.xlu0 %v545, 112
    %v669 = vpop.permute.xlu0 %668
    %671 = vrot.lane.b32.xlu0 %v546, 112
    %v672 = vpop.permute.xlu0 %671
    %v674 = vsel %vm552, %v669, 0
    %v677 = vsel %vm552, %v672, 0
    %679 = vmatprep.subr.bf16.mxu0 0
    %680 = vmatpush1.bf16.xpose.msra.mxu0 %v677
    %681 = vmatprep.subr.bf16.mxu0 0
    %682 = vmatpush1.bf16.xpose.msra.mxu0 0
    %683 = vmatprep.subr.bf16.mxu0 0
    %684 = vmatpush1.bf16.xpose.msra.mxu0 0
    %685 = vmatprep.subr.bf16.mxu0 0
    %686 = vmatpush1.bf16.xpose.msra.mxu0 0
    %687 = vmatprep.subr.bf16.mxu0 0
    %688 = vmatpush1.bf16.xpose.msra.mxu0 0
    %689 = vmatprep.subr.bf16.mxu0 0
    %690 = vmatpush1.bf16.xpose.msra.mxu0 0
    %691 = vmatprep.subr.bf16.mxu0 0
    %692 = vmatpush1.bf16.xpose.msra.mxu0 0
    %693 = vmatprep.subr.bf16.mxu0 0
    %694 = vmatpush1.bf16.xpose.msra.mxu0 0
    %695 = vmatprep.subr.bf16.mxu0 0
    %696 = vmatpush1.bf16.xpose.msra.mxu0 0
    %697 = vmatprep.subr.bf16.mxu0 0
    %698 = vmatpush1.bf16.xpose.msra.mxu0 0
    %699 = vmatprep.subr.bf16.mxu0 0
    %700 = vmatpush1.bf16.xpose.msra.mxu0 0
    %701 = vmatprep.subr.bf16.mxu0 0
    %702 = vmatpush1.bf16.xpose.msra.mxu0 0
    %703 = vmatprep.subr.bf16.mxu0 0
    %704 = vmatpush1.bf16.xpose.msra.mxu0 0
    %705 = vmatprep.subr.bf16.mxu0 0
    %706 = vmatpush1.bf16.xpose.msra.mxu0 0
    %707 = vmatprep.subr.bf16.mxu0 0
    %708 = vmatpush1.bf16.xpose.msra.mxu0 0
    %709 = vmatprep.subr.bf16.mxu0 0
    %710 = vmatpush1.bf16.xpose.msra.mxu0 0
    %711 = vmatprep.mubr.bf16.mxu0 0
    %712 = vmatmul.mubr.bf16.gmra.mrb[0].mxu0 %v674
    %v713 = vpop.f32.mrb[0].mxu0
    %v714 = vadd.f32 %v551, %v713
    %v715 = vpop.f32.mrb[0].mxu0
    %v716 = vpop.f32.mrb[0].mxu0
    %v717 = vadd.f32 %v551, %v716
    %v718 = vpop.f32.mrb[0].mxu0
    %719 = vdwg.mxu0
    %v720 = vsel %vm552, %v714, -inf
    %721 = vmax.xlane.f32.xlu0 %v720
    %v722 = vpop.xlane.xlu0 %721
    %v723 = vsel %vm552, %v717, -inf
    %724 = vmax.xlane.f32.xlu0 %v723
    %v725 = vpop.xlane.xlu0 %724
    %v726 = vsub.f32 %v714, %v722
    %v727 = vsub.f32 %v717, %v725
    %v728 = vmul.f32 %v726, 1.442695
    %v729 = vpow.pop %v728
    %v730 = vmul.f32 %v727, 1.442695
    %v731 = vpow.pop %v730
    %v732 = vsel %vm552, %v729, 0.0
    %733 = vadd.xlane.f32.xlu0 %v732
    %v734 = vpop.xlane.xlu0 %733
    %v735 = vsel %vm552, %v731, 0.0
    %736 = vadd.xlane.f32.xlu0 %v735
    %v737 = vpop.xlane.xlu0 %736
    %v738 = vrcp.pop %v734
    %v739 = vrcp.pop %v737
    %v740 = vmul.f32 %v729, %v738
    %v741 = vmul.f32 %v731, %v739
    %v742 = vpack.c.bf16 %v741, %v740
    %744 = vrot.lane.b32.xlu0 %v547, 112
    %v745 = vpop.permute.xlu0 %744
    %v748 = vsel %vm552, %v742, 0
    %750 = vmatprep.subr.bf16.mxu0 0
    %751 = vmatpush1.bf16.msra.mxu0 %v745
    %752 = vmatprep.subr.bf16.mxu0 0
    %753 = vmatpush1.bf16.msra.mxu0 0
    %754 = vmatprep.subr.bf16.mxu0 0
    %755 = vmatpush1.bf16.msra.mxu0 0
    %756 = vmatprep.subr.bf16.mxu0 0
    %757 = vmatpush1.bf16.msra.mxu0 0
    %758 = vmatprep.subr.bf16.mxu0 0
    %759 = vmatpush1.bf16.msra.mxu0 0
    %760 = vmatprep.subr.bf16.mxu0 0
    %761 = vmatpush1.bf16.msra.mxu0 0
    %762 = vmatprep.subr.bf16.mxu0 0
    %763 = vmatpush1.bf16.msra.mxu0 0
    %764 = vmatprep.subr.bf16.mxu0 0
    %765 = vmatpush1.bf16.msra.mxu0 0
    %766 = vmatprep.subr.bf16.mxu0 0
    %767 = vmatpush1.bf16.msra.mxu0 0
    %768 = vmatprep.subr.bf16.mxu0 0
    %769 = vmatpush1.bf16.msra.mxu0 0
    %770 = vmatprep.subr.bf16.mxu0 0
    %771 = vmatpush1.bf16.msra.mxu0 0
    %772 = vmatprep.subr.bf16.mxu0 0
    %773 = vmatpush1.bf16.msra.mxu0 0
    %774 = vmatprep.subr.bf16.mxu0 0
    %775 = vmatpush1.bf16.msra.mxu0 0
    %776 = vmatprep.subr.bf16.mxu0 0
    %777 = vmatpush1.bf16.msra.mxu0 0
    %778 = vmatprep.subr.bf16.mxu0 0
    %779 = vmatpush1.bf16.msra.mxu0 0
    %780 = vmatprep.subr.bf16.mxu0 0
    %781 = vmatpush1.bf16.msra.mxu0 0
    %782 = vmatprep.mubr.bf16.mxu0 0
    %783 = vmatmul.mubr.bf16.gmra.mrb[0].mxu0 %v748
    %v784 = vpop.f32.mrb[0].mxu0
    %v785 = vadd.f32 0.0, %v784
    %v786 = vpop.f32.mrb[0].mxu0
    %v787 = vpop.f32.mrb[0].mxu0
    %v788 = vadd.f32 0.0, %v787
    %v789 = vpop.f32.mrb[0].mxu0
    %790 = vdwg.mxu0
    %793 = vrot.lane.b32.xlu0 %v785, 16
    %v794 = vpop.permute.xlu0 %793
    %795 = vrot.lane.b32.xlu0 %v788, 16
    %v796 = vpop.permute.xlu0 %795
    %v799 = vsel %vm552, %v661, %v794
    %v800 = vsel %vm552, %v664, %v796
    %v801 = vpack.c.bf16 %v398, %v395
    %v802 = vpack.c.bf16 %v470, %v467
    %v803 = vpack.c.bf16 %v542, %v539
    %v804 = vlaneseq
    %v805 = vshrl.u32 %v804, 7
    %v806 = vsub.s32 1, %v805
    %v807 = vrot.slane %v320, %v806
    %v809 = vsel %vm552, %v801, 0
    %v812 = vsel %vm552, %v802, 0
    %814 = vmatprep.subr.bf16.mxu0 0
    %815 = vmatpush1.bf16.xpose.msra.mxu0 %v812
    %816 = vmatprep.subr.bf16.mxu0 0
    %817 = vmatpush1.bf16.xpose.msra.mxu0 0
    %818 = vmatprep.subr.bf16.mxu0 0
    %819 = vmatpush1.bf16.xpose.msra.mxu0 0
    %820 = vmatprep.subr.bf16.mxu0 0
    %821 = vmatpush1.bf16.xpose.msra.mxu0 0
    %822 = vmatprep.subr.bf16.mxu0 0
    %823 = vmatpush1.bf16.xpose.msra.mxu0 0
    %824 = vmatprep.subr.bf16.mxu0 0
    %825 = vmatpush1.bf16.xpose.msra.mxu0 0
    %826 = vmatprep.subr.bf16.mxu0 0
    %827 = vmatpush1.bf16.xpose.msra.mxu0 0
    %828 = vmatprep.subr.bf16.mxu0 0
    %829 = vmatpush1.bf16.xpose.msra.mxu0 0
    %830 = vmatprep.subr.bf16.mxu0 0
    %831 = vmatpush1.bf16.xpose.msra.mxu0 0
    %832 = vmatprep.subr.bf16.mxu0 0
    %833 = vmatpush1.bf16.xpose.msra.mxu0 0
    %834 = vmatprep.subr.bf16.mxu0 0
    %835 = vmatpush1.bf16.xpose.msra.mxu0 0
    %836 = vmatprep.subr.bf16.mxu0 0
    %837 = vmatpush1.bf16.xpose.msra.mxu0 0
    %838 = vmatprep.subr.bf16.mxu0 0
    %839 = vmatpush1.bf16.xpose.msra.mxu0 0
    %840 = vmatprep.subr.bf16.mxu0 0
    %841 = vmatpush1.bf16.xpose.msra.mxu0 0
    %842 = vmatprep.subr.bf16.mxu0 0
    %843 = vmatpush1.bf16.xpose.msra.mxu0 0
    %844 = vmatprep.subr.bf16.mxu0 0
    %845 = vmatpush1.bf16.xpose.msra.mxu0 0
    %846 = vmatprep.mubr.bf16.mxu0 0
    %847 = vmatmul.mubr.bf16.gmra.mrb[0].mxu0 %v809
    %v848 = vpop.f32.mrb[0].mxu0
    %v849 = vadd.f32 %v807, %v848
    %v850 = vpop.f32.mrb[0].mxu0
    %v851 = vpop.f32.mrb[0].mxu0
    %v852 = vadd.f32 %v807, %v851
    %v853 = vpop.f32.mrb[0].mxu0
    %854 = vdwg.mxu0
    %v855 = vsel %vm552, %v849, -inf
    %856 = vmax.xlane.f32.xlu0 %v855
    %v857 = vpop.xlane.xlu0 %856
    %v858 = vsel %vm552, %v852, -inf
    %859 = vmax.xlane.f32.xlu0 %v858
    %v860 = vpop.xlane.xlu0 %859
    %v861 = vsub.f32 %v849, %v857
    %v862 = vsub.f32 %v852, %v860
    %v863 = vmul.f32 %v861, 1.442695
    %v864 = vpow.pop %v863
    %v865 = vmul.f32 %v862, 1.442695
    %v866 = vpow.pop %v865
    %v867 = vsel %vm552, %v864, 0.0
    %868 = vadd.xlane.f32.xlu0 %v867
    %v869 = vpop.xlane.xlu0 %868
    %v870 = vsel %vm552, %v866, 0.0
    %871 = vadd.xlane.f32.xlu0 %v870
    %v872 = vpop.xlane.xlu0 %871
    %v873 = vrcp.pop %v869
    %v874 = vrcp.pop %v872
    %v875 = vmul.f32 %v864, %v873
    %v876 = vmul.f32 %v866, %v874
    %v877 = vpack.c.bf16 %v876, %v875
    %v879 = vsel %vm552, %v877, 0
    %881 = vmatprep.subr.bf16.mxu0 0
    %882 = vmatpush1.bf16.msra.mxu0 %v803
    %883 = vmatprep.subr.bf16.mxu0 0
    %884 = vmatpush1.bf16.msra.mxu0 0
    %885 = vmatprep.subr.bf16.mxu0 0
    %886 = vmatpush1.bf16.msra.mxu0 0
    %887 = vmatprep.subr.bf16.mxu0 0
    %888 = vmatpush1.bf16.msra.mxu0 0
    %889 = vmatprep.subr.bf16.mxu0 0
    %890 = vmatpush1.bf16.msra.mxu0 0
    %891 = vmatprep.subr.bf16.mxu0 0
    %892 = vmatpush1.bf16.msra.mxu0 0
    %893 = vmatprep.subr.bf16.mxu0 0
    %894 = vmatpush1.bf16.msra.mxu0 0
    %895 = vmatprep.subr.bf16.mxu0 0
    %896 = vmatpush1.bf16.msra.mxu0 0
    %897 = vmatprep.subr.bf16.mxu0 0
    %898 = vmatpush1.bf16.msra.mxu0 0
    %899 = vmatprep.subr.bf16.mxu0 0
    %900 = vmatpush1.bf16.msra.mxu0 0
    %901 = vmatprep.subr.bf16.mxu0 0
    %902 = vmatpush1.bf16.msra.mxu0 0
    %903 = vmatprep.subr.bf16.mxu0 0
    %904 = vmatpush1.bf16.msra.mxu0 0
    %905 = vmatprep.subr.bf16.mxu0 0
    %906 = vmatpush1.bf16.msra.mxu0 0
    %907 = vmatprep.subr.bf16.mxu0 0
    %908 = vmatpush1.bf16.msra.mxu0 0
    %909 = vmatprep.subr.bf16.mxu0 0
    %910 = vmatpush1.bf16.msra.mxu0 0
    %911 = vmatprep.subr.bf16.mxu0 0
    %912 = vmatpush1.bf16.msra.mxu0 0
    %913 = vmatprep.mubr.bf16.mxu0 0
    %914 = vmatmul.mubr.bf16.gmra.mrb[0].mxu0 %v879
    %v915 = vpop.f32.mrb[0].mxu0
    %v916 = vadd.f32 0.0, %v915
    %v917 = vpop.f32.mrb[0].mxu0
    %v918 = vpop.f32.mrb[0].mxu0
    %v919 = vadd.f32 0.0, %v918
    %v920 = vpop.f32.mrb[0].mxu0
    %921 = vdwg.mxu0
    %923 = vrot.lane.b32.xlu0 %v801, 112
    %v924 = vpop.permute.xlu0 %923
    %926 = vrot.lane.b32.xlu0 %v802, 112
    %v927 = vpop.permute.xlu0 %926
    %v929 = vsel %vm552, %v924, 0
    %v932 = vsel %vm552, %v927, 0
    %934 = vmatprep.subr.bf16.mxu0 0
    %935 = vmatpush1.bf16.xpose.msra.mxu0 %v932
    %936 = vmatprep.subr.bf16.mxu0 0
    %937 = vmatpush1.bf16.xpose.msra.mxu0 0
    %938 = vmatprep.subr.bf16.mxu0 0
    %939 = vmatpush1.bf16.xpose.msra.mxu0 0
    %940 = vmatprep.subr.bf16.mxu0 0
    %941 = vmatpush1.bf16.xpose.msra.mxu0 0
    %942 = vmatprep.subr.bf16.mxu0 0
    %943 = vmatpush1.bf16.xpose.msra.mxu0 0
    %944 = vmatprep.subr.bf16.mxu0 0
    %945 = vmatpush1.bf16.xpose.msra.mxu0 0
    %946 = vmatprep.subr.bf16.mxu0 0
    %947 = vmatpush1.bf16.xpose.msra.mxu0 0
    %948 = vmatprep.subr.bf16.mxu0 0
    %949 = vmatpush1.bf16.xpose.msra.mxu0 0
    %950 = vmatprep.subr.bf16.mxu0 0
    %951 = vmatpush1.bf16.xpose.msra.mxu0 0
    %952 = vmatprep.subr.bf16.mxu0 0
    %953 = vmatpush1.bf16.xpose.msra.mxu0 0
    %954 = vmatprep.subr.bf16.mxu0 0
    %955 = vmatpush1.bf16.xpose.msra.mxu0 0
    %956 = vmatprep.subr.bf16.mxu0 0
    %957 = vmatpush1.bf16.xpose.msra.mxu0 0
    %958 = vmatprep.subr.bf16.mxu0 0
    %959 = vmatpush1.bf16.xpose.msra.mxu0 0
    %960 = vmatprep.subr.bf16.mxu0 0
    %961 = vmatpush1.bf16.xpose.msra.mxu0 0
    %962 = vmatprep.subr.bf16.mxu0 0
    %963 = vmatpush1.bf16.xpose.msra.mxu0 0
    %964 = vmatprep.subr.bf16.mxu0 0
    %965 = vmatpush1.bf16.xpose.msra.mxu0 0
    %966 = vmatprep.mubr.bf16.mxu0 0
    %967 = vmatmul.mubr.bf16.gmra.mrb[0].mxu0 %v929
    %v968 = vpop.f32.mrb[0].mxu0
    %v969 = vadd.f32 %v807, %v968
    %v970 = vpop.f32.mrb[0].mxu0
    %v971 = vpop.f32.mrb[0].mxu0
    %v972 = vadd.f32 %v807, %v971
    %v973 = vpop.f32.mrb[0].mxu0
    %974 = vdwg.mxu0
    %v975 = vsel %vm552, %v969, -inf
    %976 = vmax.xlane.f32.xlu0 %v975
    %v977 = vpop.xlane.xlu0 %976
    %v978 = vsel %vm552, %v972, -inf
    %979 = vmax.xlane.f32.xlu0 %v978
    %v980 = vpop.xlane.xlu0 %979
    %v981 = vsub.f32 %v969, %v977
    %v982 = vsub.f32 %v972, %v980
    %v983 = vmul.f32 %v981, 1.442695
    %v984 = vpow.pop %v983
    %v985 = vmul.f32 %v982, 1.442695
    %v986 = vpow.pop %v985
    %v987 = vsel %vm552, %v984, 0.0
    %988 = vadd.xlane.f32.xlu0 %v987
    %v989 = vpop.xlane.xlu0 %988
    %v990 = vsel %vm552, %v986, 0.0
    %991 = vadd.xlane.f32.xlu0 %v990
    %v992 = vpop.xlane.xlu0 %991
    %v993 = vrcp.pop %v989
    %v994 = vrcp.pop %v992
    %v995 = vmul.f32 %v984, %v993
    %v996 = vmul.f32 %v986, %v994
    %v997 = vpack.c.bf16 %v996, %v995
    %999 = vrot.lane.b32.xlu0 %v803, 112
    %v1000 = vpop.permute.xlu0 %999
    %v1003 = vsel %vm552, %v997, 0
    %1005 = vmatprep.subr.bf16.mxu0 0
    %1006 = vmatpush1.bf16.msra.mxu0 %v1000
    %1007 = vmatprep.subr.bf16.mxu0 0
    %1008 = vmatpush1.bf16.msra.mxu0 0
    %1009 = vmatprep.subr.bf16.mxu0 0
    %1010 = vmatpush1.bf16.msra.mxu0 0
    %1011 = vmatprep.subr.bf16.mxu0 0
    %1012 = vmatpush1.bf16.msra.mxu0 0
    %1013 = vmatprep.subr.bf16.mxu0 0
    %1014 = vmatpush1.bf16.msra.mxu0 0
    %1015 = vmatprep.subr.bf16.mxu0 0
    %1016 = vmatpush1.bf16.msra.mxu0 0
    %1017 = vmatprep.subr.bf16.mxu0 0
    %1018 = vmatpush1.bf16.msra.mxu0 0
    %1019 = vmatprep.subr.bf16.mxu0 0
    %1020 = vmatpush1.bf16.msra.mxu0 0
    %1021 = vmatprep.subr.bf16.mxu0 0
    %1022 = vmatpush1.bf16.msra.mxu0 0
    %1023 = vmatprep.subr.bf16.mxu0 0
    %1024 = vmatpush1.bf16.msra.mxu0 0
    %1025 = vmatprep.subr.bf16.mxu0 0
    %1026 = vmatpush1.bf16.msra.mxu0 0
    %1027 = vmatprep.subr.bf16.mxu0 0
    %1028 = vmatpush1.bf16.msra.mxu0 0
    %1029 = vmatprep.subr.bf16.mxu0 0
    %1030 = vmatpush1.bf16.msra.mxu0 0
    %1031 = vmatprep.subr.bf16.mxu0 0
    %1032 = vmatpush1.bf16.msra.mxu0 0
    %1033 = vmatprep.subr.bf16.mxu0 0
    %1034 = vmatpush1.bf16.msra.mxu0 0
    %1035 = vmatprep.subr.bf16.mxu0 0
    %1036 = vmatpush1.bf16.msra.mxu0 0
    %1037 = vmatprep.mubr.bf16.mxu0 0
    %1038 = vmatmul.mubr.bf16.gmra.mrb[0].mxu0 %v1003
    %v1039 = vpop.f32.mrb[0].mxu0
    %v1040 = vadd.f32 0.0, %v1039
    %v1041 = vpop.f32.mrb[0].mxu0
    %v1042 = vpop.f32.mrb[0].mxu0
    %v1043 = vadd.f32 0.0, %v1042
    %v1044 = vpop.f32.mrb[0].mxu0
    %1045 = vdwg.mxu0
    %1048 = vrot.lane.b32.xlu0 %v1040, 16
    %v1049 = vpop.permute.xlu0 %1048
    %1050 = vrot.lane.b32.xlu0 %v1043, 16
    %v1051 = vpop.permute.xlu0 %1050
    %v1054 = vsel %vm552, %v916, %v1049
    %v1055 = vsel %vm552, %v919, %v1051
    %v1056 = vpack.c.bf16 %v800, %v799
    %v1057 = vpack.c.bf16 %v1055, %v1054
    %v1058 = vld [vmem:[#allocation14] sm:$0xf]
    %v1059 = vld [vmem:[#allocation14 + $0x4] sm:$0xf]
    %v1060 = vld [vmem:[#allocation14 + $0x8] sm:$0xf]
    %v1061 = vld [vmem:[#allocation14 + $0xc] sm:$0xf]
    %v1062 = vld [vmem:[#allocation16] sm:$0x1]
    %v1064 = vlaneseq
    %v1065 = vshrl.u32 %v1064, 7
    %v1066 = vsub.s32 0, %v1065
    %v1067 = vrot.slane %v1062, %v1066
    %v1073 = vunpack.c.l.b16 %v1058
    %v1074 = vunpack.c.l.b16 %v1059
    %v1075 = vunpack.c.l.b16 %v1060
    %v1076 = vunpack.c.l.b16 %v1061
    %v1077 = vpack.c.b16 %v1074, %v1073
    %v1078 = vpack.c.b16 %v1076, %v1075
    %v1082 = vsel %vm246, %v1056, 0
    %v1085 = vsel %vm246, %v1057, 0
    %1087 = vmatprep.subr.bf16.mxu0 0
    %1088 = vmatpush1.bf16.msra.mxu0 %v1077
    %1089 = vmatprep.subr.bf16.mxu0 0
    %1090 = vmatpush1.bf16.msra.mxu0 %v1078
    %1091 = vmatprep.subr.bf16.mxu0 0
    %1092 = vmatpush1.bf16.msra.mxu0 0
    %1093 = vmatprep.subr.bf16.mxu0 0
    %1094 = vmatpush1.bf16.msra.mxu0 0
    %1095 = vmatprep.subr.bf16.mxu0 0
    %1096 = vmatpush1.bf16.msra.mxu0 0
    %1097 = vmatprep.subr.bf16.mxu0 0
    %1098 = vmatpush1.bf16.msra.mxu0 0
    %1099 = vmatprep.subr.bf16.mxu0 0
    %1100 = vmatpush1.bf16.msra.mxu0 0
    %1101 = vmatprep.subr.bf16.mxu0 0
    %1102 = vmatpush1.bf16.msra.mxu0 0
    %1103 = vmatprep.subr.bf16.mxu0 0
    %1104 = vmatpush1.bf16.msra.mxu0 0
    %1105 = vmatprep.subr.bf16.mxu0 0
    %1106 = vmatpush1.bf16.msra.mxu0 0
    %1107 = vmatprep.subr.bf16.mxu0 0
    %1108 = vmatpush1.bf16.msra.mxu0 0
    %1109 = vmatprep.subr.bf16.mxu0 0
    %1110 = vmatpush1.bf16.msra.mxu0 0
    %1111 = vmatprep.subr.bf16.mxu0 0
    %1112 = vmatpush1.bf16.msra.mxu0 0
    %1113 = vmatprep.subr.bf16.mxu0 0
    %1114 = vmatpush1.bf16.msra.mxu0 0
    %1115 = vmatprep.subr.bf16.mxu0 0
    %1116 = vmatpush1.bf16.msra.mxu0 0
    %1117 = vmatprep.subr.bf16.mxu0 0
    %1118 = vmatpush1.bf16.msra.mxu0 0
    %1119 = vmatprep.mubr.bf16.mxu0 0
    %1120 = vmatmul.mubr.bf16.gmra.mrb[0].mxu0 %v1082
    %v1121 = vpop.f32.mrb[0].mxu0
    %v1122 = vadd.f32 %v1067, %v1121
    %v1123 = vpop.f32.mrb[0].mxu0
    %v1124 = vpop.f32.mrb[0].mxu0
    %v1125 = vadd.f32 %v1067, %v1124
    %v1126 = vpop.f32.mrb[0].mxu0
    %1127 = vmatprep.mubr.bf16.mxu0 0
    %1128 = vmatmul.mubr.bf16.gmra.mrb[0].mxu0 %v1085
    %v1129 = vpop.f32.mrb[0].mxu0
    %v1130 = vadd.f32 %v1067, %v1129
    %v1131 = vpop.f32.mrb[0].mxu0
    %v1132 = vpop.f32.mrb[0].mxu0
    %v1133 = vadd.f32 %v1067, %v1132
    %v1134 = vpop.f32.mrb[0].mxu0
    %1135 = vdwg.mxu0
    %v1136 = vadd.f32 %v316, %v1122
    %v1137 = vadd.f32 %v317, %v1125
    %v1138 = vadd.f32 %v318, %v1130
    %v1139 = vadd.f32 %v319, %v1133
    %v1140 = vld [vmem:[#allocation17] sm:$0x1]
    %v1141 = vld [vmem:[#allocation19] sm:$0x1]
    %v1142 = vsel %vm246, %v1136, 0.0
    %1143 = vadd.xlane.f32.xlu0 %v1142
    %v1144 = vpop.xlane.xlu0 %1143
    %v1145 = vsel %vm246, %v1137, 0.0
    %1146 = vadd.xlane.f32.xlu0 %v1145
    %v1147 = vpop.xlane.xlu0 %1146
    %v1148 = vsel %vm246, %v1138, 0.0
    %1149 = vadd.xlane.f32.xlu0 %v1148
    %v1150 = vpop.xlane.xlu0 %1149
    %v1151 = vsel %vm246, %v1139, 0.0
    %1152 = vadd.xlane.f32.xlu0 %v1151
    %v1153 = vpop.xlane.xlu0 %1152
    %v1154 = vmul.f32 %v1144, %v259
    %v1155 = vmul.f32 %v1147, %v259
    %v1156 = vmul.f32 %v1150, %v259
    %v1157 = vmul.f32 %v1153, %v259
    %v1158 = vsub.f32 %v1136, %v1154
    %v1159 = vsub.f32 %v1137, %v1155
    %v1160 = vsub.f32 %v1138, %v1156
    %v1161 = vsub.f32 %v1139, %v1157
    %v1162 = vmul.f32 %v1158, %v1158
    %v1163 = vmul.f32 %v1159, %v1159
    %v1164 = vmul.f32 %v1160, %v1160
    %v1165 = vmul.f32 %v1161, %v1161
    %v1166 = vsel %vm246, %v1162, 0.0
    %1167 = vadd.xlane.f32.xlu0 %v1166
    %v1168 = vpop.xlane.xlu0 %1167
    %v1169 = vsel %vm246, %v1163, 0.0
    %1170 = vadd.xlane.f32.xlu0 %v1169
    %v1171 = vpop.xlane.xlu0 %1170
    %v1172 = vsel %vm246, %v1164, 0.0
    %1173 = vadd.xlane.f32.xlu0 %v1172
    %v1174 = vpop.xlane.xlu0 %1173
    %v1175 = vsel %vm246, %v1165, 0.0
    %1176 = vadd.xlane.f32.xlu0 %v1175
    %v1177 = vpop.xlane.xlu0 %1176
    %v1178 = vmul.f32 %v1168, %v259
    %v1179 = vmul.f32 %v1171, %v259
    %v1180 = vmul.f32 %v1174, %v259
    %v1181 = vmul.f32 %v1177, %v259
    %v1182 = vadd.f32 %v1178, 1e-12
    %v1183 = vadd.f32 %v1179, 1e-12
    %v1184 = vadd.f32 %v1180, 1e-12
    %v1185 = vadd.f32 %v1181, 1e-12
    %v1186 = vrsqrt.pop %v1182
    %v1187 = vrsqrt.pop %v1183
    %v1188 = vrsqrt.pop %v1184
    %v1189 = vrsqrt.pop %v1185
    %v1190 = vmul.f32 %v1158, %v1186
    %v1191 = vmul.f32 %v1159, %v1187
    %v1192 = vmul.f32 %v1160, %v1188
    %v1193 = vmul.f32 %v1161, %v1189
    %v1195 = vlaneseq
    %v1196 = vshrl.u32 %v1195, 7
    %v1197 = vsub.s32 0, %v1196
    %v1198 = vrot.slane %v1140, %v1197
    %v1200 = vmul.f32 %v1190, %v1198
    %v1201 = vmul.f32 %v1191, %v1198
    %v1202 = vmul.f32 %v1192, %v1198
    %v1203 = vmul.f32 %v1193, %v1198
    %v1205 = vlaneseq
    %v1206 = vshrl.u32 %v1205, 7
    %v1207 = vsub.s32 0, %v1206
    %v1208 = vrot.slane %v1141, %v1207
    %v1210 = vadd.f32 %v1200, %v1208
    %v1211 = vadd.f32 %v1201, %v1208
    %v1212 = vadd.f32 %v1202, %v1208
    %v1213 = vadd.f32 %v1203, %v1208
    %v1214 = vpack.c.bf16 %v1211, %v1210
    %v1215 = vpack.c.bf16 %v1213, %v1212
    %v1216 = vld [vmem:[#allocation20] sm:$0xf]
    %v1217 = vld [vmem:[#allocation20 + $0x4] sm:$0xf]
    %v1218 = vld [vmem:[#allocation20 + $0x8] sm:$0xf]
    %v1219 = vld [vmem:[#allocation20 + $0xc] sm:$0xf]
    %v1220 = vld [vmem:[#allocation22] sm:$0x1]
    %v1222 = vlaneseq
    %v1223 = vshrl.u32 %v1222, 7
    %v1224 = vsub.s32 0, %v1223
    %v1225 = vrot.slane %v1220, %v1224
    %v1231 = vunpack.c.l.b16 %v1216
    %v1232 = vunpack.c.l.b16 %v1217
    %v1233 = vunpack.c.l.b16 %v1218
    %v1234 = vunpack.c.l.b16 %v1219
    %v1235 = vpack.c.b16 %v1232, %v1231
    %v1236 = vpack.c.b16 %v1234, %v1233
    %v1240 = vsel %vm246, %v1214, 0
    %v1243 = vsel %vm246, %v1215, 0
    %1245 = vmatprep.subr.bf16.mxu0 0
    %1246 = vmatpush1.bf16.msra.mxu0 %v1235
    %1247 = vmatprep.subr.bf16.mxu0 0
    %1248 = vmatpush1.bf16.msra.mxu0 %v1236
    %1249 = vmatprep.subr.bf16.mxu0 0
    %1250 = vmatpush1.bf16.msra.mxu0 0
    %1251 = vmatprep.subr.bf16.mxu0 0
    %1252 = vmatpush1.bf16.msra.mxu0 0
    %1253 = vmatprep.subr.bf16.mxu0 0
    %1254 = vmatpush1.bf16.msra.mxu0 0
    %1255 = vmatprep.subr.bf16.mxu0 0
    %1256 = vmatpush1.bf16.msra.mxu0 0
    %1257 = vmatprep.subr.bf16.mxu0 0
    %1258 = vmatpush1.bf16.msra.mxu0 0
    %1259 = vmatprep.subr.bf16.mxu0 0
    %1260 = vmatpush1.bf16.msra.mxu0 0
    %1261 = vmatprep.subr.bf16.mxu0 0
    %1262 = vmatpush1.bf16.msra.mxu0 0
    %1263 = vmatprep.subr.bf16.mxu0 0
    %1264 = vmatpush1.bf16.msra.mxu0 0
    %1265 = vmatprep.subr.bf16.mxu0 0
    %1266 = vmatpush1.bf16.msra.mxu0 0
    %1267 = vmatprep.subr.bf16.mxu0 0
    %1268 = vmatpush1.bf16.msra.mxu0 0
    %1269 = vmatprep.subr.bf16.mxu0 0
    %1270 = vmatpush1.bf16.msra.mxu0 0
    %1271 = vmatprep.subr.bf16.mxu0 0
    %1272 = vmatpush1.bf16.msra.mxu0 0
    %1273 = vmatprep.subr.bf16.mxu0 0
    %1274 = vmatpush1.bf16.msra.mxu0 0
    %1275 = vmatprep.subr.bf16.mxu0 0
    %1276 = vmatpush1.bf16.msra.mxu0 0
    %1277 = vmatprep.mubr.bf16.mxu0 0
    %1278 = vmatmul.mubr.bf16.gmra.mrb[0].mxu0 %v1240
    %v1279 = vpop.f32.mrb[0].mxu0
    %v1280 = vadd.f32 %v1225, %v1279
    %v1281 = vpop.f32.mrb[0].mxu0
    %v1282 = vpop.f32.mrb[0].mxu0
    %v1283 = vadd.f32 %v1225, %v1282
    %v1284 = vpop.f32.mrb[0].mxu0
    %1285 = vmatprep.mubr.bf16.mxu0 0
    %1286 = vmatmul.mubr.bf16.gmra.mrb[0].mxu0 %v1243
    %v1287 = vpop.f32.mrb[0].mxu0
    %v1288 = vadd.f32 %v1225, %v1287
    %v1289 = vpop.f32.mrb[0].mxu0
    %v1290 = vpop.f32.mrb[0].mxu0
    %v1291 = vadd.f32 %v1225, %v1290
    %v1292 = vpop.f32.mrb[0].mxu0
    %1293 = vdwg.mxu0
    %v1294 = vmul.f32 %v1280, 0.5
    %v1295 = vmul.f32 %v1283, 0.5
    %v1296 = vmul.f32 %v1288, 0.5
    %v1297 = vmul.f32 %v1291, 0.5
    %v1298 = vmul.f32 %v1280, 0.044715
    %v1299 = vmul.f32 %v1283, 0.044715
    %v1300 = vmul.f32 %v1288, 0.044715
    %v1301 = vmul.f32 %v1291, 0.044715
    %v1302 = vmul.f32 %v1298, %v1280
    %v1303 = vmul.f32 %v1299, %v1283
    %v1304 = vmul.f32 %v1300, %v1288
    %v1305 = vmul.f32 %v1301, %v1291
    %v1306 = vmul.f32 %v1302, %v1280
    %v1307 = vmul.f32 %v1303, %v1283
    %v1308 = vmul.f32 %v1304, %v1288
    %v1309 = vmul.f32 %v1305, %v1291
    %v1310 = vadd.f32 %v1280, %v1306
    %v1311 = vadd.f32 %v1283, %v1307
    %v1312 = vadd.f32 %v1288, %v1308
    %v1313 = vadd.f32 %v1291, %v1309
    %v1314 = vmul.f32 %v1310, 0.7978846
    %v1315 = vmul.f32 %v1311, 0.7978846
    %v1316 = vmul.f32 %v1312, 0.7978846
    %v1317 = vmul.f32 %v1313, 0.7978846
    %v1318 = vtanh.pop %v1314
    %v1319 = vtanh.pop %v1315
    %v1320 = vtanh.pop %v1316
    %v1321 = vtanh.pop %v1317
    %v1322 = vadd.f32 %v1318, 1.0
    %v1323 = vadd.f32 %v1319, 1.0
    %v1324 = vadd.f32 %v1320, 1.0
    %v1325 = vadd.f32 %v1321, 1.0
    %v1326 = vmul.f32 %v1294, %v1322
    %v1327 = vmul.f32 %v1295, %v1323
    %v1328 = vmul.f32 %v1296, %v1324
    %v1329 = vmul.f32 %v1297, %v1325
    %v1330 = vpack.c.bf16 %v1327, %v1326
    %v1331 = vpack.c.bf16 %v1329, %v1328
    %v1332 = vld [vmem:[%s17] sm:$0xf]
    %v1333 = vld [vmem:[%s17 + $0x4] sm:$0xf]
    %v1334 = vld [vmem:[%s17 + $0x8] sm:$0xf]
    %v1335 = vld [vmem:[%s17 + $0xc] sm:$0xf]
    %v1336 = vld [vmem:[%s17 + $0x10] sm:$0xf]
    %v1337 = vld [vmem:[%s17 + $0x14] sm:$0xf]
    %v1338 = vld [vmem:[%s17 + $0x18] sm:$0xf]
    %v1339 = vld [vmem:[%s17 + $0x1c] sm:$0xf]
    %v1340 = vld [vmem:[%s18] sm:$0x1]
    %v1342 = vlaneseq
    %v1343 = vshrl.u32 %v1342, 7
    %v1344 = vsub.s32 0, %v1343
    %v1345 = vrot.slane %v1340, %v1344
    %v1355 = vunpack.c.l.b16 %v1332
    %v1356 = vunpack.c.l.b16 %v1333
    %v1357 = vunpack.c.l.b16 %v1334
    %v1358 = vunpack.c.l.b16 %v1335
    %v1359 = vunpack.c.l.b16 %v1336
    %v1360 = vunpack.c.l.b16 %v1337
    %v1361 = vunpack.c.l.b16 %v1338
    %v1362 = vunpack.c.l.b16 %v1339
    %v1363 = vpack.c.b16 %v1356, %v1355
    %v1364 = vpack.c.b16 %v1358, %v1357
    %v1365 = vpack.c.b16 %v1360, %v1359
    %v1366 = vpack.c.b16 %v1362, %v1361
    %vm1371 = vcmask 523264
    %v1373 = vsel %vm1371, %v1330, 0
    %v1376 = vsel %vm1371, %v1331, 0
    %1378 = vmatprep.subr.bf16.mxu0 0
    %1379 = vmatpush1.bf16.msra.mxu0 %v1363
    %1380 = vmatprep.subr.bf16.mxu0 0
    %1381 = vmatpush1.bf16.msra.mxu0 %v1364
    %1382 = vmatprep.subr.bf16.mxu0 0
    %1383 = vmatpush1.bf16.msra.mxu0 %v1365
    %1384 = vmatprep.subr.bf16.mxu0 0
    %1385 = vmatpush1.bf16.msra.mxu0 %v1366
    %1386 = vmatprep.subr.bf16.mxu0 0
    %1387 = vmatpush1.bf16.msra.mxu0 0
    %1388 = vmatprep.subr.bf16.mxu0 0
    %1389 = vmatpush1.bf16.msra.mxu0 0
    %1390 = vmatprep.subr.bf16.mxu0 0
    %1391 = vmatpush1.bf16.msra.mxu0 0
    %1392 = vmatprep.subr.bf16.mxu0 0
    %1393 = vmatpush1.bf16.msra.mxu0 0
    %1394 = vmatprep.subr.bf16.mxu0 0
    %1395 = vmatpush1.bf16.msra.mxu0 0
    %1396 = vmatprep.subr.bf16.mxu0 0
    %1397 = vmatpush1.bf16.msra.mxu0 0
    %1398 = vmatprep.subr.bf16.mxu0 0
    %1399 = vmatpush1.bf16.msra.mxu0 0
    %1400 = vmatprep.subr.bf16.mxu0 0
    %1401 = vmatpush1.bf16.msra.mxu0 0
    %1402 = vmatprep.subr.bf16.mxu0 0
    %1403 = vmatpush1.bf16.msra.mxu0 0
    %1404 = vmatprep.subr.bf16.mxu0 0
    %1405 = vmatpush1.bf16.msra.mxu0 0
    %1406 = vmatprep.subr.bf16.mxu0 0
    %1407 = vmatpush1.bf16.msra.mxu0 0
    %1408 = vmatprep.subr.bf16.mxu0 0
    %1409 = vmatpush1.bf16.msra.mxu0 0
    %1410 = vmatprep.mubr.bf16.mxu0 0
    %1411 = vmatmul.mubr.bf16.gmra.mrb[0].mxu0 %v1373
    %v1412 = vpop.f32.mrb[0].mxu0
    %v1413 = vadd.f32 %v1345, %v1412
    %v1414 = vpop.f32.mrb[0].mxu0
    %v1415 = vpop.f32.mrb[0].mxu0
    %v1416 = vadd.f32 %v1345, %v1415
    %v1417 = vpop.f32.mrb[0].mxu0
    %1418 = vmatprep.mubr.bf16.mxu0 0
    %1419 = vmatmul.mubr.bf16.gmra.mrb[0].mxu0 %v1376
    %v1420 = vpop.f32.mrb[0].mxu0
    %v1421 = vadd.f32 %v1345, %v1420
    %v1422 = vpop.f32.mrb[0].mxu0
    %v1423 = vpop.f32.mrb[0].mxu0
    %v1424 = vadd.f32 %v1345, %v1423
    %v1425 = vpop.f32.mrb[0].mxu0
    %1426 = vdwg.mxu0
    %v1427 = vadd.f32 %v1210, %v1413
    %v1428 = vadd.f32 %v1211, %v1416
    %v1429 = vadd.f32 %v1212, %v1421
    %v1430 = vadd.f32 %v1213, %v1424
    %v1431 = vld [vmem:[%s19] sm:$0x1]
    %v1432 = vld [vmem:[%s20] sm:$0x1]
    %v1433 = vsel %vm246, %v1427, 0.0
    %1434 = vadd.xlane.f32.xlu0 %v1433
    %v1435 = vpop.xlane.xlu0 %1434
    %v1436 = vsel %vm246, %v1428, 0.0
    %1437 = vadd.xlane.f32.xlu0 %v1436
    %v1438 = vpop.xlane.xlu0 %1437
    %v1439 = vsel %vm246, %v1429, 0.0
    %1440 = vadd.xlane.f32.xlu0 %v1439
    %v1441 = vpop.xlane.xlu0 %1440
    %v1442 = vsel %vm246, %v1430, 0.0
    %1443 = vadd.xlane.f32.xlu0 %v1442
    %v1444 = vpop.xlane.xlu0 %1443
    %v1445 = vmul.f32 %v1435, %v259
    %v1446 = vmul.f32 %v1438, %v259
    %v1447 = vmul.f32 %v1441, %v259
    %v1448 = vmul.f32 %v1444, %v259
    %v1449 = vsub.f32 %v1427, %v1445
    %v1450 = vsub.f32 %v1428, %v1446
    %v1451 = vsub.f32 %v1429, %v1447
    %v1452 = vsub.f32 %v1430, %v1448
    %v1453 = vmul.f32 %v1449, %v1449
    %v1454 = vmul.f32 %v1450, %v1450
    %v1455 = vmul.f32 %v1451, %v1451
    %v1456 = vmul.f32 %v1452, %v1452
    %v1457 = vsel %vm246, %v1453, 0.0
    %1458 = vadd.xlane.f32.xlu0 %v1457
    %v1459 = vpop.xlane.xlu0 %1458
    %v1460 = vsel %vm246, %v1454, 0.0
    %1461 = vadd.xlane.f32.xlu0 %v1460
    %v1462 = vpop.xlane.xlu0 %1461
    %v1463 = vsel %vm246, %v1455, 0.0
    %1464 = vadd.xlane.f32.xlu0 %v1463
    %v1465 = vpop.xlane.xlu0 %1464
    %v1466 = vsel %vm246, %v1456, 0.0
    %1467 = vadd.xlane.f32.xlu0 %v1466
    %v1468 = vpop.xlane.xlu0 %1467
    %v1469 = vmul.f32 %v1459, %v259
    %v1470 = vmul.f32 %v1462, %v259
    %v1471 = vmul.f32 %v1465, %v259
    %v1472 = vmul.f32 %v1468, %v259
    %v1473 = vadd.f32 %v1469, 1e-12
    %v1474 = vadd.f32 %v1470, 1e-12
    %v1475 = vadd.f32 %v1471, 1e-12
    %v1476 = vadd.f32 %v1472, 1e-12
    %v1477 = vrsqrt.pop %v1473
    %v1478 = vrsqrt.pop %v1474
    %v1479 = vrsqrt.pop %v1475
    %v1480 = vrsqrt.pop %v1476
    %v1481 = vmul.f32 %v1449, %v1477
    %v1482 = vmul.f32 %v1450, %v1478
    %v1483 = vmul.f32 %v1451, %v1479
    %v1484 = vmul.f32 %v1452, %v1480
    %v1486 = vlaneseq
    %v1487 = vshrl.u32 %v1486, 7
    %v1488 = vsub.s32 0, %v1487
    %v1489 = vrot.slane %v1431, %v1488
    %v1491 = vmul.f32 %v1481, %v1489
    %v1492 = vmul.f32 %v1482, %v1489
    %v1493 = vmul.f32 %v1483, %v1489
    %v1494 = vmul.f32 %v1484, %v1489
    %v1496 = vlaneseq
    %v1497 = vshrl.u32 %v1496, 7
    %v1498 = vsub.s32 0, %v1497
    %v1499 = vrot.slane %v1432, %v1498
    %v1501 = vadd.f32 %v1491, %v1499
    %v1502 = vadd.f32 %v1492, %v1499
    %v1503 = vadd.f32 %v1493, %v1499
    %v1504 = vadd.f32 %v1494, %v1499
    %v1505 = vpack.c.bf16 %v1502, %v1501
    %v1506 = vpack.c.bf16 %v1504, %v1503
    %s1507 = scalar_lea.vmem %s5, 16
    %v1508 = vld [vmem:[%s1507] sm:$0xf]
    %v1509 = vld [vmem:[%s1507 + $0x4] sm:$0xf]
    %v1510 = vld [vmem:[%s1507 + $0x8] sm:$0xf]
    %v1511 = vld [vmem:[%s1507 + $0xc] sm:$0xf]
    %s1512 = scalar_lea.vmem [#allocation10], 1
    %v1513 = vld [vmem:[%s1512] sm:$0x1]
    %v1515 = vlaneseq
    %v1516 = vshrl.u32 %v1515, 7
    %v1517 = vsub.s32 0, %v1516
    %v1518 = vrot.slane %v1513, %v1517
    %v1524 = vunpack.c.l.b16 %v1508
    %v1525 = vunpack.c.l.b16 %v1509
    %v1526 = vunpack.c.l.b16 %v1510
    %v1527 = vunpack.c.l.b16 %v1511
    %v1528 = vpack.c.b16 %v1525, %v1524
    %v1529 = vpack.c.b16 %v1527, %v1526
    %v1533 = vsel %vm246, %v1505, 0
    %v1536 = vsel %vm246, %v1506, 0
    %1538 = vmatprep.subr.bf16.mxu0 0
    %1539 = vmatpush1.bf16.msra.mxu0 %v1528
    %1540 = vmatprep.subr.bf16.mxu0 0
    %1541 = vmatpush1.bf16.msra.mxu0 %v1529
    %1542 = vmatprep.subr.bf16.mxu0 0
    %1543 = vmatpush1.bf16.msra.mxu0 0
    %1544 = vmatprep.subr.bf16.mxu0 0
    %1545 = vmatpush1.bf16.msra.mxu0 0
    %1546 = vmatprep.subr.bf16.mxu0 0
    %1547 = vmatpush1.bf16.msra.mxu0 0
    %1548 = vmatprep.subr.bf16.mxu0 0
    %1549 = vmatpush1.bf16.msra.mxu0 0
    %1550 = vmatprep.subr.bf16.mxu0 0
    %1551 = vmatpush1.bf16.msra.mxu0 0
    %1552 = vmatprep.subr.bf16.mxu0 0
    %1553 = vmatpush1.bf16.msra.mxu0 0
    %1554 = vmatprep.subr.bf16.mxu0 0
    %1555 = vmatpush1.bf16.msra.mxu0 0
    %1556 = vmatprep.subr.bf16.mxu0 0
    %1557 = vmatpush1.bf16.msra.mxu0 0
    %1558 = vmatprep.subr.bf16.mxu0 0
    %1559 = vmatpush1.bf16.msra.mxu0 0
    %1560 = vmatprep.subr.bf16.mxu0 0
    %1561 = vmatpush1.bf16.msra.mxu0 0
    %1562 = vmatprep.subr.bf16.mxu0 0
    %1563 = vmatpush1.bf16.msra.mxu0 0
    %1564 = vmatprep.subr.bf16.mxu0 0
    %1565 = vmatpush1.bf16.msra.mxu0 0
    %1566 = vmatprep.subr.bf16.mxu0 0
    %1567 = vmatpush1.bf16.msra.mxu0 0
    %1568 = vmatprep.subr.bf16.mxu0 0
    %1569 = vmatpush1.bf16.msra.mxu0 0
    %1570 = vmatprep.mubr.bf16.mxu0 0
    %1571 = vmatmul.mubr.bf16.gmra.mrb[0].mxu0 %v1533
    %v1572 = vpop.f32.mrb[0].mxu0
    %v1573 = vadd.f32 %v1518, %v1572
    %v1574 = vpop.f32.mrb[0].mxu0
    %v1575 = vpop.f32.mrb[0].mxu0
    %v1576 = vadd.f32 %v1518, %v1575
    %v1577 = vpop.f32.mrb[0].mxu0
    %1578 = vmatprep.mubr.bf16.mxu0 0
    %1579 = vmatmul.mubr.bf16.gmra.mrb[0].mxu0 %v1536
    %v1580 = vpop.f32.mrb[0].mxu0
    %v1581 = vadd.f32 %v1518, %v1580
    %v1582 = vpop.f32.mrb[0].mxu0
    %v1583 = vpop.f32.mrb[0].mxu0
    %v1584 = vadd.f32 %v1518, %v1583
    %v1585 = vpop.f32.mrb[0].mxu0
    %1586 = vdwg.mxu0
    %s1587 = scalar_lea.vmem %s7, 16
    %v1588 = vld [vmem:[%s1587] sm:$0xf]
    %v1589 = vld [vmem:[%s1587 + $0x4] sm:$0xf]
    %v1590 = vld [vmem:[%s1587 + $0x8] sm:$0xf]
    %v1591 = vld [vmem:[%s1587 + $0xc] sm:$0xf]
    %s1592 = scalar_lea.vmem [#allocation11], 1
    %v1593 = vld [vmem:[%s1592] sm:$0x1]
    %v1595 = vlaneseq
    %v1596 = vshrl.u32 %v1595, 7
    %v1597 = vsub.s32 0, %v1596
    %v1598 = vrot.slane %v1593, %v1597
    %v1604 = vunpack.c.l.b16 %v1588
    %v1605 = vunpack.c.l.b16 %v1589
    %v1606 = vunpack.c.l.b16 %v1590
    %v1607 = vunpack.c.l.b16 %v1591
    %v1608 = vpack.c.b16 %v1605, %v1604
    %v1609 = vpack.c.b16 %v1607, %v1606
    %1612 = vmatprep.subr.bf16.mxu0 0
    %1613 = vmatpush1.bf16.msra.mxu0 %v1608
    %1614 = vmatprep.subr.bf16.mxu0 0
    %1615 = vmatpush1.bf16.msra.mxu0 %v1609
    %1616 = vmatprep.subr.bf16.mxu0 0
    %1617 = vmatpush1.bf16.msra.mxu0 0
    %1618 = vmatprep.subr.bf16.mxu0 0
    %1619 = vmatpush1.bf16.msra.mxu0 0
    %1620 = vmatprep.subr.bf16.mxu0 0
    %1621 = vmatpush1.bf16.msra.mxu0 0
    %1622 = vmatprep.subr.bf16.mxu0 0
    %1623 = vmatpush1.bf16.msra.mxu0 0
    %1624 = vmatprep.subr.bf16.mxu0 0
    %1625 = vmatpush1.bf16.msra.mxu0 0
    %1626 = vmatprep.subr.bf16.mxu0 0
    %1627 = vmatpush1.bf16.msra.mxu0 0
    %1628 = vmatprep.subr.bf16.mxu0 0
    %1629 = vmatpush1.bf16.msra.mxu0 0
    %1630 = vmatprep.subr.bf16.mxu0 0
    %1631 = vmatpush1.bf16.msra.mxu0 0
    %1632 = vmatprep.subr.bf16.mxu0 0
    %1633 = vmatpush1.bf16.msra.mxu0 0
    %1634 = vmatprep.subr.bf16.mxu0 0
    %1635 = vmatpush1.bf16.msra.mxu0 0
    %1636 = vmatprep.subr.bf16.mxu0 0
    %1637 = vmatpush1.bf16.msra.mxu0 0
    %1638 = vmatprep.subr.bf16.mxu0 0
    %1639 = vmatpush1.bf16.msra.mxu0 0
    %1640 = vmatprep.subr.bf16.mxu0 0
    %1641 = vmatpush1.bf16.msra.mxu0 0
    %1642 = vmatprep.subr.bf16.mxu0 0
    %1643 = vmatpush1.bf16.msra.mxu0 0
    %1644 = vmatprep.mubr.bf16.mxu0 0
    %1645 = vmatmul.mubr.bf16.gmra.mrb[0].mxu0 %v1533
    %v1646 = vpop.f32.mrb[0].mxu0
    %v1647 = vadd.f32 %v1598, %v1646
    %v1648 = vpop.f32.mrb[0].mxu0
    %v1649 = vpop.f32.mrb[0].mxu0
    %v1650 = vadd.f32 %v1598, %v1649
    %v1651 = vpop.f32.mrb[0].mxu0
    %1652 = vmatprep.mubr.bf16.mxu0 0
    %1653 = vmatmul.mubr.bf16.gmra.mrb[0].mxu0 %v1536
    %v1654 = vpop.f32.mrb[0].mxu0
    %v1655 = vadd.f32 %v1598, %v1654
    %v1656 = vpop.f32.mrb[0].mxu0
    %v1657 = vpop.f32.mrb[0].mxu0
    %v1658 = vadd.f32 %v1598, %v1657
    %v1659 = vpop.f32.mrb[0].mxu0
    %1660 = vdwg.mxu0
    %s1661 = scalar_lea.vmem %s9, 16
    %v1662 = vld [vmem:[%s1661] sm:$0xf]
    %v1663 = vld [vmem:[%s1661 + $0x4] sm:$0xf]
    %v1664 = vld [vmem:[%s1661 + $0x8] sm:$0xf]
    %v1665 = vld [vmem:[%s1661 + $0xc] sm:$0xf]
    %s1666 = scalar_lea.vmem [#allocation13], 1
    %v1667 = vld [vmem:[%s1666] sm:$0x1]
    %v1669 = vlaneseq
    %v1670 = vshrl.u32 %v1669, 7
    %v1671 = vsub.s32 0, %v1670
    %v1672 = vrot.slane %v1667, %v1671
    %v1678 = vunpack.c.l.b16 %v1662
    %v1679 = vunpack.c.l.b16 %v1663
    %v1680 = vunpack.c.l.b16 %v1664
    %v1681 = vunpack.c.l.b16 %v1665
    %v1682 = vpack.c.b16 %v1679, %v1678
    %v1683 = vpack.c.b16 %v1681, %v1680
    %1686 = vmatprep.subr.bf16.mxu0 0
    %1687 = vmatpush1.bf16.msra.mxu0 %v1682
    %1688 = vmatprep.subr.bf16.mxu0 0
    %1689 = vmatpush1.bf16.msra.mxu0 %v1683
    %1690 = vmatprep.subr.bf16.mxu0 0
    %1691 = vmatpush1.bf16.msra.mxu0 0
    %1692 = vmatprep.subr.bf16.mxu0 0
    %1693 = vmatpush1.bf16.msra.mxu0 0
    %1694 = vmatprep.subr.bf16.mxu0 0
    %1695 = vmatpush1.bf16.msra.mxu0 0
    %1696 = vmatprep.subr.bf16.mxu0 0
    %1697 = vmatpush1.bf16.msra.mxu0 0
    %1698 = vmatprep.subr.bf16.mxu0 0
    %1699 = vmatpush1.bf16.msra.mxu0 0
    %1700 = vmatprep.subr.bf16.mxu0 0
    %1701 = vmatpush1.bf16.msra.mxu0 0
    %1702 = vmatprep.subr.bf16.mxu0 0
    %1703 = vmatpush1.bf16.msra.mxu0 0
    %1704 = vmatprep.subr.bf16.mxu0 0
    %1705 = vmatpush1.bf16.msra.mxu0 0
    %1706 = vmatprep.subr.bf16.mxu0 0
    %1707 = vmatpush1.bf16.msra.mxu0 0
    %1708 = vmatprep.subr.bf16.mxu0 0
    %1709 = vmatpush1.bf16.msra.mxu0 0
    %1710 = vmatprep.subr.bf16.mxu0 0
    %1711 = vmatpush1.bf16.msra.mxu0 0
    %1712 = vmatprep.subr.bf16.mxu0 0
    %1713 = vmatpush1.bf16.msra.mxu0 0
    %1714 = vmatprep.subr.bf16.mxu0 0
    %1715 = vmatpush1.bf16.msra.mxu0 0
    %1716 = vmatprep.subr.bf16.mxu0 0
    %1717 = vmatpush1.bf16.msra.mxu0 0
    %1718 = vmatprep.mubr.bf16.mxu0 0
    %1719 = vmatmul.mubr.bf16.gmra.mrb[0].mxu0 %v1533
    %v1720 = vpop.f32.mrb[0].mxu0
    %v1721 = vadd.f32 %v1672, %v1720
    %v1722 = vpop.f32.mrb[0].mxu0
    %v1723 = vpop.f32.mrb[0].mxu0
    %v1724 = vadd.f32 %v1672, %v1723
    %v1725 = vpop.f32.mrb[0].mxu0
    %1726 = vmatprep.mubr.bf16.mxu0 0
    %1727 = vmatmul.mubr.bf16.gmra.mrb[0].mxu0 %v1536
    %v1728 = vpop.f32.mrb[0].mxu0
    %v1729 = vadd.f32 %v1672, %v1728
    %v1730 = vpop.f32.mrb[0].mxu0
    %v1731 = vpop.f32.mrb[0].mxu0
    %v1732 = vadd.f32 %v1672, %v1731
    %v1733 = vpop.f32.mrb[0].mxu0
    %1734 = vdwg.mxu0
    %v1735 = vpack.c.bf16 %v1576, %v1573
    %v1736 = vpack.c.bf16 %v1650, %v1647
    %v1737 = vpack.c.bf16 %v1724, %v1721
    %v1739 = vsel %vm552, %v1735, 0
    %v1742 = vsel %vm552, %v1736, 0
    %1744 = vmatprep.subr.bf16.mxu0 0
    %1745 = vmatpush1.bf16.xpose.msra.mxu0 %v1742
    %1746 = vmatprep.subr.bf16.mxu0 0
    %1747 = vmatpush1.bf16.xpose.msra.mxu0 0
    %1748 = vmatprep.subr.bf16.mxu0 0
    %1749 = vmatpush1.bf16.xpose.msra.mxu0 0
    %1750 = vmatprep.subr.bf16.mxu0 0
    %1751 = vmatpush1.bf16.xpose.msra.mxu0 0
    %1752 = vmatprep.subr.bf16.mxu0 0
    %1753 = vmatpush1.bf16.xpose.msra.mxu0 0
    %1754 = vmatprep.subr.bf16.mxu0 0
    %1755 = vmatpush1.bf16.xpose.msra.mxu0 0
    %1756 = vmatprep.subr.bf16.mxu0 0
    %1757 = vmatpush1.bf16.xpose.msra.mxu0 0
    %1758 = vmatprep.subr.bf16.mxu0 0
    %1759 = vmatpush1.bf16.xpose.msra.mxu0 0
    %1760 = vmatprep.subr.bf16.mxu0 0
    %1761 = vmatpush1.bf16.xpose.msra.mxu0 0
    %1762 = vmatprep.subr.bf16.mxu0 0
    %1763 = vmatpush1.bf16.xpose.msra.mxu0 0
    %1764 = vmatprep.subr.bf16.mxu0 0
    %1765 = vmatpush1.bf16.xpose.msra.mxu0 0
    %1766 = vmatprep.subr.bf16.mxu0 0
    %1767 = vmatpush1.bf16.xpose.msra.mxu0 0
    %1768 = vmatprep.subr.bf16.mxu0 0
    %1769 = vmatpush1.bf16.xpose.msra.mxu0 0
    %1770 = vmatprep.subr.bf16.mxu0 0
    %1771 = vmatpush1.bf16.xpose.msra.mxu0 0
    %1772 = vmatprep.subr.bf16.mxu0 0
    %1773 = vmatpush1.bf16.xpose.msra.mxu0 0
    %1774 = vmatprep.subr.bf16.mxu0 0
    %1775 = vmatpush1.bf16.xpose.msra.mxu0 0
    %1776 = vmatprep.mubr.bf16.mxu0 0
    %1777 = vmatmul.mubr.bf16.gmra.mrb[0].mxu0 %v1739
    %v1778 = vpop.f32.mrb[0].mxu0
    %v1779 = vadd.f32 %v551, %v1778
    %v1780 = vpop.f32.mrb[0].mxu0
    %v1781 = vpop.f32.mrb[0].mxu0
    %v1782 = vadd.f32 %v551, %v1781
    %v1783 = vpop.f32.mrb[0].mxu0
    %1784 = vdwg.mxu0
    %v1785 = vsel %vm552, %v1779, -inf
    %1786 = vmax.xlane.f32.xlu0 %v1785
    %v1787 = vpop.xlane.xlu0 %1786
    %v1788 = vsel %vm552, %v1782, -inf
    %1789 = vmax.xlane.f32.xlu0 %v1788
    %v1790 = vpop.xlane.xlu0 %1789
    %v1791 = vsub.f32 %v1779, %v1787
    %v1792 = vsub.f32 %v1782, %v1790
    %v1793 = vmul.f32 %v1791, 1.442695
    %v1794 = vpow.pop %v1793
    %v1795 = vmul.f32 %v1792, 1.442695
    %v1796 = vpow.pop %v1795
    %v1797 = vsel %vm552, %v1794, 0.0
    %1798 = vadd.xlane.f32.xlu0 %v1797
    %v1799 = vpop.xlane.xlu0 %1798
    %v1800 = vsel %vm552, %v1796, 0.0
    %1801 = vadd.xlane.f32.xlu0 %v1800
    %v1802 = vpop.xlane.xlu0 %1801
    %v1803 = vrcp.pop %v1799
    %v1804 = vrcp.pop %v1802
    %v1805 = vmul.f32 %v1794, %v1803
    %v1806 = vmul.f32 %v1796, %v1804
    %v1807 = vpack.c.bf16 %v1806, %v1805
    %v1809 = vsel %vm552, %v1807, 0
    %1811 = vmatprep.subr.bf16.mxu0 0
    %1812 = vmatpush1.bf16.msra.mxu0 %v1737
    %1813 = vmatprep.subr.bf16.mxu0 0
    %1814 = vmatpush1.bf16.msra.mxu0 0
    %1815 = vmatprep.subr.bf16.mxu0 0
    %1816 = vmatpush1.bf16.msra.mxu0 0
    %1817 = vmatprep.subr.bf16.mxu0 0
    %1818 = vmatpush1.bf16.msra.mxu0 0
    %1819 = vmatprep.subr.bf16.mxu0 0
    %1820 = vmatpush1.bf16.msra.mxu0 0
    %1821 = vmatprep.subr.bf16.mxu0 0
    %1822 = vmatpush1.bf16.msra.mxu0 0
    %1823 = vmatprep.subr.bf16.mxu0 0
    %1824 = vmatpush1.bf16.msra.mxu0 0
    %1825 = vmatprep.subr.bf16.mxu0 0
    %1826 = vmatpush1.bf16.msra.mxu0 0
    %1827 = vmatprep.subr.bf16.mxu0 0
    %1828 = vmatpush1.bf16.msra.mxu0 0
    %1829 = vmatprep.subr.bf16.mxu0 0
    %1830 = vmatpush1.bf16.msra.mxu0 0
    %1831 = vmatprep.subr.bf16.mxu0 0
    %1832 = vmatpush1.bf16.msra.mxu0 0
    %1833 = vmatprep.subr.bf16.mxu0 0
    %1834 = vmatpush1.bf16.msra.mxu0 0
    %1835 = vmatprep.subr.bf16.mxu0 0
    %1836 = vmatpush1.bf16.msra.mxu0 0
    %1837 = vmatprep.subr.bf16.mxu0 0
    %1838 = vmatpush1.bf16.msra.mxu0 0
    %1839 = vmatprep.subr.bf16.mxu0 0
    %1840 = vmatpush1.bf16.msra.mxu0 0
    %1841 = vmatprep.subr.bf16.mxu0 0
    %1842 = vmatpush1.bf16.msra.mxu0 0
    %1843 = vmatprep.mubr.bf16.mxu0 0
    %1844 = vmatmul.mubr.bf16.gmra.mrb[0].mxu0 %v1809
    %v1845 = vpop.f32.mrb[0].mxu0
    %v1846 = vadd.f32 0.0, %v1845
    %v1847 = vpop.f32.mrb[0].mxu0
    %v1848 = vpop.f32.mrb[0].mxu0
    %v1849 = vadd.f32 0.0, %v1848
    %v1850 = vpop.f32.mrb[0].mxu0
    %1851 = vdwg.mxu0
    %1853 = vrot.lane.b32.xlu0 %v1735, 112
    %v1854 = vpop.permute.xlu0 %1853
    %1856 = vrot.lane.b32.xlu0 %v1736, 112
    %v1857 = vpop.permute.xlu0 %1856
    %v1859 = vsel %vm552, %v1854, 0
    %v1862 = vsel %vm552, %v1857, 0
    %1864 = vmatprep.subr.bf16.mxu0 0
    %1865 = vmatpush1.bf16.xpose.msra.mxu0 %v1862
    %1866 = vmatprep.subr.bf16.mxu0 0
    %1867 = vmatpush1.bf16.xpose.msra.mxu0 0
    %1868 = vmatprep.subr.bf16.mxu0 0
    %1869 = vmatpush1.bf16.xpose.msra.mxu0 0
    %1870 = vmatprep.subr.bf16.mxu0 0
    %1871 = vmatpush1.bf16.xpose.msra.mxu0 0
    %1872 = vmatprep.subr.bf16.mxu0 0
    %1873 = vmatpush1.bf16.xpose.msra.mxu0 0
    %1874 = vmatprep.subr.bf16.mxu0 0
    %1875 = vmatpush1.bf16.xpose.msra.mxu0 0
    %1876 = vmatprep.subr.bf16.mxu0 0
    %1877 = vmatpush1.bf16.xpose.msra.mxu0 0
    %1878 = vmatprep.subr.bf16.mxu0 0
    %1879 = vmatpush1.bf16.xpose.msra.mxu0 0
    %1880 = vmatprep.subr.bf16.mxu0 0
    %1881 = vmatpush1.bf16.xpose.msra.mxu0 0
    %1882 = vmatprep.subr.bf16.mxu0 0
    %1883 = vmatpush1.bf16.xpose.msra.mxu0 0
    %1884 = vmatprep.subr.bf16.mxu0 0
    %1885 = vmatpush1.bf16.xpose.msra.mxu0 0
    %1886 = vmatprep.subr.bf16.mxu0 0
    %1887 = vmatpush1.bf16.xpose.msra.mxu0 0
    %1888 = vmatprep.subr.bf16.mxu0 0
    %1889 = vmatpush1.bf16.xpose.msra.mxu0 0
    %1890 = vmatprep.subr.bf16.mxu0 0
    %1891 = vmatpush1.bf16.xpose.msra.mxu0 0
    %1892 = vmatprep.subr.bf16.mxu0 0
    %1893 = vmatpush1.bf16.xpose.msra.mxu0 0
    %1894 = vmatprep.subr.bf16.mxu0 0
    %1895 = vmatpush1.bf16.xpose.msra.mxu0 0
    %1896 = vmatprep.mubr.bf16.mxu0 0
    %1897 = vmatmul.mubr.bf16.gmra.mrb[0].mxu0 %v1859
    %v1898 = vpop.f32.mrb[0].mxu0
    %v1899 = vadd.f32 %v551, %v1898
    %v1900 = vpop.f32.mrb[0].mxu0
    %v1901 = vpop.f32.mrb[0].mxu0
    %v1902 = vadd.f32 %v551, %v1901
    %v1903 = vpop.f32.mrb[0].mxu0
    %1904 = vdwg.mxu0
    %v1905 = vsel %vm552, %v1899, -inf
    %1906 = vmax.xlane.f32.xlu0 %v1905
    %v1907 = vpop.xlane.xlu0 %1906
    %v1908 = vsel %vm552, %v1902, -inf
    %1909 = vmax.xlane.f32.xlu0 %v1908
    %v1910 = vpop.xlane.xlu0 %1909
    %v1911 = vsub.f32 %v1899, %v1907
    %v1912 = vsub.f32 %v1902, %v1910
    %v1913 = vmul.f32 %v1911, 1.442695
    %v1914 = vpow.pop %v1913
    %v1915 = vmul.f32 %v1912, 1.442695
    %v1916 = vpow.pop %v1915
    %v1917 = vsel %vm552, %v1914, 0.0
    %1918 = vadd.xlane.f32.xlu0 %v1917
    %v1919 = vpop.xlane.xlu0 %1918
    %v1920 = vsel %vm552, %v1916, 0.0
    %1921 = vadd.xlane.f32.xlu0 %v1920
    %v1922 = vpop.xlane.xlu0 %1921
    %v1923 = vrcp.pop %v1919
    %v1924 = vrcp.pop %v1922
    %v1925 = vmul.f32 %v1914, %v1923
    %v1926 = vmul.f32 %v1916, %v1924
    %v1927 = vpack.c.bf16 %v1926, %v1925
    %1929 = vrot.lane.b32.xlu0 %v1737, 112
    %v1930 = vpop.permute.xlu0 %1929
    %v1933 = vsel %vm552, %v1927, 0
    %1935 = vmatprep.subr.bf16.mxu0 0
    %1936 = vmatpush1.bf16.msra.mxu0 %v1930
    %1937 = vmatprep.subr.bf16.mxu0 0
    %1938 = vmatpush1.bf16.msra.mxu0 0
    %1939 = vmatprep.subr.bf16.mxu0 0
    %1940 = vmatpush1.bf16.msra.mxu0 0
    %1941 = vmatprep.subr.bf16.mxu0 0
    %1942 = vmatpush1.bf16.msra.mxu0 0
    %1943 = vmatprep.subr.bf16.mxu0 0
    %1944 = vmatpush1.bf16.msra.mxu0 0
    %1945 = vmatprep.subr.bf16.mxu0 0
    %1946 = vmatpush1.bf16.msra.mxu0 0
    %1947 = vmatprep.subr.bf16.mxu0 0
    %1948 = vmatpush1.bf16.msra.mxu0 0
    %1949 = vmatprep.subr.bf16.mxu0 0
    %1950 = vmatpush1.bf16.msra.mxu0 0
    %1951 = vmatprep.subr.bf16.mxu0 0
    %1952 = vmatpush1.bf16.msra.mxu0 0
    %1953 = vmatprep.subr.bf16.mxu0 0
    %1954 = vmatpush1.bf16.msra.mxu0 0
    %1955 = vmatprep.subr.bf16.mxu0 0
    %1956 = vmatpush1.bf16.msra.mxu0 0
    %1957 = vmatprep.subr.bf16.mxu0 0
    %1958 = vmatpush1.bf16.msra.mxu0 0
    %1959 = vmatprep.subr.bf16.mxu0 0
    %1960 = vmatpush1.bf16.msra.mxu0 0
    %1961 = vmatprep.subr.bf16.mxu0 0
    %1962 = vmatpush1.bf16.msra.mxu0 0
    %1963 = vmatprep.subr.bf16.mxu0 0
    %1964 = vmatpush1.bf16.msra.mxu0 0
    %1965 = vmatprep.subr.bf16.mxu0 0
    %1966 = vmatpush1.bf16.msra.mxu0 0
    %1967 = vmatprep.mubr.bf16.mxu0 0
    %1968 = vmatmul.mubr.bf16.gmra.mrb[0].mxu0 %v1933
    %v1969 = vpop.f32.mrb[0].mxu0
    %v1970 = vadd.f32 0.0, %v1969
    %v1971 = vpop.f32.mrb[0].mxu0
    %v1972 = vpop.f32.mrb[0].mxu0
    %v1973 = vadd.f32 0.0, %v1972
    %v1974 = vpop.f32.mrb[0].mxu0
    %1975 = vdwg.mxu0
    %1978 = vrot.lane.b32.xlu0 %v1970, 16
    %v1979 = vpop.permute.xlu0 %1978
    %1980 = vrot.lane.b32.xlu0 %v1973, 16
    %v1981 = vpop.permute.xlu0 %1980
    %v1984 = vsel %vm552, %v1846, %v1979
    %v1985 = vsel %vm552, %v1849, %v1981
    %v1986 = vpack.c.bf16 %v1584, %v1581
    %v1987 = vpack.c.bf16 %v1658, %v1655
    %v1988 = vpack.c.bf16 %v1732, %v1729
    %v1990 = vsel %vm552, %v1986, 0
    %v1993 = vsel %vm552, %v1987, 0
    %1995 = vmatprep.subr.bf16.mxu0 0
    %1996 = vmatpush1.bf16.xpose.msra.mxu0 %v1993
    %1997 = vmatprep.subr.bf16.mxu0 0
    %1998 = vmatpush1.bf16.xpose.msra.mxu0 0
    %1999 = vmatprep.subr.bf16.mxu0 0
    %2000 = vmatpush1.bf16.xpose.msra.mxu0 0
    %2001 = vmatprep.subr.bf16.mxu0 0
    %2002 = vmatpush1.bf16.xpose.msra.mxu0 0
    %2003 = vmatprep.subr.bf16.mxu0 0
    %2004 = vmatpush1.bf16.xpose.msra.mxu0 0
    %2005 = vmatprep.subr.bf16.mxu0 0
    %2006 = vmatpush1.bf16.xpose.msra.mxu0 0
    %2007 = vmatprep.subr.bf16.mxu0 0
    %2008 = vmatpush1.bf16.xpose.msra.mxu0 0
    %2009 = vmatprep.subr.bf16.mxu0 0
    %2010 = vmatpush1.bf16.xpose.msra.mxu0 0
    %2011 = vmatprep.subr.bf16.mxu0 0
    %2012 = vmatpush1.bf16.xpose.msra.mxu0 0
    %2013 = vmatprep.subr.bf16.mxu0 0
    %2014 = vmatpush1.bf16.xpose.msra.mxu0 0
    %2015 = vmatprep.subr.bf16.mxu0 0
    %2016 = vmatpush1.bf16.xpose.msra.mxu0 0
    %2017 = vmatprep.subr.bf16.mxu0 0
    %2018 = vmatpush1.bf16.xpose.msra.mxu0 0
    %2019 = vmatprep.subr.bf16.mxu0 0
    %2020 = vmatpush1.bf16.xpose.msra.mxu0 0
    %2021 = vmatprep.subr.bf16.mxu0 0
    %2022 = vmatpush1.bf16.xpose.msra.mxu0 0
    %2023 = vmatprep.subr.bf16.mxu0 0
    %2024 = vmatpush1.bf16.xpose.msra.mxu0 0
    %2025 = vmatprep.subr.bf16.mxu0 0
    %2026 = vmatpush1.bf16.xpose.msra.mxu0 0
    %2027 = vmatprep.mubr.bf16.mxu0 0
    %2028 = vmatmul.mubr.bf16.gmra.mrb[0].mxu0 %v1990
    %v2029 = vpop.f32.mrb[0].mxu0
    %v2030 = vadd.f32 %v807, %v2029
    %v2031 = vpop.f32.mrb[0].mxu0
    %v2032 = vpop.f32.mrb[0].mxu0
    %v2033 = vadd.f32 %v807, %v2032
    %v2034 = vpop.f32.mrb[0].mxu0
    %2035 = vdwg.mxu0
    %v2036 = vsel %vm552, %v2030, -inf
    %2037 = vmax.xlane.f32.xlu0 %v2036
    %v2038 = vpop.xlane.xlu0 %2037
    %v2039 = vsel %vm552, %v2033, -inf
    %2040 = vmax.xlane.f32.xlu0 %v2039
    %v2041 = vpop.xlane.xlu0 %2040
    %v2042 = vsub.f32 %v2030, %v2038
    %v2043 = vsub.f32 %v2033, %v2041
    %v2044 = vmul.f32 %v2042, 1.442695
    %v2045 = vpow.pop %v2044
    %v2046 = vmul.f32 %v2043, 1.442695
    %v2047 = vpow.pop %v2046
    %v2048 = vsel %vm552, %v2045, 0.0
    %2049 = vadd.xlane.f32.xlu0 %v2048
    %v2050 = vpop.xlane.xlu0 %2049
    %v2051 = vsel %vm552, %v2047, 0.0
    %2052 = vadd.xlane.f32.xlu0 %v2051
    %v2053 = vpop.xlane.xlu0 %2052
    %v2054 = vrcp.pop %v2050
    %v2055 = vrcp.pop %v2053
    %v2056 = vmul.f32 %v2045, %v2054
    %v2057 = vmul.f32 %v2047, %v2055
    %v2058 = vpack.c.bf16 %v2057, %v2056
    %v2060 = vsel %vm552, %v2058, 0
    %2062 = vmatprep.subr.bf16.mxu0 0
    %2063 = vmatpush1.bf16.msra.mxu0 %v1988
    %2064 = vmatprep.subr.bf16.mxu0 0
    %2065 = vmatpush1.bf16.msra.mxu0 0
    %2066 = vmatprep.subr.bf16.mxu0 0
    %2067 = vmatpush1.bf16.msra.mxu0 0
    %2068 = vmatprep.subr.bf16.mxu0 0
    %2069 = vmatpush1.bf16.msra.mxu0 0
    %2070 = vmatprep.subr.bf16.mxu0 0
    %2071 = vmatpush1.bf16.msra.mxu0 0
    %2072 = vmatprep.subr.bf16.mxu0 0
    %2073 = vmatpush1.bf16.msra.mxu0 0
    %2074 = vmatprep.subr.bf16.mxu0 0
    %2075 = vmatpush1.bf16.msra.mxu0 0
    %2076 = vmatprep.subr.bf16.mxu0 0
    %2077 = vmatpush1.bf16.msra.mxu0 0
    %2078 = vmatprep.subr.bf16.mxu0 0
    %2079 = vmatpush1.bf16.msra.mxu0 0
    %2080 = vmatprep.subr.bf16.mxu0 0
    %2081 = vmatpush1.bf16.msra.mxu0 0
    %2082 = vmatprep.subr.bf16.mxu0 0
    %2083 = vmatpush1.bf16.msra.mxu0 0
    %2084 = vmatprep.subr.bf16.mxu0 0
    %2085 = vmatpush1.bf16.msra.mxu0 0
    %2086 = vmatprep.subr.bf16.mxu0 0
    %2087 = vmatpush1.bf16.msra.mxu0 0
    %2088 = vmatprep.subr.bf16.mxu0 0
    %2089 = vmatpush1.bf16.msra.mxu0 0
    %2090 = vmatprep.subr.bf16.mxu0 0
    %2091 = vmatpush1.bf16.msra.mxu0 0
    %2092 = vmatprep.subr.bf16.mxu0 0
    %2093 = vmatpush1.bf16.msra.mxu0 0
    %2094 = vmatprep.mubr.bf16.mxu0 0
    %2095 = vmatmul.mubr.bf16.gmra.mrb[0].mxu0 %v2060
    %v2096 = vpop.f32.mrb[0].mxu0
    %v2097 = vadd.f32 0.0, %v2096
    %v2098 = vpop.f32.mrb[0].mxu0
    %v2099 = vpop.f32.mrb[0].mxu0
    %v2100 = vadd.f32 0.0, %v2099
    %v2101 = vpop.f32.mrb[0].mxu0
    %2102 = vdwg.mxu0
    %2104 = vrot.lane.b32.xlu0 %v1986, 112
    %v2105 = vpop.permute.xlu0 %2104
    %2107 = vrot.lane.b32.xlu0 %v1987, 112
    %v2108 = vpop.permute.xlu0 %2107
    %v2110 = vsel %vm552, %v2105, 0
    %v2113 = vsel %vm552, %v2108, 0
    %2115 = vmatprep.subr.bf16.mxu0 0
    %2116 = vmatpush1.bf16.xpose.msra.mxu0 %v2113
    %2117 = vmatprep.subr.bf16.mxu0 0
    %2118 = vmatpush1.bf16.xpose.msra.mxu0 0
    %2119 = vmatprep.subr.bf16.mxu0 0
    %2120 = vmatpush1.bf16.xpose.msra.mxu0 0
    %2121 = vmatprep.subr.bf16.mxu0 0
    %2122 = vmatpush1.bf16.xpose.msra.mxu0 0
    %2123 = vmatprep.subr.bf16.mxu0 0
    %2124 = vmatpush1.bf16.xpose.msra.mxu0 0
    %2125 = vmatprep.subr.bf16.mxu0 0
    %2126 = vmatpush1.bf16.xpose.msra.mxu0 0
    %2127 = vmatprep.subr.bf16.mxu0 0
    %2128 = vmatpush1.bf16.xpose.msra.mxu0 0
    %2129 = vmatprep.subr.bf16.mxu0 0
    %2130 = vmatpush1.bf16.xpose.msra.mxu0 0
    %2131 = vmatprep.subr.bf16.mxu0 0
    %2132 = vmatpush1.bf16.xpose.msra.mxu0 0
    %2133 = vmatprep.subr.bf16.mxu0 0
    %2134 = vmatpush1.bf16.xpose.msra.mxu0 0
    %2135 = vmatprep.subr.bf16.mxu0 0
    %2136 = vmatpush1.bf16.xpose.msra.mxu0 0
    %2137 = vmatprep.subr.bf16.mxu0 0
    %2138 = vmatpush1.bf16.xpose.msra.mxu0 0
    %2139 = vmatprep.subr.bf16.mxu0 0
    %2140 = vmatpush1.bf16.xpose.msra.mxu0 0
    %2141 = vmatprep.subr.bf16.mxu0 0
    %2142 = vmatpush1.bf16.xpose.msra.mxu0 0
    %2143 = vmatprep.subr.bf16.mxu0 0
    %2144 = vmatpush1.bf16.xpose.msra.mxu0 0
    %2145 = vmatprep.subr.bf16.mxu0 0
    %2146 = vmatpush1.bf16.xpose.msra.mxu0 0
    %2147 = vmatprep.mubr.bf16.mxu0 0
    %2148 = vmatmul.mubr.bf16.gmra.mrb[0].mxu0 %v2110
    %v2149 = vpop.f32.mrb[0].mxu0
    %v2150 = vadd.f32 %v807, %v2149
    %v2151 = vpop.f32.mrb[0].mxu0
    %v2152 = vpop.f32.mrb[0].mxu0
    %v2153 = vadd.f32 %v807, %v2152
    %v2154 = vpop.f32.mrb[0].mxu0
    %2155 = vdwg.mxu0
    %v2156 = vsel %vm552, %v2150, -inf
    %2157 = vmax.xlane.f32.xlu0 %v2156
    %v2158 = vpop.xlane.xlu0 %2157
    %v2159 = vsel %vm552, %v2153, -inf
    %2160 = vmax.xlane.f32.xlu0 %v2159
    %v2161 = vpop.xlane.xlu0 %2160
    %v2162 = vsub.f32 %v2150, %v2158
    %v2163 = vsub.f32 %v2153, %v2161
    %v2164 = vmul.f32 %v2162, 1.442695
    %v2165 = vpow.pop %v2164
    %v2166 = vmul.f32 %v2163, 1.442695
    %v2167 = vpow.pop %v2166
    %v2168 = vsel %vm552, %v2165, 0.0
    %2169 = vadd.xlane.f32.xlu0 %v2168
    %v2170 = vpop.xlane.xlu0 %2169
    %v2171 = vsel %vm552, %v2167, 0.0
    %2172 = vadd.xlane.f32.xlu0 %v2171
    %v2173 = vpop.xlane.xlu0 %2172
    %v2174 = vrcp.pop %v2170
    %v2175 = vrcp.pop %v2173
    %v2176 = vmul.f32 %v2165, %v2174
    %v2177 = vmul.f32 %v2167, %v2175
    %v2178 = vpack.c.bf16 %v2177, %v2176
    %2180 = vrot.lane.b32.xlu0 %v1988, 112
    %v2181 = vpop.permute.xlu0 %2180
    %v2184 = vsel %vm552, %v2178, 0
    %2186 = vmatprep.subr.bf16.mxu0 0
    %2187 = vmatpush1.bf16.msra.mxu0 %v2181
    %2188 = vmatprep.subr.bf16.mxu0 0
    %2189 = vmatpush1.bf16.msra.mxu0 0
    %2190 = vmatprep.subr.bf16.mxu0 0
    %2191 = vmatpush1.bf16.msra.mxu0 0
    %2192 = vmatprep.subr.bf16.mxu0 0
    %2193 = vmatpush1.bf16.msra.mxu0 0
    %2194 = vmatprep.subr.bf16.mxu0 0
    %2195 = vmatpush1.bf16.msra.mxu0 0
    %2196 = vmatprep.subr.bf16.mxu0 0
    %2197 = vmatpush1.bf16.msra.mxu0 0
    %2198 = vmatprep.subr.bf16.mxu0 0
    %2199 = vmatpush1.bf16.msra.mxu0 0
    %2200 = vmatprep.subr.bf16.mxu0 0
    %2201 = vmatpush1.bf16.msra.mxu0 0
    %2202 = vmatprep.subr.bf16.mxu0 0
    %2203 = vmatpush1.bf16.msra.mxu0 0
    %2204 = vmatprep.subr.bf16.mxu0 0
    %2205 = vmatpush1.bf16.msra.mxu0 0
    %2206 = vmatprep.subr.bf16.mxu0 0
    %2207 = vmatpush1.bf16.msra.mxu0 0
    %2208 = vmatprep.subr.bf16.mxu0 0
    %2209 = vmatpush1.bf16.msra.mxu0 0
    %2210 = vmatprep.subr.bf16.mxu0 0
    %2211 = vmatpush1.bf16.msra.mxu0 0
    %2212 = vmatprep.subr.bf16.mxu0 0
    %2213 = vmatpush1.bf16.msra.mxu0 0
    %2214 = vmatprep.subr.bf16.mxu0 0
    %2215 = vmatpush1.bf16.msra.mxu0 0
    %2216 = vmatprep.subr.bf16.mxu0 0
    %2217 = vmatpush1.bf16.msra.mxu0 0
    %2218 = vmatprep.mubr.bf16.mxu0 0
    %2219 = vmatmul.mubr.bf16.gmra.mrb[0].mxu0 %v2184
    %v2220 = vpop.f32.mrb[0].mxu0
    %v2221 = vadd.f32 0.0, %v2220
    %v2222 = vpop.f32.mrb[0].mxu0
    %v2223 = vpop.f32.mrb[0].mxu0
    %v2224 = vadd.f32 0.0, %v2223
    %v2225 = vpop.f32.mrb[0].mxu0
    %2226 = vdwg.mxu0
    %2229 = vrot.lane.b32.xlu0 %v2221, 16
    %v2230 = vpop.permute.xlu0 %2229
    %2231 = vrot.lane.b32.xlu0 %v2224, 16
    %v2232 = vpop.permute.xlu0 %2231
    %v2235 = vsel %vm552, %v2097, %v2230
    %v2236 = vsel %vm552, %v2100, %v2232
    %v2237 = vpack.c.bf16 %v1985, %v1984
    %v2238 = vpack.c.bf16 %v2236, %v2235
    %s2239 = scalar_lea.vmem [#allocation14], 16
    %v2240 = vld [vmem:[%s2239] sm:$0xf]
    %v2241 = vld [vmem:[%s2239 + $0x4] sm:$0xf]
    %v2242 = vld [vmem:[%s2239 + $0x8] sm:$0xf]
    %v2243 = vld [vmem:[%s2239 + $0xc] sm:$0xf]
    %s2244 = scalar_lea.vmem [#allocation16], 1
    %v2245 = vld [vmem:[%s2244] sm:$0x1]
    %v2247 = vlaneseq
    %v2248 = vshrl.u32 %v2247, 7
    %v2249 = vsub.s32 0, %v2248
    %v2250 = vrot.slane %v2245, %v2249
    %v2256 = vunpack.c.l.b16 %v2240
    %v2257 = vunpack.c.l.b16 %v2241
    %v2258 = vunpack.c.l.b16 %v2242
    %v2259 = vunpack.c.l.b16 %v2243
    %v2260 = vpack.c.b16 %v2257, %v2256
    %v2261 = vpack.c.b16 %v2259, %v2258
    %v2265 = vsel %vm246, %v2237, 0
    %v2268 = vsel %vm246, %v2238, 0
    %2270 = vmatprep.subr.bf16.mxu0 0
    %2271 = vmatpush1.bf16.msra.mxu0 %v2260
    %2272 = vmatprep.subr.bf16.mxu0 0
    %2273 = vmatpush1.bf16.msra.mxu0 %v2261
    %2274 = vmatprep.subr.bf16.mxu0 0
    %2275 = vmatpush1.bf16.msra.mxu0 0
    %2276 = vmatprep.subr.bf16.mxu0 0
    %2277 = vmatpush1.bf16.msra.mxu0 0
    %2278 = vmatprep.subr.bf16.mxu0 0
    %2279 = vmatpush1.bf16.msra.mxu0 0
    %2280 = vmatprep.subr.bf16.mxu0 0
    %2281 = vmatpush1.bf16.msra.mxu0 0
    %2282 = vmatprep.subr.bf16.mxu0 0
    %2283 = vmatpush1.bf16.msra.mxu0 0
    %2284 = vmatprep.subr.bf16.mxu0 0
    %2285 = vmatpush1.bf16.msra.mxu0 0
    %2286 = vmatprep.subr.bf16.mxu0 0
    %2287 = vmatpush1.bf16.msra.mxu0 0
    %2288 = vmatprep.subr.bf16.mxu0 0
    %2289 = vmatpush1.bf16.msra.mxu0 0
    %2290 = vmatprep.subr.bf16.mxu0 0
    %2291 = vmatpush1.bf16.msra.mxu0 0
    %2292 = vmatprep.subr.bf16.mxu0 0
    %2293 = vmatpush1.bf16.msra.mxu0 0
    %2294 = vmatprep.subr.bf16.mxu0 0
    %2295 = vmatpush1.bf16.msra.mxu0 0
    %2296 = vmatprep.subr.bf16.mxu0 0
    %2297 = vmatpush1.bf16.msra.mxu0 0
    %2298 = vmatprep.subr.bf16.mxu0 0
    %2299 = vmatpush1.bf16.msra.mxu0 0
    %2300 = vmatprep.subr.bf16.mxu0 0
    %2301 = vmatpush1.bf16.msra.mxu0 0
    %2302 = vmatprep.mubr.bf16.mxu0 0
    %2303 = vmatmul.mubr.bf16.gmra.mrb[0].mxu0 %v2265
    %v2304 = vpop.f32.mrb[0].mxu0
    %v2305 = vadd.f32 %v2250, %v2304
    %v2306 = vpop.f32.mrb[0].mxu0
    %v2307 = vpop.f32.mrb[0].mxu0
    %v2308 = vadd.f32 %v2250, %v2307
    %v2309 = vpop.f32.mrb[0].mxu0
    %2310 = vmatprep.mubr.bf16.mxu0 0
    %2311 = vmatmul.mubr.bf16.gmra.mrb[0].mxu0 %v2268
    %v2312 = vpop.f32.mrb[0].mxu0
    %v2313 = vadd.f32 %v2250, %v2312
    %v2314 = vpop.f32.mrb[0].mxu0
    %v2315 = vpop.f32.mrb[0].mxu0
    %v2316 = vadd.f32 %v2250, %v2315
    %v2317 = vpop.f32.mrb[0].mxu0
    %2318 = vdwg.mxu0
    %v2319 = vadd.f32 %v1501, %v2305
    %v2320 = vadd.f32 %v1502, %v2308
    %v2321 = vadd.f32 %v1503, %v2313
    %v2322 = vadd.f32 %v1504, %v2316
    %s2323 = scalar_lea.vmem [#allocation17], 1
    %v2324 = vld [vmem:[%s2323] sm:$0x1]
    %s2325 = scalar_lea.vmem [#allocation19], 1
    %v2326 = vld [vmem:[%s2325] sm:$0x1]
    %v2327 = vsel %vm246, %v2319, 0.0
    %2328 = vadd.xlane.f32.xlu0 %v2327
    %v2329 = vpop.xlane.xlu0 %2328
    %v2330 = vsel %vm246, %v2320, 0.0
    %2331 = vadd.xlane.f32.xlu0 %v2330
    %v2332 = vpop.xlane.xlu0 %2331
    %v2333 = vsel %vm246, %v2321, 0.0
    %2334 = vadd.xlane.f32.xlu0 %v2333
    %v2335 = vpop.xlane.xlu0 %2334
    %v2336 = vsel %vm246, %v2322, 0.0
    %2337 = vadd.xlane.f32.xlu0 %v2336
    %v2338 = vpop.xlane.xlu0 %2337
    %v2339 = vmul.f32 %v2329, %v259
    %v2340 = vmul.f32 %v2332, %v259
    %v2341 = vmul.f32 %v2335, %v259
    %v2342 = vmul.f32 %v2338, %v259
    %v2343 = vsub.f32 %v2319, %v2339
    %v2344 = vsub.f32 %v2320, %v2340
    %v2345 = vsub.f32 %v2321, %v2341
    %v2346 = vsub.f32 %v2322, %v2342
    %v2347 = vmul.f32 %v2343, %v2343
    %v2348 = vmul.f32 %v2344, %v2344
    %v2349 = vmul.f32 %v2345, %v2345
    %v2350 = vmul.f32 %v2346, %v2346
    %v2351 = vsel %vm246, %v2347, 0.0
    %2352 = vadd.xlane.f32.xlu0 %v2351
    %v2353 = vpop.xlane.xlu0 %2352
    %v2354 = vsel %vm246, %v2348, 0.0
    %2355 = vadd.xlane.f32.xlu0 %v2354
    %v2356 = vpop.xlane.xlu0 %2355
    %v2357 = vsel %vm246, %v2349, 0.0
    %2358 = vadd.xlane.f32.xlu0 %v2357
    %v2359 = vpop.xlane.xlu0 %2358
    %v2360 = vsel %vm246, %v2350, 0.0
    %2361 = vadd.xlane.f32.xlu0 %v2360
    %v2362 = vpop.xlane.xlu0 %2361
    %v2363 = vmul.f32 %v2353, %v259
    %v2364 = vmul.f32 %v2356, %v259
    %v2365 = vmul.f32 %v2359, %v259
    %v2366 = vmul.f32 %v2362, %v259
    %v2367 = vadd.f32 %v2363, 1e-12
    %v2368 = vadd.f32 %v2364, 1e-12
    %v2369 = vadd.f32 %v2365, 1e-12
    %v2370 = vadd.f32 %v2366, 1e-12
    %v2371 = vrsqrt.pop %v2367
    %v2372 = vrsqrt.pop %v2368
    %v2373 = vrsqrt.pop %v2369
    %v2374 = vrsqrt.pop %v2370
    %v2375 = vmul.f32 %v2343, %v2371
    %v2376 = vmul.f32 %v2344, %v2372
    %v2377 = vmul.f32 %v2345, %v2373
    %v2378 = vmul.f32 %v2346, %v2374
    %v2380 = vlaneseq
    %v2381 = vshrl.u32 %v2380, 7
    %v2382 = vsub.s32 0, %v2381
    %v2383 = vrot.slane %v2324, %v2382
    %v2385 = vmul.f32 %v2375, %v2383
    %v2386 = vmul.f32 %v2376, %v2383
    %v2387 = vmul.f32 %v2377, %v2383
    %v2388 = vmul.f32 %v2378, %v2383
    %v2390 = vlaneseq
    %v2391 = vshrl.u32 %v2390, 7
    %v2392 = vsub.s32 0, %v2391
    %v2393 = vrot.slane %v2326, %v2392
    %v2395 = vadd.f32 %v2385, %v2393
    %v2396 = vadd.f32 %v2386, %v2393
    %v2397 = vadd.f32 %v2387, %v2393
    %v2398 = vadd.f32 %v2388, %v2393
    %v2399 = vpack.c.bf16 %v2396, %v2395
    %v2400 = vpack.c.bf16 %v2398, %v2397
    %s2401 = scalar_lea.vmem [#allocation20], 16
    %v2402 = vld [vmem:[%s2401] sm:$0xf]
    %v2403 = vld [vmem:[%s2401 + $0x4] sm:$0xf]
    %v2404 = vld [vmem:[%s2401 + $0x8] sm:$0xf]
    %v2405 = vld [vmem:[%s2401 + $0xc] sm:$0xf]
    %s2406 = scalar_lea.vmem [#allocation22], 1
    %v2407 = vld [vmem:[%s2406] sm:$0x1]
    %v2409 = vlaneseq
    %v2410 = vshrl.u32 %v2409, 7
    %v2411 = vsub.s32 0, %v2410
    %v2412 = vrot.slane %v2407, %v2411
    %v2418 = vunpack.c.l.b16 %v2402
    %v2419 = vunpack.c.l.b16 %v2403
    %v2420 = vunpack.c.l.b16 %v2404
    %v2421 = vunpack.c.l.b16 %v2405
    %v2422 = vpack.c.b16 %v2419, %v2418
    %v2423 = vpack.c.b16 %v2421, %v2420
    %v2427 = vsel %vm246, %v2399, 0
    %v2430 = vsel %vm246, %v2400, 0
    %2432 = vmatprep.subr.bf16.mxu0 0
    %2433 = vmatpush1.bf16.msra.mxu0 %v2422
    %2434 = vmatprep.subr.bf16.mxu0 0
    %2435 = vmatpush1.bf16.msra.mxu0 %v2423
    %2436 = vmatprep.subr.bf16.mxu0 0
    %2437 = vmatpush1.bf16.msra.mxu0 0
    %2438 = vmatprep.subr.bf16.mxu0 0
    %2439 = vmatpush1.bf16.msra.mxu0 0
    %2440 = vmatprep.subr.bf16.mxu0 0
    %2441 = vmatpush1.bf16.msra.mxu0 0
    %2442 = vmatprep.subr.bf16.mxu0 0
    %2443 = vmatpush1.bf16.msra.mxu0 0
    %2444 = vmatprep.subr.bf16.mxu0 0
    %2445 = vmatpush1.bf16.msra.mxu0 0
    %2446 = vmatprep.subr.bf16.mxu0 0
    %2447 = vmatpush1.bf16.msra.mxu0 0
    %2448 = vmatprep.subr.bf16.mxu0 0
    %2449 = vmatpush1.bf16.msra.mxu0 0
    %2450 = vmatprep.subr.bf16.mxu0 0
    %2451 = vmatpush1.bf16.msra.mxu0 0
    %2452 = vmatprep.subr.bf16.mxu0 0
    %2453 = vmatpush1.bf16.msra.mxu0 0
    %2454 = vmatprep.subr.bf16.mxu0 0
    %2455 = vmatpush1.bf16.msra.mxu0 0
    %2456 = vmatprep.subr.bf16.mxu0 0
    %2457 = vmatpush1.bf16.msra.mxu0 0
    %2458 = vmatprep.subr.bf16.mxu0 0
    %2459 = vmatpush1.bf16.msra.mxu0 0
    %2460 = vmatprep.subr.bf16.mxu0 0
    %2461 = vmatpush1.bf16.msra.mxu0 0
    %2462 = vmatprep.subr.bf16.mxu0 0
    %2463 = vmatpush1.bf16.msra.mxu0 0
    %2464 = vmatprep.mubr.bf16.mxu0 0
    %2465 = vmatmul.mubr.bf16.gmra.mrb[0].mxu0 %v2427
    %v2466 = vpop.f32.mrb[0].mxu0
    %v2467 = vadd.f32 %v2412, %v2466
    %v2468 = vpop.f32.mrb[0].mxu0
    %v2469 = vpop.f32.mrb[0].mxu0
    %v2470 = vadd.f32 %v2412, %v2469
    %v2471 = vpop.f32.mrb[0].mxu0
    %2472 = vmatprep.mubr.bf16.mxu0 0
    %2473 = vmatmul.mubr.bf16.gmra.mrb[0].mxu0 %v2430
    %v2474 = vpop.f32.mrb[0].mxu0
    %v2475 = vadd.f32 %v2412, %v2474
    %v2476 = vpop.f32.mrb[0].mxu0
    %v2477 = vpop.f32.mrb[0].mxu0
    %v2478 = vadd.f32 %v2412, %v2477
    %v2479 = vpop.f32.mrb[0].mxu0
    %2480 = vdwg.mxu0
    %v2481 = vmul.f32 %v2467, 0.5
    %v2482 = vmul.f32 %v2470, 0.5
    %v2483 = vmul.f32 %v2475, 0.5
    %v2484 = vmul.f32 %v2478, 0.5
    %v2485 = vmul.f32 %v2467, 0.044715
    %v2486 = vmul.f32 %v2470, 0.044715
    %v2487 = vmul.f32 %v2475, 0.044715
    %v2488 = vmul.f32 %v2478, 0.044715
    %v2489 = vmul.f32 %v2485, %v2467
    %v2490 = vmul.f32 %v2486, %v2470
    %v2491 = vmul.f32 %v2487, %v2475
    %v2492 = vmul.f32 %v2488, %v2478
    %v2493 = vmul.f32 %v2489, %v2467
    %v2494 = vmul.f32 %v2490, %v2470
    %v2495 = vmul.f32 %v2491, %v2475
    %v2496 = vmul.f32 %v2492, %v2478
    %v2497 = vadd.f32 %v2467, %v2493
    %v2498 = vadd.f32 %v2470, %v2494
    %v2499 = vadd.f32 %v2475, %v2495
    %v2500 = vadd.f32 %v2478, %v2496
    %v2501 = vmul.f32 %v2497, 0.7978846
    %v2502 = vmul.f32 %v2498, 0.7978846
    %v2503 = vmul.f32 %v2499, 0.7978846
    %v2504 = vmul.f32 %v2500, 0.7978846
    %v2505 = vtanh.pop %v2501
    %v2506 = vtanh.pop %v2502
    %v2507 = vtanh.pop %v2503
    %v2508 = vtanh.pop %v2504
    %v2509 = vadd.f32 %v2505, 1.0
    %v2510 = vadd.f32 %v2506, 1.0
    %v2511 = vadd.f32 %v2507, 1.0
    %v2512 = vadd.f32 %v2508, 1.0
    %v2513 = vmul.f32 %v2481, %v2509
    %v2514 = vmul.f32 %v2482, %v2510
    %v2515 = vmul.f32 %v2483, %v2511
    %v2516 = vmul.f32 %v2484, %v2512
    %v2517 = vpack.c.bf16 %v2514, %v2513
    %v2518 = vpack.c.bf16 %v2516, %v2515
    %s2519 = scalar_lea.vmem %s17, 32
    %v2520 = vld [vmem:[%s2519] sm:$0xf]
    %v2521 = vld [vmem:[%s2519 + $0x4] sm:$0xf]
    %v2522 = vld [vmem:[%s2519 + $0x8] sm:$0xf]
    %v2523 = vld [vmem:[%s2519 + $0xc] sm:$0xf]
    %v2524 = vld [vmem:[%s2519 + $0x10] sm:$0xf]
    %v2525 = vld [vmem:[%s2519 + $0x14] sm:$0xf]
    %v2526 = vld [vmem:[%s2519 + $0x18] sm:$0xf]
    %v2527 = vld [vmem:[%s2519 + $0x1c] sm:$0xf]
    %s2528 = scalar_lea.vmem %s18, 1
    %v2529 = vld [vmem:[%s2528] sm:$0x1]
    %v2531 = vlaneseq
    %v2532 = vshrl.u32 %v2531, 7
    %v2533 = vsub.s32 0, %v2532
    %v2534 = vrot.slane %v2529, %v2533
    %v2544 = vunpack.c.l.b16 %v2520
    %v2545 = vunpack.c.l.b16 %v2521
    %v2546 = vunpack.c.l.b16 %v2522
    %v2547 = vunpack.c.l.b16 %v2523
    %v2548 = vunpack.c.l.b16 %v2524
    %v2549 = vunpack.c.l.b16 %v2525
    %v2550 = vunpack.c.l.b16 %v2526
    %v2551 = vunpack.c.l.b16 %v2527
    %v2552 = vpack.c.b16 %v2545, %v2544
    %v2553 = vpack.c.b16 %v2547, %v2546
    %v2554 = vpack.c.b16 %v2549, %v2548
    %v2555 = vpack.c.b16 %v2551, %v2550
    %v2561 = vsel %vm1371, %v2517, 0
    %v2564 = vsel %vm1371, %v2518, 0
    %2566 = vmatprep.subr.bf16.mxu0 0
    %2567 = vmatpush1.bf16.msra.mxu0 %v2552
    %2568 = vmatprep.subr.bf16.mxu0 0
    %2569 = vmatpush1.bf16.msra.mxu0 %v2553
    %2570 = vmatprep.subr.bf16.mxu0 0
    %2571 = vmatpush1.bf16.msra.mxu0 %v2554
    %2572 = vmatprep.subr.bf16.mxu0 0
    %2573 = vmatpush1.bf16.msra.mxu0 %v2555
    %2574 = vmatprep.subr.bf16.mxu0 0
    %2575 = vmatpush1.bf16.msra.mxu0 0
    %2576 = vmatprep.subr.bf16.mxu0 0
    %2577 = vmatpush1.bf16.msra.mxu0 0
    %2578 = vmatprep.subr.bf16.mxu0 0
    %2579 = vmatpush1.bf16.msra.mxu0 0
    %2580 = vmatprep.subr.bf16.mxu0 0
    %2581 = vmatpush1.bf16.msra.mxu0 0
    %2582 = vmatprep.subr.bf16.mxu0 0
    %2583 = vmatpush1.bf16.msra.mxu0 0
    %2584 = vmatprep.subr.bf16.mxu0 0
    %2585 = vmatpush1.bf16.msra.mxu0 0
    %2586 = vmatprep.subr.bf16.mxu0 0
    %2587 = vmatpush1.bf16.msra.mxu0 0
    %2588 = vmatprep.subr.bf16.mxu0 0
    %2589 = vmatpush1.bf16.msra.mxu0 0
    %2590 = vmatprep.subr.bf16.mxu0 0
    %2591 = vmatpush1.bf16.msra.mxu0 0
    %2592 = vmatprep.subr.bf16.mxu0 0
    %2593 = vmatpush1.bf16.msra.mxu0 0
    %2594 = vmatprep.subr.bf16.mxu0 0
    %2595 = vmatpush1.bf16.msra.mxu0 0
    %2596 = vmatprep.subr.bf16.mxu0 0
    %2597 = vmatpush1.bf16.msra.mxu0 0
    %2598 = vmatprep.mubr.bf16.mxu0 0
    %2599 = vmatmul.mubr.bf16.gmra.mrb[0].mxu0 %v2561
    %v2600 = vpop.f32.mrb[0].mxu0
    %v2601 = vadd.f32 %v2534, %v2600
    %v2602 = vpop.f32.mrb[0].mxu0
    %v2603 = vpop.f32.mrb[0].mxu0
    %v2604 = vadd.f32 %v2534, %v2603
    %v2605 = vpop.f32.mrb[0].mxu0
    %2606 = vmatprep.mubr.bf16.mxu0 0
    %2607 = vmatmul.mubr.bf16.gmra.mrb[0].mxu0 %v2564
    %v2608 = vpop.f32.mrb[0].mxu0
    %v2609 = vadd.f32 %v2534, %v2608
    %v2610 = vpop.f32.mrb[0].mxu0
    %v2611 = vpop.f32.mrb[0].mxu0
    %v2612 = vadd.f32 %v2534, %v2611
    %v2613 = vpop.f32.mrb[0].mxu0
    %2614 = vdwg.mxu0
    %v2615 = vadd.f32 %v2395, %v2601
    %v2616 = vadd.f32 %v2396, %v2604
    %v2617 = vadd.f32 %v2397, %v2609
    %v2618 = vadd.f32 %v2398, %v2612
    %s2619 = scalar_lea.vmem %s19, 1
    %v2620 = vld [vmem:[%s2619] sm:$0x1]
    %s2621 = scalar_lea.vmem %s20, 1
    %v2622 = vld [vmem:[%s2621] sm:$0x1]
    %v2623 = vsel %vm246, %v2615, 0.0
    %2624 = vadd.xlane.f32.xlu0 %v2623
    %v2625 = vpop.xlane.xlu0 %2624
    %v2626 = vsel %vm246, %v2616, 0.0
    %2627 = vadd.xlane.f32.xlu0 %v2626
    %v2628 = vpop.xlane.xlu0 %2627
    %v2629 = vsel %vm246, %v2617, 0.0
    %2630 = vadd.xlane.f32.xlu0 %v2629
    %v2631 = vpop.xlane.xlu0 %2630
    %v2632 = vsel %vm246, %v2618, 0.0
    %2633 = vadd.xlane.f32.xlu0 %v2632
    %v2634 = vpop.xlane.xlu0 %2633
    %v2635 = vmul.f32 %v2625, %v259
    %v2636 = vmul.f32 %v2628, %v259
    %v2637 = vmul.f32 %v2631, %v259
    %v2638 = vmul.f32 %v2634, %v259
    %v2639 = vsub.f32 %v2615, %v2635
    %v2640 = vsub.f32 %v2616, %v2636
    %v2641 = vsub.f32 %v2617, %v2637
    %v2642 = vsub.f32 %v2618, %v2638
    %v2643 = vmul.f32 %v2639, %v2639
    %v2644 = vmul.f32 %v2640, %v2640
    %v2645 = vmul.f32 %v2641, %v2641
    %v2646 = vmul.f32 %v2642, %v2642
    %v2647 = vsel %vm246, %v2643, 0.0
    %2648 = vadd.xlane.f32.xlu0 %v2647
    %v2649 = vpop.xlane.xlu0 %2648
    %v2650 = vsel %vm246, %v2644, 0.0
    %2651 = vadd.xlane.f32.xlu0 %v2650
    %v2652 = vpop.xlane.xlu0 %2651
    %v2653 = vsel %vm246, %v2645, 0.0
    %2654 = vadd.xlane.f32.xlu0 %v2653
    %v2655 = vpop.xlane.xlu0 %2654
    %v2656 = vsel %vm246, %v2646, 0.0
    %2657 = vadd.xlane.f32.xlu0 %v2656
    %v2658 = vpop.xlane.xlu0 %2657
    %v2659 = vmul.f32 %v2649, %v259
    %v2660 = vmul.f32 %v2652, %v259
    %v2661 = vmul.f32 %v2655, %v259
    %v2662 = vmul.f32 %v2658, %v259
    %v2663 = vadd.f32 %v2659, 1e-12
    %v2664 = vadd.f32 %v2660, 1e-12
    %v2665 = vadd.f32 %v2661, 1e-12
    %v2666 = vadd.f32 %v2662, 1e-12
    %v2667 = vrsqrt.pop %v2663
    %v2668 = vrsqrt.pop %v2664
    %v2669 = vrsqrt.pop %v2665
    %v2670 = vrsqrt.pop %v2666
    %v2671 = vmul.f32 %v2639, %v2667
    %v2672 = vmul.f32 %v2640, %v2668
    %v2673 = vmul.f32 %v2641, %v2669
    %v2674 = vmul.f32 %v2642, %v2670
    %v2676 = vlaneseq
    %v2677 = vshrl.u32 %v2676, 7
    %v2678 = vsub.s32 0, %v2677
    %v2679 = vrot.slane %v2620, %v2678
    %v2681 = vmul.f32 %v2671, %v2679
    %v2682 = vmul.f32 %v2672, %v2679
    %v2683 = vmul.f32 %v2673, %v2679
    %v2684 = vmul.f32 %v2674, %v2679
    %v2686 = vlaneseq
    %v2687 = vshrl.u32 %v2686, 7
    %v2688 = vsub.s32 0, %v2687
    %v2689 = vrot.slane %v2622, %v2688
    %v2691 = vadd.f32 %v2681, %v2689
    %v2692 = vadd.f32 %v2682, %v2689
    %v2693 = vadd.f32 %v2683, %v2689
    %v2694 = vadd.f32 %v2684, %v2689
    %v2695 = vld [vmem:[#allocation5] sm:$0xff]
    %v2697 = vsel %vm552, %v2695, 0
    %2699 = vmatprep.subr.mxu0 0.0
    %2700 = vmatpush1.msra.mxu0 %v2691
    %2701 = vmatprep.subr.mxu0 0.0
    %2702 = vmatpush1.msra.mxu0 %v2692
    %2703 = vmatprep.subr.mxu0 0.0
    %2704 = vmatpush1.msra.mxu0 0.0
    %2705 = vmatprep.subr.mxu0 0.0
    %2706 = vmatpush1.msra.mxu0 0.0
    %2707 = vmatprep.subr.mxu0 0.0
    %2708 = vmatpush1.msra.mxu0 0.0
    %2709 = vmatprep.subr.mxu0 0.0
    %2710 = vmatpush1.msra.mxu0 0.0
    %2711 = vmatprep.subr.mxu0 0.0
    %2712 = vmatpush1.msra.mxu0 0.0
    %2713 = vmatprep.subr.mxu0 0.0
    %2714 = vmatpush1.msra.mxu0 0.0
    %2715 = vmatprep.subr.mxu0 0.0
    %2716 = vmatpush1.msra.mxu0 0.0
    %2717 = vmatprep.subr.mxu0 0.0
    %2718 = vmatpush1.msra.mxu0 0.0
    %2719 = vmatprep.subr.mxu0 0.0
    %2720 = vmatpush1.msra.mxu0 0.0
    %2721 = vmatprep.subr.mxu0 0.0
    %2722 = vmatpush1.msra.mxu0 0.0
    %2723 = vmatprep.subr.mxu0 0.0
    %2724 = vmatpush1.msra.mxu0 0.0
    %2725 = vmatprep.subr.mxu0 0.0
    %2726 = vmatpush1.msra.mxu0 0.0
    %2727 = vmatprep.subr.mxu0 0.0
    %2728 = vmatpush1.msra.mxu0 0.0
    %2729 = vmatprep.subr.mxu0 0.0
    %2730 = vmatpush1.msra.mxu0 0.0
    %2731 = vmatprep.subr.mxu0 0.0
    %2732 = vmatpush1.msra.mxu0 0.0
    %2733 = vmatprep.subr.mxu0 0.0
    %2734 = vmatpush1.msra.mxu0 0.0
    %2735 = vmatprep.subr.mxu0 0.0
    %2736 = vmatpush1.msra.mxu0 0.0
    %2737 = vmatprep.subr.mxu0 0.0
    %2738 = vmatpush1.msra.mxu0 0.0
    %2739 = vmatprep.subr.mxu0 0.0
    %2740 = vmatpush1.msra.mxu0 0.0
    %2741 = vmatprep.subr.mxu0 0.0
    %2742 = vmatpush1.msra.mxu0 0.0
    %2743 = vmatprep.subr.mxu0 0.0
    %2744 = vmatpush1.msra.mxu0 0.0
    %2745 = vmatprep.subr.mxu0 0.0
    %2746 = vmatpush1.msra.mxu0 0.0
    %2747 = vmatprep.subr.mxu0 0.0
    %2748 = vmatpush1.msra.mxu0 0.0
    %2749 = vmatprep.subr.mxu0 0.0
    %2750 = vmatpush1.msra.mxu0 0.0
    %2751 = vmatprep.subr.mxu0 0.0
    %2752 = vmatpush1.msra.mxu0 0.0
    %2753 = vmatprep.subr.mxu0 0.0
    %2754 = vmatpush1.msra.mxu0 0.0
    %2755 = vmatprep.subr.mxu0 0.0
    %2756 = vmatpush1.msra.mxu0 0.0
    %2757 = vmatprep.subr.mxu0 0.0
    %2758 = vmatpush1.msra.mxu0 0.0
    %2759 = vmatprep.subr.mxu0 0.0
    %2760 = vmatpush1.msra.mxu0 0.0
    %2761 = vmatprep.subr.mxu0 0.0
    %2762 = vmatpush1.msra.mxu0 0.0
    %2763 = vmatprep.mubr.f32.mxu0 0.0
    %2764 = vmatmul.mubr.f32.gmra.mrb[0].mxu0 %v2697
    %v2765 = vpop.f32.mrb[0].mxu0
    %v2766 = vadd.f32 0.0, %v2765
    %v2767 = vpop.f32.mrb[0].mxu0
    %2768 = vdwg.mxu0
    %2769 = vst.msk [vmem:[#allocation23] sm:$0xff] %vm246, %v2766
    %s2770 = scalar_lea.vmem [#allocation5], 8
    %v2771 = vld [vmem:[%s2770] sm:$0xff]
    %v2773 = vsel %vm552, %v2771, 0
    %2775 = vmatprep.subr.mxu0 0.0
    %2776 = vmatpush1.msra.mxu0 %v2693
    %2777 = vmatprep.subr.mxu0 0.0
    %2778 = vmatpush1.msra.mxu0 %v2694
    %2779 = vmatprep.subr.mxu0 0.0
    %2780 = vmatpush1.msra.mxu0 0.0
    %2781 = vmatprep.subr.mxu0 0.0
    %2782 = vmatpush1.msra.mxu0 0.0
    %2783 = vmatprep.subr.mxu0 0.0
    %2784 = vmatpush1.msra.mxu0 0.0
    %2785 = vmatprep.subr.mxu0 0.0
    %2786 = vmatpush1.msra.mxu0 0.0
    %2787 = vmatprep.subr.mxu0 0.0
    %2788 = vmatpush1.msra.mxu0 0.0
    %2789 = vmatprep.subr.mxu0 0.0
    %2790 = vmatpush1.msra.mxu0 0.0
    %2791 = vmatprep.subr.mxu0 0.0
    %2792 = vmatpush1.msra.mxu0 0.0
    %2793 = vmatprep.subr.mxu0 0.0
    %2794 = vmatpush1.msra.mxu0 0.0
    %2795 = vmatprep.subr.mxu0 0.0
    %2796 = vmatpush1.msra.mxu0 0.0
    %2797 = vmatprep.subr.mxu0 0.0
    %2798 = vmatpush1.msra.mxu0 0.0
    %2799 = vmatprep.subr.mxu0 0.0
    %2800 = vmatpush1.msra.mxu0 0.0
    %2801 = vmatprep.subr.mxu0 0.0
    %2802 = vmatpush1.msra.mxu0 0.0
    %2803 = vmatprep.subr.mxu0 0.0
    %2804 = vmatpush1.msra.mxu0 0.0
    %2805 = vmatprep.subr.mxu0 0.0
    %2806 = vmatpush1.msra.mxu0 0.0
    %2807 = vmatprep.subr.mxu0 0.0
    %2808 = vmatpush1.msra.mxu0 0.0
    %2809 = vmatprep.subr.mxu0 0.0
    %2810 = vmatpush1.msra.mxu0 0.0
    %2811 = vmatprep.subr.mxu0 0.0
    %2812 = vmatpush1.msra.mxu0 0.0
    %2813 = vmatprep.subr.mxu0 0.0
    %2814 = vmatpush1.msra.mxu0 0.0
    %2815 = vmatprep.subr.mxu0 0.0
    %2816 = vmatpush1.msra.mxu0 0.0
    %2817 = vmatprep.subr.mxu0 0.0
    %2818 = vmatpush1.msra.mxu0 0.0
    %2819 = vmatprep.subr.mxu0 0.0
    %2820 = vmatpush1.msra.mxu0 0.0
    %2821 = vmatprep.subr.mxu0 0.0
    %2822 = vmatpush1.msra.mxu0 0.0
    %2823 = vmatprep.subr.mxu0 0.0
    %2824 = vmatpush1.msra.mxu0 0.0
    %2825 = vmatprep.subr.mxu0 0.0
    %2826 = vmatpush1.msra.mxu0 0.0
    %2827 = vmatprep.subr.mxu0 0.0
    %2828 = vmatpush1.msra.mxu0 0.0
    %2829 = vmatprep.subr.mxu0 0.0
    %2830 = vmatpush1.msra.mxu0 0.0
    %2831 = vmatprep.subr.mxu0 0.0
    %2832 = vmatpush1.msra.mxu0 0.0
    %2833 = vmatprep.subr.mxu0 0.0
    %2834 = vmatpush1.msra.mxu0 0.0
    %2835 = vmatprep.subr.mxu0 0.0
    %2836 = vmatpush1.msra.mxu0 0.0
    %2837 = vmatprep.subr.mxu0 0.0
    %2838 = vmatpush1.msra.mxu0 0.0
    %2839 = vmatprep.mubr.f32.mxu0 0.0
    %2840 = vmatmul.mubr.f32.gmra.mrb[0].mxu0 %v2773
    %v2841 = vpop.f32.mrb[0].mxu0
    %v2842 = vadd.f32 0.0, %v2841
    %v2843 = vpop.f32.mrb[0].mxu0
    %2844 = vdwg.mxu0
    %s2845 = scalar_lea.vmem [#allocation23], 8
    %2846 = vst.msk [vmem:[%s2845] sm:$0xff] %vm246, %v2842
    // Predicated region
    $region138: #{tpu_custom_call.1} parent=1 // pred_check
      _
    $region139: #{tpu_custom_call.1} parent=1 // pred_check_branch
      %2848 = sbr.rel (0) target = $region141
    $region140: #{tpu_custom_call.1} parent=1 // pred_region
      %s2850 = ssub.s32 256, 256
      %2851 = vsyncadd [#allocation4], %s2850
      %s2852 = sshll.u32 [#allocation23], 4
      %s2853 = int_to_ptr.vmem [resolvable:$true] %s2852
      %2858 = dma.vmem_to_hbm [thread:$0]  %s2853, 256, %s21, [#allocation4], 128, 128, 8
    $region141: #{tpu_custom_call.1} parent=1 // pred_fallthru
      _
    // Predicated region
    $region142: #{tpu_custom_call.1} parent=1 // pred_check
      _
    $region143: #{tpu_custom_call.1} parent=1 // pred_check_branch
      %2860 = sbr.rel (0) target = $region145
    $region144: #{tpu_custom_call.1} parent=1 // pred_region
      %2861 = dma.done [#allocation4], 256
    $region145: #{tpu_custom_call.1} parent=1 // pred_fallthru
      _
    %2862 = vsyncpa [#allocation3], 1
    %2863 = vsyncpa [#allocation6], 1
    %2864 = vsyncpa [#allocation9], 1
    %2865 = vsyncpa [#allocation12], 1
    %2866 = vsyncpa [#allocation15], 1
    %2867 = vsyncpa [#allocation18], 1
    %2868 = vsyncpa [#allocation21], 1
    %2869 = vsyncpa [#allocation4], 1

</llo_original>
